<compile_context>
chip_gen: v7x
topology: tpu7x:2x2x1
jax: 0.10.0
libtpu: 0.0.40
codegen_flags: <defaults>
</compile_context>

<pallas_src>
import functools

import numpy as np

import jax
import jax.numpy as jnp
from jax import lax
from jax.experimental import pallas as pl
from jax.experimental.pallas import tpu as pltpu


# Static problem dims (W * C = 128 -> exactly one vreg lane width).
B, C, H, W = 2, 8, 16, 16
BH, WC = B * H, W * C

# Rows of the f32 bias/scale slab `brow` (each (1, WC), lane-tiled per channel).
R_GAMMA, R_BETA, R_B5, R_B7, R_LKA1B, R_CONVB, R_BI, R_BK, R_BV, R_BO = range(10)

CONST_KEYS = ("w_ak", "w_lka1", "w_conv", "w_ikv", "w_o", "w_fu1", "w_fu2",
              "taps5", "taps7", "brow", "bfu")


# ------------------------------- Pallas kernel ------------------------------ #

def ctf_kernel(x1_ref, x2_ref, w_ak_ref, w_lka1_ref, w_conv_ref, w_ikv_ref,
               w_o_ref, w_fu1_ref, w_fu2_ref, taps5_ref, taps7_ref,
               brow_ref, bfu_ref, y1_ref, y2_ref):
    f32, bf16 = jnp.float32, jnp.bfloat16

    def mm(a, w_ref):
        # bf16 operands, f32 accumulation on the MXU.
        return jnp.dot(a.astype(bf16), w_ref[...], preferred_element_type=f32)

    brow = brow_ref[...]                                      # (10, WC) f32

    def row(i):
        return brow[i:i + 1, :]

    # Row / lane index helpers (VPU iota + compares only).
    row_id = lax.broadcasted_iota(jnp.int32, (BH, WC), 0)
    lane_id = lax.broadcasted_iota(jnp.int32, (BH, WC), 1)
    hmod = row_id
    for b in range(1, B):
        hmod = jnp.where(row_id >= b * H, row_id - b * H, hmod)

    def group_allreduce(v):
        # Sum over the W lane groups of each channel, broadcast back (log2 W rolls).
        s = v
        sh = C
        while sh < WC:
            s = s + pltpu.roll(s, shift=sh, axis=1)
            sh *= 2
        return s

    x1 = x1_ref[...]                                          # (BH, WC) f32
    x2 = x2_ref[...]                                          # (BH, WC) f32

    # ---- AKConv (zero-offset, 3 clamped taps) fused as one K=3*WC matmul ------
    x_w = jnp.where(lane_id >= (W - 1) * C, x1,
                    pltpu.roll(x1, shift=WC - C, axis=1))     # tap (h, w+1), clamped
    x_h = jnp.where(hmod == H - 1, x1,
                    pltpu.roll(x1, shift=BH - 1, axis=0))     # tap (h+1, w), clamped
    y = mm(jnp.concatenate([x1, x_w, x_h], axis=1), w_ak_ref)  # (BH, WC) f32

    # ---- BatchNorm2d (train-mode batch stats) + SiLU, f32 on VPU/XLU ----------
    inv_n = 1.0 / float(B * H * W)
    mean = jnp.sum(group_allreduce(y), axis=0, keepdims=True) * inv_n
    d = y - mean
    var = jnp.sum(group_allreduce(d * d), axis=0, keepdims=True) * inv_n
    z = d * lax.rsqrt(var + 1e-5) * row(R_GAMMA) + row(R_BETA)
    ak = z * (1.0 / (1.0 + jnp.exp(-z)))                      # SiLU (exact divide)

    # ---- LKA depthwise convs: XLU rolls + VPU FMA (no matmuls) ----------------
    def dwconv(x, taps_ref, K, dil, pad, bias_row):
        taps = taps_ref[...]                                  # (K*K, WC) f32
        acc = None
        for kh in range(K):
            dh = kh * dil - pad
            xh = x if dh == 0 else pltpu.roll(x, shift=(-dh) % BH, axis=0)
            if dh != 0:
                mh = ((hmod + dh >= 0) & (hmod + dh < H)).astype(f32)
                xh = xh * mh                                  # zero pad in h
            for kw in range(K):
                dw = kw * dil - pad
                xw = xh if dw == 0 else pltpu.roll(xh, shift=(-dw * C) % WC, axis=1)
                t = kh * K + kw
                term = xw * taps[t:t + 1, :]                  # w-pad folded into taps
                acc = term if acc is None else acc + term
        return acc + bias_row

    a = dwconv(ak, taps5_ref, 5, 1, 2, row(R_B5))
    a = dwconv(a, taps7_ref, 7, 3, 9, row(R_B7))

    # ---- LKA 1x1 conv, gate, AKLKA 1x1 conv, residual -------------------------
    attn = mm(a, w_lka1_ref) + row(R_LKA1B)
    x1out = mm(ak * attn, w_conv_ref) + row(R_CONVB) + x1

    # ---- MobileViTv2Attention: fused [i|k|v] projection + per-batch softmax ---
    p = mm(x2, w_ikv_ref)                                     # (BH, 3*WC) f32
    i_rep = p[:, 0:WC] + row(R_BI)      # per-pixel scalar replicated over C lanes
    kproj = p[:, WC:2 * WC] + row(R_BK)
    vproj = p[:, 2 * WC:3 * WC] + row(R_BV)

    m = jnp.max(jnp.max(i_rep, axis=0, keepdims=True), axis=1, keepdims=True)
    e = jnp.exp(i_rep - m)                        # global max: softmax-invariant shift
    eg = group_allreduce(e)
    ekg = group_allreduce(e * kproj)
    ctx = None
    for b in range(B):                            # per-batch softmax-weighted sums
        den_b = jnp.sum(eg[b * H:(b + 1) * H], axis=0, keepdims=True)
        num_b = jnp.sum(ekg[b * H:(b + 1) * H], axis=0, keepdims=True)
        ctx_b = num_b / den_b                                 # (1, WC), exact divide
        ctx = ctx_b if ctx is None else jnp.where(row_id >= b * H, ctx_b, ctx)
    v = vproj * ctx
    att = mm(v, w_o_ref) + row(R_BO)

    # ---- concat + fu(fu(x)) + x + split: 256-wide lane-concatenated slab ------
    bfu = bfu_ref[...]                                        # (2, 2*WC) f32
    ab0 = jnp.concatenate([x1out, att], axis=1)               # (BH, 2*WC) f32

    def fu_block(ab):
        h = jnp.maximum(mm(ab, w_fu1_ref) + bfu[0:1, :], 0.0)
        return mm(h, w_fu2_ref) + bfu[1:2, :] + ab

    out = fu_block(fu_block(ab0)) + ab0
    y1_ref[...] = out[:, 0:WC]
    y2_ref[...] = out[:, WC:2 * WC]


# ------------------------------ host-side prep ------------------------------ #

def prepare_params(p):
    """Fold module weights into lane-dense structured matrices (matmul weights bf16)."""

    def bd(w_small):                   # (Cin, Cout) (in,out) -> block-diag (W*Cin, W*Cout)
        w_small = np.asarray(w_small, np.float32)
        ci, co = w_small.shape
        big = np.zeros((W * ci, W * co), np.float32)
        for w in range(W):
            big[w * ci:(w + 1) * ci, w * co:(w + 1) * co] = w_small
        return big

    def tile_row(v):                   # (C,) per-channel -> (1, WC) lane-tiled
        return np.tile(np.asarray(v, np.float32).reshape(-1), W).reshape(1, WC)

    # AKConv: 3 tap weights stacked along K -> single (3*WC, WC) matmul.
    w_ak = np.concatenate([bd(p["ak_w0"]), bd(p["ak_w1"]), bd(p["ak_w2"])], axis=0)

    # Depthwise taps: one (1, WC) row per (kh, kw) with the per-channel tap weight,
    # zeroed where the w-direction padding falls.
    def dw_taps(wt, K, dil, pad):
        wt = np.asarray(wt, np.float32)            # (K, K, C)
        rows = np.zeros((K * K, WC), np.float32)
        for kh in range(K):
            for kw in range(K):
                dwo = kw * dil - pad
                for w in range(W):
                    if 0 <= w + dwo < W:
                        rows[kh * K + kw, w * C:(w + 1) * C] = wt[kh, kw]
        return rows

    taps5 = dw_taps(p["lka_w5"], 5, 1, 2)
    taps7 = dw_taps(p["lka_w7"], 7, 3, 9)

    # Fused attention projection [i | k | v] (fc_i weight replicated over C lanes).
    wi = np.asarray(p["fc_i_w"], np.float32)[0]
    wirep = np.zeros((WC, WC), np.float32)
    for w in range(W):
        for co in range(C):
            wirep[w * C:(w + 1) * C, w * C + co] = wi
    w_ikv = np.concatenate([wirep, bd(p["fc_k_w"]), bd(p["fc_v_w"])], axis=1)

    # fu 1x1 convs on 2C channels over the (x1out | att) lane-concatenated slab.
    def bd2(wfull):                    # (2C, 2C) (in,out) -> (2*WC, 2*WC)
        wfull = np.asarray(wfull, np.float32)
        big = np.zeros((2 * WC, 2 * WC), np.float32)
        for hi in range(2):
            for ho in range(2):
                blk = wfull[hi * C:(hi + 1) * C, ho * C:(ho + 1) * C]
                for w in range(W):
                    big[hi * WC + w * C:hi * WC + (w + 1) * C,
                        ho * WC + w * C:ho * WC + (w + 1) * C] = blk
        return big

    f1b = np.asarray(p["fu1_b"], np.float32)[0]
    f2b = np.asarray(p["fu2_b"], np.float32)[0]

    brow = np.concatenate([
        tile_row(p["ak_gamma"]), tile_row(p["ak_beta"]),
        tile_row(p["lka_b5"]), tile_row(p["lka_b7"]),
        tile_row(p["lka1_b"]), tile_row(p["aklka_conv_b"]),
        np.full((1, WC), float(np.asarray(p["fc_i_b"]).reshape(())), np.float32),
        tile_row(p["fc_k_b"]), tile_row(p["fc_v_b"]), tile_row(p["fc_o_b"]),
    ], axis=0)
    bfu = np.concatenate([
        np.concatenate([tile_row(f1b[:C]), tile_row(f1b[C:])], axis=1),
        np.concatenate([tile_row(f2b[:C]), tile_row(f2b[C:])], axis=1),
    ], axis=0)

    asbf = lambda a: jnp.asarray(a, jnp.bfloat16)
    return {
        "w_ak": asbf(w_ak),
        "w_lka1": asbf(bd(p["lka1_w"])),
        "w_conv": asbf(bd(p["aklka_conv_w"])),
        "w_ikv": asbf(w_ikv),
        "w_o": asbf(bd(p["fc_o_w"])),
        "w_fu1": asbf(bd2(p["fu1_w"])),
        "w_fu2": asbf(bd2(p["fu2_w"])),
        "taps5": jnp.asarray(taps5),
        "taps7": jnp.asarray(taps7),
        "brow": jnp.asarray(brow),
        "bfu": jnp.asarray(bfu),
    }


# ------------------------------- forward ----------------------------------- #

def ctf_forward(prep, x1_nchw, x2_nchw):
    # NCHW -> lane-dense slab (B*H, W*C); the only wrapper-side data movement.
    x1 = jnp.transpose(x1_nchw, (0, 2, 3, 1)).reshape(BH, WC).astype(jnp.float32)
    x2 = jnp.transpose(x2_nchw, (0, 2, 3, 1)).reshape(BH, WC).astype(jnp.float32)

    def full_spec(shape):
        n = len(shape)
        return pl.BlockSpec(shape, lambda i: (0,) * n)

    consts = [prep[k] for k in CONST_KEYS]
    in_specs = ([full_spec(x1.shape), full_spec(x2.shape)]
                + [full_spec(c.shape) for c in consts])

    y1s, y2s = pl.pallas_call(
        ctf_kernel,
        out_shape=[jax.ShapeDtypeStruct((BH, WC), jnp.float32),
                   jax.ShapeDtypeStruct((BH, WC), jnp.float32)],
        grid=(1,),   # single VMEM-resident block (BatchNorm couples the batch)
        in_specs=in_specs,
        out_specs=[full_spec((BH, WC)), full_spec((BH, WC))],
        compiler_params=pltpu.CompilerParams(dimension_semantics=("arbitrary",)),
    )(x1, x2, *consts)

    y1 = jnp.transpose(y1s.reshape(B, H, W, C), (0, 3, 1, 2))
    y2 = jnp.transpose(y2s.reshape(B, H, W, C), (0, 3, 1, 2))
    return y1, y2


# ------------------------------- params ------------------------------------ #

def init_params(key, dim):
    C2 = 2 * dim
    ks = jax.random.split(key, 32)
    ki = iter(range(32))

    def u(shape, fan_in):
        bound = float(fan_in) ** -0.5
        return jax.random.uniform(ks[next(ki)], shape, jnp.float32, -bound, bound)

    p = {
        # AKConv taps (weights pre-transposed to (in, out)); conv has no bias.
        "ak_w0": u((dim, dim), 3 * dim), "ak_w1": u((dim, dim), 3 * dim),
        "ak_w2": u((dim, dim), 3 * dim),
        "ak_gamma": jnp.ones((1, dim), jnp.float32),
        "ak_beta": jnp.zeros((1, dim), jnp.float32),
        # LKA depthwise convs (weights (K, K, C)), biases (1, C).
        "lka_w5": u((5, 5, dim), 25), "lka_b5": u((1, dim), 25),
        "lka_w7": u((7, 7, dim), 49), "lka_b7": u((1, dim), 49),
        # LKA 1x1 conv and AKLKA 1x1 conv (pre-transposed (in, out)).
        "lka1_w": u((dim, dim), dim), "lka1_b": u((1, dim), dim),
        "aklka_conv_w": u((dim, dim), dim), "aklka_conv_b": u((1, dim), dim),
        # MobileViTv2Attention linears (fc_i as (1, d); others (in, out)).
        "fc_i_w": u((1, dim), dim), "fc_i_b": u((1, 1), dim),
        "fc_k_w": u((dim, dim), dim), "fc_k_b": u((1, dim), dim),
        "fc_v_w": u((dim, dim), dim), "fc_v_b": u((1, dim), dim),
        "fc_o_w": u((dim, dim), dim), "fc_o_b": u((1, dim), dim),
        # fu block on 2*dim channels ((in, out)).
        "fu1_w": u((C2, C2), C2), "fu1_b": u((1, C2), C2),
        "fu2_w": u((C2, C2), C2), "fu2_b": u((1, C2), C2),
    }
    return p


# --------------------------------- main ------------------------------------ #

if __name__ == "__main__":
    key = jax.random.PRNGKey(0)
    k1, k2, kp = jax.random.split(key, 3)
    x1 = jax.random.normal(k1, (B, C, H, W), jnp.float32)
    x2 = jax.random.normal(k2, (B, C, H, W), jnp.float32)

    params = init_params(kp, C)
    prep = prepare_params(params)

    fwd = jax.jit(functools.partial(ctf_forward, prep))
    out1, out2 = fwd(x1, x2)
    jax.block_until_ready((out1, out2))

    assert out1.shape == (B, C, H, W) and out2.shape == (B, C, H, W)
    assert out1.dtype == jnp.float32 and out2.dtype == jnp.float32
    assert bool(jnp.all(jnp.isfinite(out1))) and bool(jnp.all(jnp.isfinite(out2)))
    print("KERNEL_OK")
</pallas_src>

<mosaic_0001>
module attributes {stable_mosaic.version = 11 : i64} {
  func.func @ctf_kernel(%arg0: i32, %arg1: memref<32x128xf32, #tpu.memory_space<vmem>>, %arg2: memref<32x128xf32, #tpu.memory_space<vmem>>, %arg3: memref<384x128xbf16, #tpu.memory_space<vmem>>, %arg4: memref<128x128xbf16, #tpu.memory_space<vmem>>, %arg5: memref<128x128xbf16, #tpu.memory_space<vmem>>, %arg6: memref<128x384xbf16, #tpu.memory_space<vmem>>, %arg7: memref<128x128xbf16, #tpu.memory_space<vmem>>, %arg8: memref<256x256xbf16, #tpu.memory_space<vmem>>, %arg9: memref<256x256xbf16, #tpu.memory_space<vmem>>, %arg10: memref<25x128xf32, #tpu.memory_space<vmem>>, %arg11: memref<49x128xf32, #tpu.memory_space<vmem>>, %arg12: memref<10x128xf32, #tpu.memory_space<vmem>>, %arg13: memref<2x256xf32, #tpu.memory_space<vmem>>, %arg14: memref<32x128xf32, #tpu.memory_space<vmem>>, %arg15: memref<32x128xf32, #tpu.memory_space<vmem>>) attributes {dimension_semantics = [#tpu.dimension_semantics<arbitrary>], iteration_bounds = array<i64: 1>, scalar_prefetch = 0 : i64, scratch_operands = 0 : i64, tpu.core_type = #tpu.core_type<tc>, window_params = [{pipeline_mode = #tpu.pipeline_mode<synchronous>, transform_indices = @transform_0, window_bounds = array<i64: 32, 128>}, {pipeline_mode = #tpu.pipeline_mode<synchronous>, transform_indices = @transform_1, window_bounds = array<i64: 32, 128>}, {pipeline_mode = #tpu.pipeline_mode<synchronous>, transform_indices = @transform_2, window_bounds = array<i64: 384, 128>}, {pipeline_mode = #tpu.pipeline_mode<synchronous>, transform_indices = @transform_3, window_bounds = array<i64: 128, 128>}, {pipeline_mode = #tpu.pipeline_mode<synchronous>, transform_indices = @transform_4, window_bounds = array<i64: 128, 128>}, {pipeline_mode = #tpu.pipeline_mode<synchronous>, transform_indices = @transform_5, window_bounds = array<i64: 128, 384>}, {pipeline_mode = #tpu.pipeline_mode<synchronous>, transform_indices = @transform_6, window_bounds = array<i64: 128, 128>}, {pipeline_mode = #tpu.pipeline_mode<synchronous>, transform_indices = @transform_7, window_bounds = array<i64: 256, 256>}, {pipeline_mode = #tpu.pipeline_mode<synchronous>, transform_indices = @transform_8, window_bounds = array<i64: 256, 256>}, {pipeline_mode = #tpu.pipeline_mode<synchronous>, transform_indices = @transform_9, window_bounds = array<i64: 25, 128>}, {pipeline_mode = #tpu.pipeline_mode<synchronous>, transform_indices = @transform_10, window_bounds = array<i64: 49, 128>}, {pipeline_mode = #tpu.pipeline_mode<synchronous>, transform_indices = @transform_11, window_bounds = array<i64: 10, 128>}, {pipeline_mode = #tpu.pipeline_mode<synchronous>, transform_indices = @transform_12, window_bounds = array<i64: 2, 256>}, {pipeline_mode = #tpu.pipeline_mode<synchronous>, transform_indices = @transform_13, window_bounds = array<i64: 32, 128>}, {pipeline_mode = #tpu.pipeline_mode<synchronous>, transform_indices = @transform_14, window_bounds = array<i64: 32, 128>}]} {
    %c0 = arith.constant 0 : index
    %c0_0 = arith.constant 0 : index
    %0 = vector.load %arg12[%c0, %c0_0] : memref<10x128xf32, #tpu.memory_space<vmem>>, vector<10x128xf32>
    %1 = tpu.iota {dimensions = array<i32: 0>} : vector<32x128xi32>
    %2 = tpu.iota {dimensions = array<i32: 1>} : vector<32x128xi32>
    %c16_i32 = arith.constant 16 : i32
    %3 = vector.broadcast %c16_i32 : i32 to vector<32x128xi32>
    %4 = arith.cmpi sge, %1, %3 : vector<32x128xi32>
    %c16_i32_1 = arith.constant 16 : i32
    %5 = vector.broadcast %c16_i32_1 : i32 to vector<32x128xi32>
    %6 = arith.subi %1, %5 : vector<32x128xi32>
    %7 = arith.select %4, %6, %1 : vector<32x128xi1>, vector<32x128xi32>
    %c0_2 = arith.constant 0 : index
    %c0_3 = arith.constant 0 : index
    %8 = vector.load %arg1[%c0_2, %c0_3] : memref<32x128xf32, #tpu.memory_space<vmem>>, vector<32x128xf32>
    %c0_4 = arith.constant 0 : index
    %c0_5 = arith.constant 0 : index
    %9 = vector.load %arg2[%c0_4, %c0_5] : memref<32x128xf32, #tpu.memory_space<vmem>>, vector<32x128xf32>
    %c120_i32 = arith.constant 120 : i32
    %10 = vector.broadcast %c120_i32 : i32 to vector<32x128xi32>
    %11 = arith.cmpi sge, %2, %10 : vector<32x128xi32>
    %c120_i32_6 = arith.constant 120 : i32
    %12 = tpu.dynamic_rotate %8 by %c120_i32_6 dim 1 : vector<32x128xf32>, i32 -> vector<32x128xf32>
    %13 = arith.select %11, %8, %12 : vector<32x128xi1>, vector<32x128xf32>
    %c15_i32 = arith.constant 15 : i32
    %14 = vector.broadcast %c15_i32 : i32 to vector<32x128xi32>
    %15 = arith.cmpi eq, %7, %14 : vector<32x128xi32>
    %c31_i32 = arith.constant 31 : i32
    %16 = tpu.dynamic_rotate %8 by %c31_i32 dim 0 : vector<32x128xf32>, i32 -> vector<32x128xf32>
    %17 = arith.select %15, %8, %16 : vector<32x128xi1>, vector<32x128xf32>
    %18 = tpu.concatenate %8, %13, %17 in 1 : vector<32x128xf32>, vector<32x128xf32>, vector<32x128xf32> -> vector<32x384xf32>
    %19 = arith.truncf %18 : vector<32x384xf32> to vector<32x384xbf16>
    %c0_7 = arith.constant 0 : index
    %c0_8 = arith.constant 0 : index
    %20 = vector.load %arg3[%c0_7, %c0_8] : memref<384x128xbf16, #tpu.memory_space<vmem>>, vector<384x128xbf16>
    %cst = arith.constant dense<0.000000e+00> : vector<32x128xf32>
    %21 = tpu.matmul %19, %20, %cst {dimension_numbers = #tpu.dot_dimension_numbers<[1], [0], [0], [1], [0, 0, 1, 1], [], []>} : vector<32x384xbf16>, vector<384x128xbf16>, vector<32x128xf32> -> vector<32x128xf32>
    %c8_i32 = arith.constant 8 : i32
    %22 = tpu.dynamic_rotate %21 by %c8_i32 dim 1 : vector<32x128xf32>, i32 -> vector<32x128xf32>
    %23 = arith.addf %21, %22 : vector<32x128xf32>
    %c16_i32_9 = arith.constant 16 : i32
    %24 = tpu.dynamic_rotate %23 by %c16_i32_9 dim 1 : vector<32x128xf32>, i32 -> vector<32x128xf32>
    %25 = arith.addf %23, %24 : vector<32x128xf32>
    %c32_i32 = arith.constant 32 : i32
    %26 = tpu.dynamic_rotate %25 by %c32_i32 dim 1 : vector<32x128xf32>, i32 -> vector<32x128xf32>
    %27 = arith.addf %25, %26 : vector<32x128xf32>
    %c64_i32 = arith.constant 64 : i32
    %28 = tpu.dynamic_rotate %27 by %c64_i32 dim 1 : vector<32x128xf32>, i32 -> vector<32x128xf32>
    %29 = arith.addf %27, %28 : vector<32x128xf32>
    %cst_10 = arith.constant dense<0.000000e+00> : vector<128xf32>
    %30 = vector.multi_reduction <add>, %29, %cst_10 [0] : vector<32x128xf32> to vector<128xf32>
    %31 = vector.shape_cast %30 : vector<128xf32> to vector<1x128xf32>
    %cst_11 = arith.constant 0.001953125 : f32
    %32 = vector.broadcast %cst_11 : f32 to vector<1x128xf32>
    %33 = arith.mulf %31, %32 : vector<1x128xf32>
    %34 = vector.broadcast %33 : vector<1x128xf32> to vector<32x128xf32>
    %35 = arith.subf %21, %34 : vector<32x128xf32>
    %36 = arith.mulf %35, %35 : vector<32x128xf32>
    %c8_i32_12 = arith.constant 8 : i32
    %37 = tpu.dynamic_rotate %36 by %c8_i32_12 dim 1 : vector<32x128xf32>, i32 -> vector<32x128xf32>
    %38 = arith.addf %36, %37 : vector<32x128xf32>
    %c16_i32_13 = arith.constant 16 : i32
    %39 = tpu.dynamic_rotate %38 by %c16_i32_13 dim 1 : vector<32x128xf32>, i32 -> vector<32x128xf32>
    %40 = arith.addf %38, %39 : vector<32x128xf32>
    %c32_i32_14 = arith.constant 32 : i32
    %41 = tpu.dynamic_rotate %40 by %c32_i32_14 dim 1 : vector<32x128xf32>, i32 -> vector<32x128xf32>
    %42 = arith.addf %40, %41 : vector<32x128xf32>
    %c64_i32_15 = arith.constant 64 : i32
    %43 = tpu.dynamic_rotate %42 by %c64_i32_15 dim 1 : vector<32x128xf32>, i32 -> vector<32x128xf32>
    %44 = arith.addf %42, %43 : vector<32x128xf32>
    %cst_16 = arith.constant dense<0.000000e+00> : vector<128xf32>
    %45 = vector.multi_reduction <add>, %44, %cst_16 [0] : vector<32x128xf32> to vector<128xf32>
    %46 = vector.shape_cast %45 : vector<128xf32> to vector<1x128xf32>
    %cst_17 = arith.constant 0.001953125 : f32
    %47 = vector.broadcast %cst_17 : f32 to vector<1x128xf32>
    %48 = arith.mulf %46, %47 : vector<1x128xf32>
    %cst_18 = arith.constant 9.99999974E-6 : f32
    %49 = vector.broadcast %cst_18 : f32 to vector<1x128xf32>
    %50 = arith.addf %48, %49 : vector<1x128xf32>
    %51 = math.rsqrt %50 : vector<1x128xf32>
    %52 = vector.broadcast %51 : vector<1x128xf32> to vector<32x128xf32>
    %53 = arith.mulf %35, %52 : vector<32x128xf32>
    %54 = vector.extract_strided_slice %0 {offsets = [0, 0], sizes = [1, 128], strides = [1, 1]} : vector<10x128xf32> to vector<1x128xf32>
    %55 = vector.broadcast %54 : vector<1x128xf32> to vector<32x128xf32>
    %56 = arith.mulf %53, %55 : vector<32x128xf32>
    %57 = vector.extract_strided_slice %0 {offsets = [1, 0], sizes = [1, 128], strides = [1, 1]} : vector<10x128xf32> to vector<1x128xf32>
    %58 = vector.broadcast %57 : vector<1x128xf32> to vector<32x128xf32>
    %59 = arith.addf %56, %58 : vector<32x128xf32>
    %cst_19 = arith.constant 0.000000e+00 : f32
    %60 = vector.broadcast %cst_19 : f32 to vector<32x128xf32>
    %61 = arith.subf %60, %59 : vector<32x128xf32>
    %62 = math.exp %61 : vector<32x128xf32>
    %cst_20 = arith.constant 1.000000e+00 : f32
    %63 = vector.broadcast %cst_20 : f32 to vector<32x128xf32>
    %64 = arith.addf %63, %62 : vector<32x128xf32>
    %cst_21 = arith.constant 1.000000e+00 : f32
    %65 = vector.broadcast %cst_21 : f32 to vector<32x128xf32>
    %66 = arith.divf %65, %64 : vector<32x128xf32>
    %67 = arith.mulf %59, %66 : vector<32x128xf32>
    %68 = vector.extract_strided_slice %0 {offsets = [2, 0], sizes = [1, 128], strides = [1, 1]} : vector<10x128xf32> to vector<1x128xf32>
    %c0_22 = arith.constant 0 : index
    %c0_23 = arith.constant 0 : index
    %69 = vector.load %arg10[%c0_22, %c0_23] : memref<25x128xf32, #tpu.memory_space<vmem>>, vector<25x128xf32>
    %c2_i32 = arith.constant 2 : i32
    %70 = tpu.dynamic_rotate %67 by %c2_i32 dim 0 : vector<32x128xf32>, i32 -> vector<32x128xf32>
    %c-2_i32 = arith.constant -2 : i32
    %71 = vector.broadcast %c-2_i32 : i32 to vector<32x128xi32>
    %72 = arith.addi %7, %71 : vector<32x128xi32>
    %c0_i32 = arith.constant 0 : i32
    %73 = vector.broadcast %c0_i32 : i32 to vector<32x128xi32>
    %74 = arith.cmpi sge, %72, %73 : vector<32x128xi32>
    %c-2_i32_24 = arith.constant -2 : i32
    %75 = vector.broadcast %c-2_i32_24 : i32 to vector<32x128xi32>
    %76 = arith.addi %7, %75 : vector<32x128xi32>
    %c16_i32_25 = arith.constant 16 : i32
    %77 = vector.broadcast %c16_i32_25 : i32 to vector<32x128xi32>
    %78 = arith.cmpi slt, %76, %77 : vector<32x128xi32>
    %79 = arith.andi %74, %78 : vector<32x128xi1>
    %80 = arith.extui %79 : vector<32x128xi1> to vector<32x128xi32>
    %81 = arith.sitofp %80 : vector<32x128xi32> to vector<32x128xf32>
    %82 = arith.mulf %70, %81 : vector<32x128xf32>
    %c16_i32_26 = arith.constant 16 : i32
    %83 = tpu.dynamic_rotate %82 by %c16_i32_26 dim 1 : vector<32x128xf32>, i32 -> vector<32x128xf32>
    %84 = vector.extract_strided_slice %69 {offsets = [0, 0], sizes = [1, 128], strides = [1, 1]} : vector<25x128xf32> to vector<1x128xf32>
    %85 = vector.broadcast %84 : vector<1x128xf32> to vector<32x128xf32>
    %86 = arith.mulf %83, %85 : vector<32x128xf32>
    %c8_i32_27 = arith.constant 8 : i32
    %87 = tpu.dynamic_rotate %82 by %c8_i32_27 dim 1 : vector<32x128xf32>, i32 -> vector<32x128xf32>
    %88 = vector.extract_strided_slice %69 {offsets = [1, 0], sizes = [1, 128], strides = [1, 1]} : vector<25x128xf32> to vector<1x128xf32>
    %89 = vector.broadcast %88 : vector<1x128xf32> to vector<32x128xf32>
    %90 = arith.mulf %87, %89 : vector<32x128xf32>
    %91 = arith.addf %86, %90 : vector<32x128xf32>
    %92 = vector.extract_strided_slice %69 {offsets = [2, 0], sizes = [1, 128], strides = [1, 1]} : vector<25x128xf32> to vector<1x128xf32>
    %93 = vector.broadcast %92 : vector<1x128xf32> to vector<32x128xf32>
    %94 = arith.mulf %82, %93 : vector<32x128xf32>
    %95 = arith.addf %91, %94 : vector<32x128xf32>
    %c120_i32_28 = arith.constant 120 : i32
    %96 = tpu.dynamic_rotate %82 by %c120_i32_28 dim 1 : vector<32x128xf32>, i32 -> vector<32x128xf32>
    %97 = vector.extract_strided_slice %69 {offsets = [3, 0], sizes = [1, 128], strides = [1, 1]} : vector<25x128xf32> to vector<1x128xf32>
    %98 = vector.broadcast %97 : vector<1x128xf32> to vector<32x128xf32>
    %99 = arith.mulf %96, %98 : vector<32x128xf32>
    %100 = arith.addf %95, %99 : vector<32x128xf32>
    %c112_i32 = arith.constant 112 : i32
    %101 = tpu.dynamic_rotate %82 by %c112_i32 dim 1 : vector<32x128xf32>, i32 -> vector<32x128xf32>
    %102 = vector.extract_strided_slice %69 {offsets = [4, 0], sizes = [1, 128], strides = [1, 1]} : vector<25x128xf32> to vector<1x128xf32>
    %103 = vector.broadcast %102 : vector<1x128xf32> to vector<32x128xf32>
    %104 = arith.mulf %101, %103 : vector<32x128xf32>
    %105 = arith.addf %100, %104 : vector<32x128xf32>
    %c1_i32 = arith.constant 1 : i32
    %106 = tpu.dynamic_rotate %67 by %c1_i32 dim 0 : vector<32x128xf32>, i32 -> vector<32x128xf32>
    %c-1_i32 = arith.constant -1 : i32
    %107 = vector.broadcast %c-1_i32 : i32 to vector<32x128xi32>
    %108 = arith.addi %7, %107 : vector<32x128xi32>
    %c0_i32_29 = arith.constant 0 : i32
    %109 = vector.broadcast %c0_i32_29 : i32 to vector<32x128xi32>
    %110 = arith.cmpi sge, %108, %109 : vector<32x128xi32>
    %c-1_i32_30 = arith.constant -1 : i32
    %111 = vector.broadcast %c-1_i32_30 : i32 to vector<32x128xi32>
    %112 = arith.addi %7, %111 : vector<32x128xi32>
    %c16_i32_31 = arith.constant 16 : i32
    %113 = vector.broadcast %c16_i32_31 : i32 to vector<32x128xi32>
    %114 = arith.cmpi slt, %112, %113 : vector<32x128xi32>
    %115 = arith.andi %110, %114 : vector<32x128xi1>
    %116 = arith.extui %115 : vector<32x128xi1> to vector<32x128xi32>
    %117 = arith.sitofp %116 : vector<32x128xi32> to vector<32x128xf32>
    %118 = arith.mulf %106, %117 : vector<32x128xf32>
    %c16_i32_32 = arith.constant 16 : i32
    %119 = tpu.dynamic_rotate %118 by %c16_i32_32 dim 1 : vector<32x128xf32>, i32 -> vector<32x128xf32>
    %120 = vector.extract_strided_slice %69 {offsets = [5, 0], sizes = [1, 128], strides = [1, 1]} : vector<25x128xf32> to vector<1x128xf32>
    %121 = vector.broadcast %120 : vector<1x128xf32> to vector<32x128xf32>
    %122 = arith.mulf %119, %121 : vector<32x128xf32>
    %123 = arith.addf %105, %122 : vector<32x128xf32>
    %c8_i32_33 = arith.constant 8 : i32
    %124 = tpu.dynamic_rotate %118 by %c8_i32_33 dim 1 : vector<32x128xf32>, i32 -> vector<32x128xf32>
    %125 = vector.extract_strided_slice %69 {offsets = [6, 0], sizes = [1, 128], strides = [1, 1]} : vector<25x128xf32> to vector<1x128xf32>
    %126 = vector.broadcast %125 : vector<1x128xf32> to vector<32x128xf32>
    %127 = arith.mulf %124, %126 : vector<32x128xf32>
    %128 = arith.addf %123, %127 : vector<32x128xf32>
    %129 = vector.extract_strided_slice %69 {offsets = [7, 0], sizes = [1, 128], strides = [1, 1]} : vector<25x128xf32> to vector<1x128xf32>
    %130 = vector.broadcast %129 : vector<1x128xf32> to vector<32x128xf32>
    %131 = arith.mulf %118, %130 : vector<32x128xf32>
    %132 = arith.addf %128, %131 : vector<32x128xf32>
    %c120_i32_34 = arith.constant 120 : i32
    %133 = tpu.dynamic_rotate %118 by %c120_i32_34 dim 1 : vector<32x128xf32>, i32 -> vector<32x128xf32>
    %134 = vector.extract_strided_slice %69 {offsets = [8, 0], sizes = [1, 128], strides = [1, 1]} : vector<25x128xf32> to vector<1x128xf32>
    %135 = vector.broadcast %134 : vector<1x128xf32> to vector<32x128xf32>
    %136 = arith.mulf %133, %135 : vector<32x128xf32>
    %137 = arith.addf %132, %136 : vector<32x128xf32>
    %c112_i32_35 = arith.constant 112 : i32
    %138 = tpu.dynamic_rotate %118 by %c112_i32_35 dim 1 : vector<32x128xf32>, i32 -> vector<32x128xf32>
    %139 = vector.extract_strided_slice %69 {offsets = [9, 0], sizes = [1, 128], strides = [1, 1]} : vector<25x128xf32> to vector<1x128xf32>
    %140 = vector.broadcast %139 : vector<1x128xf32> to vector<32x128xf32>
    %141 = arith.mulf %138, %140 : vector<32x128xf32>
    %142 = arith.addf %137, %141 : vector<32x128xf32>
    %c16_i32_36 = arith.constant 16 : i32
    %143 = tpu.dynamic_rotate %67 by %c16_i32_36 dim 1 : vector<32x128xf32>, i32 -> vector<32x128xf32>
    %144 = vector.extract_strided_slice %69 {offsets = [10, 0], sizes = [1, 128], strides = [1, 1]} : vector<25x128xf32> to vector<1x128xf32>
    %145 = vector.broadcast %144 : vector<1x128xf32> to vector<32x128xf32>
    %146 = arith.mulf %143, %145 : vector<32x128xf32>
    %147 = arith.addf %142, %146 : vector<32x128xf32>
    %c8_i32_37 = arith.constant 8 : i32
    %148 = tpu.dynamic_rotate %67 by %c8_i32_37 dim 1 : vector<32x128xf32>, i32 -> vector<32x128xf32>
    %149 = vector.extract_strided_slice %69 {offsets = [11, 0], sizes = [1, 128], strides = [1, 1]} : vector<25x128xf32> to vector<1x128xf32>
    %150 = vector.broadcast %149 : vector<1x128xf32> to vector<32x128xf32>
    %151 = arith.mulf %148, %150 : vector<32x128xf32>
    %152 = arith.addf %147, %151 : vector<32x128xf32>
    %153 = vector.extract_strided_slice %69 {offsets = [12, 0], sizes = [1, 128], strides = [1, 1]} : vector<25x128xf32> to vector<1x128xf32>
    %154 = vector.broadcast %153 : vector<1x128xf32> to vector<32x128xf32>
    %155 = arith.mulf %67, %154 : vector<32x128xf32>
    %156 = arith.addf %152, %155 : vector<32x128xf32>
    %c120_i32_38 = arith.constant 120 : i32
    %157 = tpu.dynamic_rotate %67 by %c120_i32_38 dim 1 : vector<32x128xf32>, i32 -> vector<32x128xf32>
    %158 = vector.extract_strided_slice %69 {offsets = [13, 0], sizes = [1, 128], strides = [1, 1]} : vector<25x128xf32> to vector<1x128xf32>
    %159 = vector.broadcast %158 : vector<1x128xf32> to vector<32x128xf32>
    %160 = arith.mulf %157, %159 : vector<32x128xf32>
    %161 = arith.addf %156, %160 : vector<32x128xf32>
    %c112_i32_39 = arith.constant 112 : i32
    %162 = tpu.dynamic_rotate %67 by %c112_i32_39 dim 1 : vector<32x128xf32>, i32 -> vector<32x128xf32>
    %163 = vector.extract_strided_slice %69 {offsets = [14, 0], sizes = [1, 128], strides = [1, 1]} : vector<25x128xf32> to vector<1x128xf32>
    %164 = vector.broadcast %163 : vector<1x128xf32> to vector<32x128xf32>
    %165 = arith.mulf %162, %164 : vector<32x128xf32>
    %166 = arith.addf %161, %165 : vector<32x128xf32>
    %c31_i32_40 = arith.constant 31 : i32
    %167 = tpu.dynamic_rotate %67 by %c31_i32_40 dim 0 : vector<32x128xf32>, i32 -> vector<32x128xf32>
    %c1_i32_41 = arith.constant 1 : i32
    %168 = vector.broadcast %c1_i32_41 : i32 to vector<32x128xi32>
    %169 = arith.addi %7, %168 : vector<32x128xi32>
    %c0_i32_42 = arith.constant 0 : i32
    %170 = vector.broadcast %c0_i32_42 : i32 to vector<32x128xi32>
    %171 = arith.cmpi sge, %169, %170 : vector<32x128xi32>
    %c1_i32_43 = arith.constant 1 : i32
    %172 = vector.broadcast %c1_i32_43 : i32 to vector<32x128xi32>
    %173 = arith.addi %7, %172 : vector<32x128xi32>
    %c16_i32_44 = arith.constant 16 : i32
    %174 = vector.broadcast %c16_i32_44 : i32 to vector<32x128xi32>
    %175 = arith.cmpi slt, %173, %174 : vector<32x128xi32>
    %176 = arith.andi %171, %175 : vector<32x128xi1>
    %177 = arith.extui %176 : vector<32x128xi1> to vector<32x128xi32>
    %178 = arith.sitofp %177 : vector<32x128xi32> to vector<32x128xf32>
    %179 = arith.mulf %167, %178 : vector<32x128xf32>
    %c16_i32_45 = arith.constant 16 : i32
    %180 = tpu.dynamic_rotate %179 by %c16_i32_45 dim 1 : vector<32x128xf32>, i32 -> vector<32x128xf32>
    %181 = vector.extract_strided_slice %69 {offsets = [15, 0], sizes = [1, 128], strides = [1, 1]} : vector<25x128xf32> to vector<1x128xf32>
    %182 = vector.broadcast %181 : vector<1x128xf32> to vector<32x128xf32>
    %183 = arith.mulf %180, %182 : vector<32x128xf32>
    %184 = arith.addf %166, %183 : vector<32x128xf32>
    %c8_i32_46 = arith.constant 8 : i32
    %185 = tpu.dynamic_rotate %179 by %c8_i32_46 dim 1 : vector<32x128xf32>, i32 -> vector<32x128xf32>
    %186 = vector.extract_strided_slice %69 {offsets = [16, 0], sizes = [1, 128], strides = [1, 1]} : vector<25x128xf32> to vector<1x128xf32>
    %187 = vector.broadcast %186 : vector<1x128xf32> to vector<32x128xf32>
    %188 = arith.mulf %185, %187 : vector<32x128xf32>
    %189 = arith.addf %184, %188 : vector<32x128xf32>
    %190 = vector.extract_strided_slice %69 {offsets = [17, 0], sizes = [1, 128], strides = [1, 1]} : vector<25x128xf32> to vector<1x128xf32>
    %191 = vector.broadcast %190 : vector<1x128xf32> to vector<32x128xf32>
    %192 = arith.mulf %179, %191 : vector<32x128xf32>
    %193 = arith.addf %189, %192 : vector<32x128xf32>
    %c120_i32_47 = arith.constant 120 : i32
    %194 = tpu.dynamic_rotate %179 by %c120_i32_47 dim 1 : vector<32x128xf32>, i32 -> vector<32x128xf32>
    %195 = vector.extract_strided_slice %69 {offsets = [18, 0], sizes = [1, 128], strides = [1, 1]} : vector<25x128xf32> to vector<1x128xf32>
    %196 = vector.broadcast %195 : vector<1x128xf32> to vector<32x128xf32>
    %197 = arith.mulf %194, %196 : vector<32x128xf32>
    %198 = arith.addf %193, %197 : vector<32x128xf32>
    %c112_i32_48 = arith.constant 112 : i32
    %199 = tpu.dynamic_rotate %179 by %c112_i32_48 dim 1 : vector<32x128xf32>, i32 -> vector<32x128xf32>
    %200 = vector.extract_strided_slice %69 {offsets = [19, 0], sizes = [1, 128], strides = [1, 1]} : vector<25x128xf32> to vector<1x128xf32>
    %201 = vector.broadcast %200 : vector<1x128xf32> to vector<32x128xf32>
    %202 = arith.mulf %199, %201 : vector<32x128xf32>
    %203 = arith.addf %198, %202 : vector<32x128xf32>
    %c30_i32 = arith.constant 30 : i32
    %204 = tpu.dynamic_rotate %67 by %c30_i32 dim 0 : vector<32x128xf32>, i32 -> vector<32x128xf32>
    %c2_i32_49 = arith.constant 2 : i32
    %205 = vector.broadcast %c2_i32_49 : i32 to vector<32x128xi32>
    %206 = arith.addi %7, %205 : vector<32x128xi32>
    %c0_i32_50 = arith.constant 0 : i32
    %207 = vector.broadcast %c0_i32_50 : i32 to vector<32x128xi32>
    %208 = arith.cmpi sge, %206, %207 : vector<32x128xi32>
    %c2_i32_51 = arith.constant 2 : i32
    %209 = vector.broadcast %c2_i32_51 : i32 to vector<32x128xi32>
    %210 = arith.addi %7, %209 : vector<32x128xi32>
    %c16_i32_52 = arith.constant 16 : i32
    %211 = vector.broadcast %c16_i32_52 : i32 to vector<32x128xi32>
    %212 = arith.cmpi slt, %210, %211 : vector<32x128xi32>
    %213 = arith.andi %208, %212 : vector<32x128xi1>
    %214 = arith.extui %213 : vector<32x128xi1> to vector<32x128xi32>
    %215 = arith.sitofp %214 : vector<32x128xi32> to vector<32x128xf32>
    %216 = arith.mulf %204, %215 : vector<32x128xf32>
    %c16_i32_53 = arith.constant 16 : i32
    %217 = tpu.dynamic_rotate %216 by %c16_i32_53 dim 1 : vector<32x128xf32>, i32 -> vector<32x128xf32>
    %218 = vector.extract_strided_slice %69 {offsets = [20, 0], sizes = [1, 128], strides = [1, 1]} : vector<25x128xf32> to vector<1x128xf32>
    %219 = vector.broadcast %218 : vector<1x128xf32> to vector<32x128xf32>
    %220 = arith.mulf %217, %219 : vector<32x128xf32>
    %221 = arith.addf %203, %220 : vector<32x128xf32>
    %c8_i32_54 = arith.constant 8 : i32
    %222 = tpu.dynamic_rotate %216 by %c8_i32_54 dim 1 : vector<32x128xf32>, i32 -> vector<32x128xf32>
    %223 = vector.extract_strided_slice %69 {offsets = [21, 0], sizes = [1, 128], strides = [1, 1]} : vector<25x128xf32> to vector<1x128xf32>
    %224 = vector.broadcast %223 : vector<1x128xf32> to vector<32x128xf32>
    %225 = arith.mulf %222, %224 : vector<32x128xf32>
    %226 = arith.addf %221, %225 : vector<32x128xf32>
    %227 = vector.extract_strided_slice %69 {offsets = [22, 0], sizes = [1, 128], strides = [1, 1]} : vector<25x128xf32> to vector<1x128xf32>
    %228 = vector.broadcast %227 : vector<1x128xf32> to vector<32x128xf32>
    %229 = arith.mulf %216, %228 : vector<32x128xf32>
    %230 = arith.addf %226, %229 : vector<32x128xf32>
    %c120_i32_55 = arith.constant 120 : i32
    %231 = tpu.dynamic_rotate %216 by %c120_i32_55 dim 1 : vector<32x128xf32>, i32 -> vector<32x128xf32>
    %232 = vector.extract_strided_slice %69 {offsets = [23, 0], sizes = [1, 128], strides = [1, 1]} : vector<25x128xf32> to vector<1x128xf32>
    %233 = vector.broadcast %232 : vector<1x128xf32> to vector<32x128xf32>
    %234 = arith.mulf %231, %233 : vector<32x128xf32>
    %235 = arith.addf %230, %234 : vector<32x128xf32>
    %c112_i32_56 = arith.constant 112 : i32
    %236 = tpu.dynamic_rotate %216 by %c112_i32_56 dim 1 : vector<32x128xf32>, i32 -> vector<32x128xf32>
    %237 = vector.extract_strided_slice %69 {offsets = [24, 0], sizes = [1, 128], strides = [1, 1]} : vector<25x128xf32> to vector<1x128xf32>
    %238 = vector.broadcast %237 : vector<1x128xf32> to vector<32x128xf32>
    %239 = arith.mulf %236, %238 : vector<32x128xf32>
    %240 = arith.addf %235, %239 : vector<32x128xf32>
    %241 = vector.broadcast %68 : vector<1x128xf32> to vector<32x128xf32>
    %242 = arith.addf %240, %241 : vector<32x128xf32>
    %243 = vector.extract_strided_slice %0 {offsets = [3, 0], sizes = [1, 128], strides = [1, 1]} : vector<10x128xf32> to vector<1x128xf32>
    %c0_57 = arith.constant 0 : index
    %c0_58 = arith.constant 0 : index
    %244 = vector.load %arg11[%c0_57, %c0_58] : memref<49x128xf32, #tpu.memory_space<vmem>>, vector<49x128xf32>
    %c9_i32 = arith.constant 9 : i32
    %245 = tpu.dynamic_rotate %242 by %c9_i32 dim 0 : vector<32x128xf32>, i32 -> vector<32x128xf32>
    %c-9_i32 = arith.constant -9 : i32
    %246 = vector.broadcast %c-9_i32 : i32 to vector<32x128xi32>
    %247 = arith.addi %7, %246 : vector<32x128xi32>
    %c0_i32_59 = arith.constant 0 : i32
    %248 = vector.broadcast %c0_i32_59 : i32 to vector<32x128xi32>
    %249 = arith.cmpi sge, %247, %248 : vector<32x128xi32>
    %c-9_i32_60 = arith.constant -9 : i32
    %250 = vector.broadcast %c-9_i32_60 : i32 to vector<32x128xi32>
    %251 = arith.addi %7, %250 : vector<32x128xi32>
    %c16_i32_61 = arith.constant 16 : i32
    %252 = vector.broadcast %c16_i32_61 : i32 to vector<32x128xi32>
    %253 = arith.cmpi slt, %251, %252 : vector<32x128xi32>
    %254 = arith.andi %249, %253 : vector<32x128xi1>
    %255 = arith.extui %254 : vector<32x128xi1> to vector<32x128xi32>
    %256 = arith.sitofp %255 : vector<32x128xi32> to vector<32x128xf32>
    %257 = arith.mulf %245, %256 : vector<32x128xf32>
    %c72_i32 = arith.constant 72 : i32
    %258 = tpu.dynamic_rotate %257 by %c72_i32 dim 1 : vector<32x128xf32>, i32 -> vector<32x128xf32>
    %259 = vector.extract_strided_slice %244 {offsets = [0, 0], sizes = [1, 128], strides = [1, 1]} : vector<49x128xf32> to vector<1x128xf32>
    %260 = vector.broadcast %259 : vector<1x128xf32> to vector<32x128xf32>
    %261 = arith.mulf %258, %260 : vector<32x128xf32>
    %c48_i32 = arith.constant 48 : i32
    %262 = tpu.dynamic_rotate %257 by %c48_i32 dim 1 : vector<32x128xf32>, i32 -> vector<32x128xf32>
    %263 = vector.extract_strided_slice %244 {offsets = [1, 0], sizes = [1, 128], strides = [1, 1]} : vector<49x128xf32> to vector<1x128xf32>
    %264 = vector.broadcast %263 : vector<1x128xf32> to vector<32x128xf32>
    %265 = arith.mulf %262, %264 : vector<32x128xf32>
    %266 = arith.addf %261, %265 : vector<32x128xf32>
    %c24_i32 = arith.constant 24 : i32
    %267 = tpu.dynamic_rotate %257 by %c24_i32 dim 1 : vector<32x128xf32>, i32 -> vector<32x128xf32>
    %268 = vector.extract_strided_slice %244 {offsets = [2, 0], sizes = [1, 128], strides = [1, 1]} : vector<49x128xf32> to vector<1x128xf32>
    %269 = vector.broadcast %268 : vector<1x128xf32> to vector<32x128xf32>
    %270 = arith.mulf %267, %269 : vector<32x128xf32>
    %271 = arith.addf %266, %270 : vector<32x128xf32>
    %272 = vector.extract_strided_slice %244 {offsets = [3, 0], sizes = [1, 128], strides = [1, 1]} : vector<49x128xf32> to vector<1x128xf32>
    %273 = vector.broadcast %272 : vector<1x128xf32> to vector<32x128xf32>
    %274 = arith.mulf %257, %273 : vector<32x128xf32>
    %275 = arith.addf %271, %274 : vector<32x128xf32>
    %c104_i32 = arith.constant 104 : i32
    %276 = tpu.dynamic_rotate %257 by %c104_i32 dim 1 : vector<32x128xf32>, i32 -> vector<32x128xf32>
    %277 = vector.extract_strided_slice %244 {offsets = [4, 0], sizes = [1, 128], strides = [1, 1]} : vector<49x128xf32> to vector<1x128xf32>
    %278 = vector.broadcast %277 : vector<1x128xf32> to vector<32x128xf32>
    %279 = arith.mulf %276, %278 : vector<32x128xf32>
    %280 = arith.addf %275, %279 : vector<32x128xf32>
    %c80_i32 = arith.constant 80 : i32
    %281 = tpu.dynamic_rotate %257 by %c80_i32 dim 1 : vector<32x128xf32>, i32 -> vector<32x128xf32>
    %282 = vector.extract_strided_slice %244 {offsets = [5, 0], sizes = [1, 128], strides = [1, 1]} : vector<49x128xf32> to vector<1x128xf32>
    %283 = vector.broadcast %282 : vector<1x128xf32> to vector<32x128xf32>
    %284 = arith.mulf %281, %283 : vector<32x128xf32>
    %285 = arith.addf %280, %284 : vector<32x128xf32>
    %c56_i32 = arith.constant 56 : i32
    %286 = tpu.dynamic_rotate %257 by %c56_i32 dim 1 : vector<32x128xf32>, i32 -> vector<32x128xf32>
    %287 = vector.extract_strided_slice %244 {offsets = [6, 0], sizes = [1, 128], strides = [1, 1]} : vector<49x128xf32> to vector<1x128xf32>
    %288 = vector.broadcast %287 : vector<1x128xf32> to vector<32x128xf32>
    %289 = arith.mulf %286, %288 : vector<32x128xf32>
    %290 = arith.addf %285, %289 : vector<32x128xf32>
    %c6_i32 = arith.constant 6 : i32
    %291 = tpu.dynamic_rotate %242 by %c6_i32 dim 0 : vector<32x128xf32>, i32 -> vector<32x128xf32>
    %c-6_i32 = arith.constant -6 : i32
    %292 = vector.broadcast %c-6_i32 : i32 to vector<32x128xi32>
    %293 = arith.addi %7, %292 : vector<32x128xi32>
    %c0_i32_62 = arith.constant 0 : i32
    %294 = vector.broadcast %c0_i32_62 : i32 to vector<32x128xi32>
    %295 = arith.cmpi sge, %293, %294 : vector<32x128xi32>
    %c-6_i32_63 = arith.constant -6 : i32
    %296 = vector.broadcast %c-6_i32_63 : i32 to vector<32x128xi32>
    %297 = arith.addi %7, %296 : vector<32x128xi32>
    %c16_i32_64 = arith.constant 16 : i32
    %298 = vector.broadcast %c16_i32_64 : i32 to vector<32x128xi32>
    %299 = arith.cmpi slt, %297, %298 : vector<32x128xi32>
    %300 = arith.andi %295, %299 : vector<32x128xi1>
    %301 = arith.extui %300 : vector<32x128xi1> to vector<32x128xi32>
    %302 = arith.sitofp %301 : vector<32x128xi32> to vector<32x128xf32>
    %303 = arith.mulf %291, %302 : vector<32x128xf32>
    %c72_i32_65 = arith.constant 72 : i32
    %304 = tpu.dynamic_rotate %303 by %c72_i32_65 dim 1 : vector<32x128xf32>, i32 -> vector<32x128xf32>
    %305 = vector.extract_strided_slice %244 {offsets = [7, 0], sizes = [1, 128], strides = [1, 1]} : vector<49x128xf32> to vector<1x128xf32>
    %306 = vector.broadcast %305 : vector<1x128xf32> to vector<32x128xf32>
    %307 = arith.mulf %304, %306 : vector<32x128xf32>
    %308 = arith.addf %290, %307 : vector<32x128xf32>
    %c48_i32_66 = arith.constant 48 : i32
    %309 = tpu.dynamic_rotate %303 by %c48_i32_66 dim 1 : vector<32x128xf32>, i32 -> vector<32x128xf32>
    %310 = vector.extract_strided_slice %244 {offsets = [8, 0], sizes = [1, 128], strides = [1, 1]} : vector<49x128xf32> to vector<1x128xf32>
    %311 = vector.broadcast %310 : vector<1x128xf32> to vector<32x128xf32>
    %312 = arith.mulf %309, %311 : vector<32x128xf32>
    %313 = arith.addf %308, %312 : vector<32x128xf32>
    %c24_i32_67 = arith.constant 24 : i32
    %314 = tpu.dynamic_rotate %303 by %c24_i32_67 dim 1 : vector<32x128xf32>, i32 -> vector<32x128xf32>
    %315 = vector.extract_strided_slice %244 {offsets = [9, 0], sizes = [1, 128], strides = [1, 1]} : vector<49x128xf32> to vector<1x128xf32>
    %316 = vector.broadcast %315 : vector<1x128xf32> to vector<32x128xf32>
    %317 = arith.mulf %314, %316 : vector<32x128xf32>
    %318 = arith.addf %313, %317 : vector<32x128xf32>
    %319 = vector.extract_strided_slice %244 {offsets = [10, 0], sizes = [1, 128], strides = [1, 1]} : vector<49x128xf32> to vector<1x128xf32>
    %320 = vector.broadcast %319 : vector<1x128xf32> to vector<32x128xf32>
    %321 = arith.mulf %303, %320 : vector<32x128xf32>
    %322 = arith.addf %318, %321 : vector<32x128xf32>
    %c104_i32_68 = arith.constant 104 : i32
    %323 = tpu.dynamic_rotate %303 by %c104_i32_68 dim 1 : vector<32x128xf32>, i32 -> vector<32x128xf32>
    %324 = vector.extract_strided_slice %244 {offsets = [11, 0], sizes = [1, 128], strides = [1, 1]} : vector<49x128xf32> to vector<1x128xf32>
    %325 = vector.broadcast %324 : vector<1x128xf32> to vector<32x128xf32>
    %326 = arith.mulf %323, %325 : vector<32x128xf32>
    %327 = arith.addf %322, %326 : vector<32x128xf32>
    %c80_i32_69 = arith.constant 80 : i32
    %328 = tpu.dynamic_rotate %303 by %c80_i32_69 dim 1 : vector<32x128xf32>, i32 -> vector<32x128xf32>
    %329 = vector.extract_strided_slice %244 {offsets = [12, 0], sizes = [1, 128], strides = [1, 1]} : vector<49x128xf32> to vector<1x128xf32>
    %330 = vector.broadcast %329 : vector<1x128xf32> to vector<32x128xf32>
    %331 = arith.mulf %328, %330 : vector<32x128xf32>
    %332 = arith.addf %327, %331 : vector<32x128xf32>
    %c56_i32_70 = arith.constant 56 : i32
    %333 = tpu.dynamic_rotate %303 by %c56_i32_70 dim 1 : vector<32x128xf32>, i32 -> vector<32x128xf32>
    %334 = vector.extract_strided_slice %244 {offsets = [13, 0], sizes = [1, 128], strides = [1, 1]} : vector<49x128xf32> to vector<1x128xf32>
    %335 = vector.broadcast %334 : vector<1x128xf32> to vector<32x128xf32>
    %336 = arith.mulf %333, %335 : vector<32x128xf32>
    %337 = arith.addf %332, %336 : vector<32x128xf32>
    %c3_i32 = arith.constant 3 : i32
    %338 = tpu.dynamic_rotate %242 by %c3_i32 dim 0 : vector<32x128xf32>, i32 -> vector<32x128xf32>
    %c-3_i32 = arith.constant -3 : i32
    %339 = vector.broadcast %c-3_i32 : i32 to vector<32x128xi32>
    %340 = arith.addi %7, %339 : vector<32x128xi32>
    %c0_i32_71 = arith.constant 0 : i32
    %341 = vector.broadcast %c0_i32_71 : i32 to vector<32x128xi32>
    %342 = arith.cmpi sge, %340, %341 : vector<32x128xi32>
    %c-3_i32_72 = arith.constant -3 : i32
    %343 = vector.broadcast %c-3_i32_72 : i32 to vector<32x128xi32>
    %344 = arith.addi %7, %343 : vector<32x128xi32>
    %c16_i32_73 = arith.constant 16 : i32
    %345 = vector.broadcast %c16_i32_73 : i32 to vector<32x128xi32>
    %346 = arith.cmpi slt, %344, %345 : vector<32x128xi32>
    %347 = arith.andi %342, %346 : vector<32x128xi1>
    %348 = arith.extui %347 : vector<32x128xi1> to vector<32x128xi32>
    %349 = arith.sitofp %348 : vector<32x128xi32> to vector<32x128xf32>
    %350 = arith.mulf %338, %349 : vector<32x128xf32>
    %c72_i32_74 = arith.constant 72 : i32
    %351 = tpu.dynamic_rotate %350 by %c72_i32_74 dim 1 : vector<32x128xf32>, i32 -> vector<32x128xf32>
    %352 = vector.extract_strided_slice %244 {offsets = [14, 0], sizes = [1, 128], strides = [1, 1]} : vector<49x128xf32> to vector<1x128xf32>
    %353 = vector.broadcast %352 : vector<1x128xf32> to vector<32x128xf32>
    %354 = arith.mulf %351, %353 : vector<32x128xf32>
    %355 = arith.addf %337, %354 : vector<32x128xf32>
    %c48_i32_75 = arith.constant 48 : i32
    %356 = tpu.dynamic_rotate %350 by %c48_i32_75 dim 1 : vector<32x128xf32>, i32 -> vector<32x128xf32>
    %357 = vector.extract_strided_slice %244 {offsets = [15, 0], sizes = [1, 128], strides = [1, 1]} : vector<49x128xf32> to vector<1x128xf32>
    %358 = vector.broadcast %357 : vector<1x128xf32> to vector<32x128xf32>
    %359 = arith.mulf %356, %358 : vector<32x128xf32>
    %360 = arith.addf %355, %359 : vector<32x128xf32>
    %c24_i32_76 = arith.constant 24 : i32
    %361 = tpu.dynamic_rotate %350 by %c24_i32_76 dim 1 : vector<32x128xf32>, i32 -> vector<32x128xf32>
    %362 = vector.extract_strided_slice %244 {offsets = [16, 0], sizes = [1, 128], strides = [1, 1]} : vector<49x128xf32> to vector<1x128xf32>
    %363 = vector.broadcast %362 : vector<1x128xf32> to vector<32x128xf32>
    %364 = arith.mulf %361, %363 : vector<32x128xf32>
    %365 = arith.addf %360, %364 : vector<32x128xf32>
    %366 = vector.extract_strided_slice %244 {offsets = [17, 0], sizes = [1, 128], strides = [1, 1]} : vector<49x128xf32> to vector<1x128xf32>
    %367 = vector.broadcast %366 : vector<1x128xf32> to vector<32x128xf32>
    %368 = arith.mulf %350, %367 : vector<32x128xf32>
    %369 = arith.addf %365, %368 : vector<32x128xf32>
    %c104_i32_77 = arith.constant 104 : i32
    %370 = tpu.dynamic_rotate %350 by %c104_i32_77 dim 1 : vector<32x128xf32>, i32 -> vector<32x128xf32>
    %371 = vector.extract_strided_slice %244 {offsets = [18, 0], sizes = [1, 128], strides = [1, 1]} : vector<49x128xf32> to vector<1x128xf32>
    %372 = vector.broadcast %371 : vector<1x128xf32> to vector<32x128xf32>
    %373 = arith.mulf %370, %372 : vector<32x128xf32>
    %374 = arith.addf %369, %373 : vector<32x128xf32>
    %c80_i32_78 = arith.constant 80 : i32
    %375 = tpu.dynamic_rotate %350 by %c80_i32_78 dim 1 : vector<32x128xf32>, i32 -> vector<32x128xf32>
    %376 = vector.extract_strided_slice %244 {offsets = [19, 0], sizes = [1, 128], strides = [1, 1]} : vector<49x128xf32> to vector<1x128xf32>
    %377 = vector.broadcast %376 : vector<1x128xf32> to vector<32x128xf32>
    %378 = arith.mulf %375, %377 : vector<32x128xf32>
    %379 = arith.addf %374, %378 : vector<32x128xf32>
    %c56_i32_79 = arith.constant 56 : i32
    %380 = tpu.dynamic_rotate %350 by %c56_i32_79 dim 1 : vector<32x128xf32>, i32 -> vector<32x128xf32>
    %381 = vector.extract_strided_slice %244 {offsets = [20, 0], sizes = [1, 128], strides = [1, 1]} : vector<49x128xf32> to vector<1x128xf32>
    %382 = vector.broadcast %381 : vector<1x128xf32> to vector<32x128xf32>
    %383 = arith.mulf %380, %382 : vector<32x128xf32>
    %384 = arith.addf %379, %383 : vector<32x128xf32>
    %c72_i32_80 = arith.constant 72 : i32
    %385 = tpu.dynamic_rotate %242 by %c72_i32_80 dim 1 : vector<32x128xf32>, i32 -> vector<32x128xf32>
    %386 = vector.extract_strided_slice %244 {offsets = [21, 0], sizes = [1, 128], strides = [1, 1]} : vector<49x128xf32> to vector<1x128xf32>
    %387 = vector.broadcast %386 : vector<1x128xf32> to vector<32x128xf32>
    %388 = arith.mulf %385, %387 : vector<32x128xf32>
    %389 = arith.addf %384, %388 : vector<32x128xf32>
    %c48_i32_81 = arith.constant 48 : i32
    %390 = tpu.dynamic_rotate %242 by %c48_i32_81 dim 1 : vector<32x128xf32>, i32 -> vector<32x128xf32>
    %391 = vector.extract_strided_slice %244 {offsets = [22, 0], sizes = [1, 128], strides = [1, 1]} : vector<49x128xf32> to vector<1x128xf32>
    %392 = vector.broadcast %391 : vector<1x128xf32> to vector<32x128xf32>
    %393 = arith.mulf %390, %392 : vector<32x128xf32>
    %394 = arith.addf %389, %393 : vector<32x128xf32>
    %c24_i32_82 = arith.constant 24 : i32
    %395 = tpu.dynamic_rotate %242 by %c24_i32_82 dim 1 : vector<32x128xf32>, i32 -> vector<32x128xf32>
    %396 = vector.extract_strided_slice %244 {offsets = [23, 0], sizes = [1, 128], strides = [1, 1]} : vector<49x128xf32> to vector<1x128xf32>
    %397 = vector.broadcast %396 : vector<1x128xf32> to vector<32x128xf32>
    %398 = arith.mulf %395, %397 : vector<32x128xf32>
    %399 = arith.addf %394, %398 : vector<32x128xf32>
    %400 = vector.extract_strided_slice %244 {offsets = [24, 0], sizes = [1, 128], strides = [1, 1]} : vector<49x128xf32> to vector<1x128xf32>
    %401 = vector.broadcast %400 : vector<1x128xf32> to vector<32x128xf32>
    %402 = arith.mulf %242, %401 : vector<32x128xf32>
    %403 = arith.addf %399, %402 : vector<32x128xf32>
    %c104_i32_83 = arith.constant 104 : i32
    %404 = tpu.dynamic_rotate %242 by %c104_i32_83 dim 1 : vector<32x128xf32>, i32 -> vector<32x128xf32>
    %405 = vector.extract_strided_slice %244 {offsets = [25, 0], sizes = [1, 128], strides = [1, 1]} : vector<49x128xf32> to vector<1x128xf32>
    %406 = vector.broadcast %405 : vector<1x128xf32> to vector<32x128xf32>
    %407 = arith.mulf %404, %406 : vector<32x128xf32>
    %408 = arith.addf %403, %407 : vector<32x128xf32>
    %c80_i32_84 = arith.constant 80 : i32
    %409 = tpu.dynamic_rotate %242 by %c80_i32_84 dim 1 : vector<32x128xf32>, i32 -> vector<32x128xf32>
    %410 = vector.extract_strided_slice %244 {offsets = [26, 0], sizes = [1, 128], strides = [1, 1]} : vector<49x128xf32> to vector<1x128xf32>
    %411 = vector.broadcast %410 : vector<1x128xf32> to vector<32x128xf32>
    %412 = arith.mulf %409, %411 : vector<32x128xf32>
    %413 = arith.addf %408, %412 : vector<32x128xf32>
    %c56_i32_85 = arith.constant 56 : i32
    %414 = tpu.dynamic_rotate %242 by %c56_i32_85 dim 1 : vector<32x128xf32>, i32 -> vector<32x128xf32>
    %415 = vector.extract_strided_slice %244 {offsets = [27, 0], sizes = [1, 128], strides = [1, 1]} : vector<49x128xf32> to vector<1x128xf32>
    %416 = vector.broadcast %415 : vector<1x128xf32> to vector<32x128xf32>
    %417 = arith.mulf %414, %416 : vector<32x128xf32>
    %418 = arith.addf %413, %417 : vector<32x128xf32>
    %c29_i32 = arith.constant 29 : i32
    %419 = tpu.dynamic_rotate %242 by %c29_i32 dim 0 : vector<32x128xf32>, i32 -> vector<32x128xf32>
    %c3_i32_86 = arith.constant 3 : i32
    %420 = vector.broadcast %c3_i32_86 : i32 to vector<32x128xi32>
    %421 = arith.addi %7, %420 : vector<32x128xi32>
    %c0_i32_87 = arith.constant 0 : i32
    %422 = vector.broadcast %c0_i32_87 : i32 to vector<32x128xi32>
    %423 = arith.cmpi sge, %421, %422 : vector<32x128xi32>
    %c3_i32_88 = arith.constant 3 : i32
    %424 = vector.broadcast %c3_i32_88 : i32 to vector<32x128xi32>
    %425 = arith.addi %7, %424 : vector<32x128xi32>
    %c16_i32_89 = arith.constant 16 : i32
    %426 = vector.broadcast %c16_i32_89 : i32 to vector<32x128xi32>
    %427 = arith.cmpi slt, %425, %426 : vector<32x128xi32>
    %428 = arith.andi %423, %427 : vector<32x128xi1>
    %429 = arith.extui %428 : vector<32x128xi1> to vector<32x128xi32>
    %430 = arith.sitofp %429 : vector<32x128xi32> to vector<32x128xf32>
    %431 = arith.mulf %419, %430 : vector<32x128xf32>
    %c72_i32_90 = arith.constant 72 : i32
    %432 = tpu.dynamic_rotate %431 by %c72_i32_90 dim 1 : vector<32x128xf32>, i32 -> vector<32x128xf32>
    %433 = vector.extract_strided_slice %244 {offsets = [28, 0], sizes = [1, 128], strides = [1, 1]} : vector<49x128xf32> to vector<1x128xf32>
    %434 = vector.broadcast %433 : vector<1x128xf32> to vector<32x128xf32>
    %435 = arith.mulf %432, %434 : vector<32x128xf32>
    %436 = arith.addf %418, %435 : vector<32x128xf32>
    %c48_i32_91 = arith.constant 48 : i32
    %437 = tpu.dynamic_rotate %431 by %c48_i32_91 dim 1 : vector<32x128xf32>, i32 -> vector<32x128xf32>
    %438 = vector.extract_strided_slice %244 {offsets = [29, 0], sizes = [1, 128], strides = [1, 1]} : vector<49x128xf32> to vector<1x128xf32>
    %439 = vector.broadcast %438 : vector<1x128xf32> to vector<32x128xf32>
    %440 = arith.mulf %437, %439 : vector<32x128xf32>
    %441 = arith.addf %436, %440 : vector<32x128xf32>
    %c24_i32_92 = arith.constant 24 : i32
    %442 = tpu.dynamic_rotate %431 by %c24_i32_92 dim 1 : vector<32x128xf32>, i32 -> vector<32x128xf32>
    %443 = vector.extract_strided_slice %244 {offsets = [30, 0], sizes = [1, 128], strides = [1, 1]} : vector<49x128xf32> to vector<1x128xf32>
    %444 = vector.broadcast %443 : vector<1x128xf32> to vector<32x128xf32>
    %445 = arith.mulf %442, %444 : vector<32x128xf32>
    %446 = arith.addf %441, %445 : vector<32x128xf32>
    %447 = vector.extract_strided_slice %244 {offsets = [31, 0], sizes = [1, 128], strides = [1, 1]} : vector<49x128xf32> to vector<1x128xf32>
    %448 = vector.broadcast %447 : vector<1x128xf32> to vector<32x128xf32>
    %449 = arith.mulf %431, %448 : vector<32x128xf32>
    %450 = arith.addf %446, %449 : vector<32x128xf32>
    %c104_i32_93 = arith.constant 104 : i32
    %451 = tpu.dynamic_rotate %431 by %c104_i32_93 dim 1 : vector<32x128xf32>, i32 -> vector<32x128xf32>
    %452 = vector.extract_strided_slice %244 {offsets = [32, 0], sizes = [1, 128], strides = [1, 1]} : vector<49x128xf32> to vector<1x128xf32>
    %453 = vector.broadcast %452 : vector<1x128xf32> to vector<32x128xf32>
    %454 = arith.mulf %451, %453 : vector<32x128xf32>
    %455 = arith.addf %450, %454 : vector<32x128xf32>
    %c80_i32_94 = arith.constant 80 : i32
    %456 = tpu.dynamic_rotate %431 by %c80_i32_94 dim 1 : vector<32x128xf32>, i32 -> vector<32x128xf32>
    %457 = vector.extract_strided_slice %244 {offsets = [33, 0], sizes = [1, 128], strides = [1, 1]} : vector<49x128xf32> to vector<1x128xf32>
    %458 = vector.broadcast %457 : vector<1x128xf32> to vector<32x128xf32>
    %459 = arith.mulf %456, %458 : vector<32x128xf32>
    %460 = arith.addf %455, %459 : vector<32x128xf32>
    %c56_i32_95 = arith.constant 56 : i32
    %461 = tpu.dynamic_rotate %431 by %c56_i32_95 dim 1 : vector<32x128xf32>, i32 -> vector<32x128xf32>
    %462 = vector.extract_strided_slice %244 {offsets = [34, 0], sizes = [1, 128], strides = [1, 1]} : vector<49x128xf32> to vector<1x128xf32>
    %463 = vector.broadcast %462 : vector<1x128xf32> to vector<32x128xf32>
    %464 = arith.mulf %461, %463 : vector<32x128xf32>
    %465 = arith.addf %460, %464 : vector<32x128xf32>
    %c26_i32 = arith.constant 26 : i32
    %466 = tpu.dynamic_rotate %242 by %c26_i32 dim 0 : vector<32x128xf32>, i32 -> vector<32x128xf32>
    %c6_i32_96 = arith.constant 6 : i32
    %467 = vector.broadcast %c6_i32_96 : i32 to vector<32x128xi32>
    %468 = arith.addi %7, %467 : vector<32x128xi32>
    %c0_i32_97 = arith.constant 0 : i32
    %469 = vector.broadcast %c0_i32_97 : i32 to vector<32x128xi32>
    %470 = arith.cmpi sge, %468, %469 : vector<32x128xi32>
    %c6_i32_98 = arith.constant 6 : i32
    %471 = vector.broadcast %c6_i32_98 : i32 to vector<32x128xi32>
    %472 = arith.addi %7, %471 : vector<32x128xi32>
    %c16_i32_99 = arith.constant 16 : i32
    %473 = vector.broadcast %c16_i32_99 : i32 to vector<32x128xi32>
    %474 = arith.cmpi slt, %472, %473 : vector<32x128xi32>
    %475 = arith.andi %470, %474 : vector<32x128xi1>
    %476 = arith.extui %475 : vector<32x128xi1> to vector<32x128xi32>
    %477 = arith.sitofp %476 : vector<32x128xi32> to vector<32x128xf32>
    %478 = arith.mulf %466, %477 : vector<32x128xf32>
    %c72_i32_100 = arith.constant 72 : i32
    %479 = tpu.dynamic_rotate %478 by %c72_i32_100 dim 1 : vector<32x128xf32>, i32 -> vector<32x128xf32>
    %480 = vector.extract_strided_slice %244 {offsets = [35, 0], sizes = [1, 128], strides = [1, 1]} : vector<49x128xf32> to vector<1x128xf32>
    %481 = vector.broadcast %480 : vector<1x128xf32> to vector<32x128xf32>
    %482 = arith.mulf %479, %481 : vector<32x128xf32>
    %483 = arith.addf %465, %482 : vector<32x128xf32>
    %c48_i32_101 = arith.constant 48 : i32
    %484 = tpu.dynamic_rotate %478 by %c48_i32_101 dim 1 : vector<32x128xf32>, i32 -> vector<32x128xf32>
    %485 = vector.extract_strided_slice %244 {offsets = [36, 0], sizes = [1, 128], strides = [1, 1]} : vector<49x128xf32> to vector<1x128xf32>
    %486 = vector.broadcast %485 : vector<1x128xf32> to vector<32x128xf32>
    %487 = arith.mulf %484, %486 : vector<32x128xf32>
    %488 = arith.addf %483, %487 : vector<32x128xf32>
    %c24_i32_102 = arith.constant 24 : i32
    %489 = tpu.dynamic_rotate %478 by %c24_i32_102 dim 1 : vector<32x128xf32>, i32 -> vector<32x128xf32>
    %490 = vector.extract_strided_slice %244 {offsets = [37, 0], sizes = [1, 128], strides = [1, 1]} : vector<49x128xf32> to vector<1x128xf32>
    %491 = vector.broadcast %490 : vector<1x128xf32> to vector<32x128xf32>
    %492 = arith.mulf %489, %491 : vector<32x128xf32>
    %493 = arith.addf %488, %492 : vector<32x128xf32>
    %494 = vector.extract_strided_slice %244 {offsets = [38, 0], sizes = [1, 128], strides = [1, 1]} : vector<49x128xf32> to vector<1x128xf32>
    %495 = vector.broadcast %494 : vector<1x128xf32> to vector<32x128xf32>
    %496 = arith.mulf %478, %495 : vector<32x128xf32>
    %497 = arith.addf %493, %496 : vector<32x128xf32>
    %c104_i32_103 = arith.constant 104 : i32
    %498 = tpu.dynamic_rotate %478 by %c104_i32_103 dim 1 : vector<32x128xf32>, i32 -> vector<32x128xf32>
    %499 = vector.extract_strided_slice %244 {offsets = [39, 0], sizes = [1, 128], strides = [1, 1]} : vector<49x128xf32> to vector<1x128xf32>
    %500 = vector.broadcast %499 : vector<1x128xf32> to vector<32x128xf32>
    %501 = arith.mulf %498, %500 : vector<32x128xf32>
    %502 = arith.addf %497, %501 : vector<32x128xf32>
    %c80_i32_104 = arith.constant 80 : i32
    %503 = tpu.dynamic_rotate %478 by %c80_i32_104 dim 1 : vector<32x128xf32>, i32 -> vector<32x128xf32>
    %504 = vector.extract_strided_slice %244 {offsets = [40, 0], sizes = [1, 128], strides = [1, 1]} : vector<49x128xf32> to vector<1x128xf32>
    %505 = vector.broadcast %504 : vector<1x128xf32> to vector<32x128xf32>
    %506 = arith.mulf %503, %505 : vector<32x128xf32>
    %507 = arith.addf %502, %506 : vector<32x128xf32>
    %c56_i32_105 = arith.constant 56 : i32
    %508 = tpu.dynamic_rotate %478 by %c56_i32_105 dim 1 : vector<32x128xf32>, i32 -> vector<32x128xf32>
    %509 = vector.extract_strided_slice %244 {offsets = [41, 0], sizes = [1, 128], strides = [1, 1]} : vector<49x128xf32> to vector<1x128xf32>
    %510 = vector.broadcast %509 : vector<1x128xf32> to vector<32x128xf32>
    %511 = arith.mulf %508, %510 : vector<32x128xf32>
    %512 = arith.addf %507, %511 : vector<32x128xf32>
    %c23_i32 = arith.constant 23 : i32
    %513 = tpu.dynamic_rotate %242 by %c23_i32 dim 0 : vector<32x128xf32>, i32 -> vector<32x128xf32>
    %c9_i32_106 = arith.constant 9 : i32
    %514 = vector.broadcast %c9_i32_106 : i32 to vector<32x128xi32>
    %515 = arith.addi %7, %514 : vector<32x128xi32>
    %c0_i32_107 = arith.constant 0 : i32
    %516 = vector.broadcast %c0_i32_107 : i32 to vector<32x128xi32>
    %517 = arith.cmpi sge, %515, %516 : vector<32x128xi32>
    %c9_i32_108 = arith.constant 9 : i32
    %518 = vector.broadcast %c9_i32_108 : i32 to vector<32x128xi32>
    %519 = arith.addi %7, %518 : vector<32x128xi32>
    %c16_i32_109 = arith.constant 16 : i32
    %520 = vector.broadcast %c16_i32_109 : i32 to vector<32x128xi32>
    %521 = arith.cmpi slt, %519, %520 : vector<32x128xi32>
    %522 = arith.andi %517, %521 : vector<32x128xi1>
    %523 = arith.extui %522 : vector<32x128xi1> to vector<32x128xi32>
    %524 = arith.sitofp %523 : vector<32x128xi32> to vector<32x128xf32>
    %525 = arith.mulf %513, %524 : vector<32x128xf32>
    %c72_i32_110 = arith.constant 72 : i32
    %526 = tpu.dynamic_rotate %525 by %c72_i32_110 dim 1 : vector<32x128xf32>, i32 -> vector<32x128xf32>
    %527 = vector.extract_strided_slice %244 {offsets = [42, 0], sizes = [1, 128], strides = [1, 1]} : vector<49x128xf32> to vector<1x128xf32>
    %528 = vector.broadcast %527 : vector<1x128xf32> to vector<32x128xf32>
    %529 = arith.mulf %526, %528 : vector<32x128xf32>
    %530 = arith.addf %512, %529 : vector<32x128xf32>
    %c48_i32_111 = arith.constant 48 : i32
    %531 = tpu.dynamic_rotate %525 by %c48_i32_111 dim 1 : vector<32x128xf32>, i32 -> vector<32x128xf32>
    %532 = vector.extract_strided_slice %244 {offsets = [43, 0], sizes = [1, 128], strides = [1, 1]} : vector<49x128xf32> to vector<1x128xf32>
    %533 = vector.broadcast %532 : vector<1x128xf32> to vector<32x128xf32>
    %534 = arith.mulf %531, %533 : vector<32x128xf32>
    %535 = arith.addf %530, %534 : vector<32x128xf32>
    %c24_i32_112 = arith.constant 24 : i32
    %536 = tpu.dynamic_rotate %525 by %c24_i32_112 dim 1 : vector<32x128xf32>, i32 -> vector<32x128xf32>
    %537 = vector.extract_strided_slice %244 {offsets = [44, 0], sizes = [1, 128], strides = [1, 1]} : vector<49x128xf32> to vector<1x128xf32>
    %538 = vector.broadcast %537 : vector<1x128xf32> to vector<32x128xf32>
    %539 = arith.mulf %536, %538 : vector<32x128xf32>
    %540 = arith.addf %535, %539 : vector<32x128xf32>
    %541 = vector.extract_strided_slice %244 {offsets = [45, 0], sizes = [1, 128], strides = [1, 1]} : vector<49x128xf32> to vector<1x128xf32>
    %542 = vector.broadcast %541 : vector<1x128xf32> to vector<32x128xf32>
    %543 = arith.mulf %525, %542 : vector<32x128xf32>
    %544 = arith.addf %540, %543 : vector<32x128xf32>
    %c104_i32_113 = arith.constant 104 : i32
    %545 = tpu.dynamic_rotate %525 by %c104_i32_113 dim 1 : vector<32x128xf32>, i32 -> vector<32x128xf32>
    %546 = vector.extract_strided_slice %244 {offsets = [46, 0], sizes = [1, 128], strides = [1, 1]} : vector<49x128xf32> to vector<1x128xf32>
    %547 = vector.broadcast %546 : vector<1x128xf32> to vector<32x128xf32>
    %548 = arith.mulf %545, %547 : vector<32x128xf32>
    %549 = arith.addf %544, %548 : vector<32x128xf32>
    %c80_i32_114 = arith.constant 80 : i32
    %550 = tpu.dynamic_rotate %525 by %c80_i32_114 dim 1 : vector<32x128xf32>, i32 -> vector<32x128xf32>
    %551 = vector.extract_strided_slice %244 {offsets = [47, 0], sizes = [1, 128], strides = [1, 1]} : vector<49x128xf32> to vector<1x128xf32>
    %552 = vector.broadcast %551 : vector<1x128xf32> to vector<32x128xf32>
    %553 = arith.mulf %550, %552 : vector<32x128xf32>
    %554 = arith.addf %549, %553 : vector<32x128xf32>
    %c56_i32_115 = arith.constant 56 : i32
    %555 = tpu.dynamic_rotate %525 by %c56_i32_115 dim 1 : vector<32x128xf32>, i32 -> vector<32x128xf32>
    %556 = vector.extract_strided_slice %244 {offsets = [48, 0], sizes = [1, 128], strides = [1, 1]} : vector<49x128xf32> to vector<1x128xf32>
    %557 = vector.broadcast %556 : vector<1x128xf32> to vector<32x128xf32>
    %558 = arith.mulf %555, %557 : vector<32x128xf32>
    %559 = arith.addf %554, %558 : vector<32x128xf32>
    %560 = vector.broadcast %243 : vector<1x128xf32> to vector<32x128xf32>
    %561 = arith.addf %559, %560 : vector<32x128xf32>
    %562 = arith.truncf %561 : vector<32x128xf32> to vector<32x128xbf16>
    %c0_116 = arith.constant 0 : index
    %c0_117 = arith.constant 0 : index
    %563 = vector.load %arg4[%c0_116, %c0_117] : memref<128x128xbf16, #tpu.memory_space<vmem>>, vector<128x128xbf16>
    %cst_118 = arith.constant dense<0.000000e+00> : vector<32x128xf32>
    %564 = tpu.matmul %562, %563, %cst_118 {dimension_numbers = #tpu.dot_dimension_numbers<[1], [0], [0], [1], [0, 0, 1, 1], [], []>} : vector<32x128xbf16>, vector<128x128xbf16>, vector<32x128xf32> -> vector<32x128xf32>
    %565 = vector.extract_strided_slice %0 {offsets = [4, 0], sizes = [1, 128], strides = [1, 1]} : vector<10x128xf32> to vector<1x128xf32>
    %566 = vector.broadcast %565 : vector<1x128xf32> to vector<32x128xf32>
    %567 = arith.addf %564, %566 : vector<32x128xf32>
    %568 = arith.mulf %67, %567 : vector<32x128xf32>
    %569 = arith.truncf %568 : vector<32x128xf32> to vector<32x128xbf16>
    %c0_119 = arith.constant 0 : index
    %c0_120 = arith.constant 0 : index
    %570 = vector.load %arg5[%c0_119, %c0_120] : memref<128x128xbf16, #tpu.memory_space<vmem>>, vector<128x128xbf16>
    %cst_121 = arith.constant dense<0.000000e+00> : vector<32x128xf32>
    %571 = tpu.matmul %569, %570, %cst_121 {dimension_numbers = #tpu.dot_dimension_numbers<[1], [0], [0], [1], [0, 0, 1, 1], [], []>} : vector<32x128xbf16>, vector<128x128xbf16>, vector<32x128xf32> -> vector<32x128xf32>
    %572 = vector.extract_strided_slice %0 {offsets = [5, 0], sizes = [1, 128], strides = [1, 1]} : vector<10x128xf32> to vector<1x128xf32>
    %573 = vector.broadcast %572 : vector<1x128xf32> to vector<32x128xf32>
    %574 = arith.addf %571, %573 : vector<32x128xf32>
    %575 = arith.addf %574, %8 : vector<32x128xf32>
    %576 = arith.truncf %9 : vector<32x128xf32> to vector<32x128xbf16>
    %c0_122 = arith.constant 0 : index
    %c0_123 = arith.constant 0 : index
    %577 = vector.load %arg6[%c0_122, %c0_123] : memref<128x384xbf16, #tpu.memory_space<vmem>>, vector<128x384xbf16>
    %cst_124 = arith.constant dense<0.000000e+00> : vector<32x384xf32>
    %578 = tpu.matmul %576, %577, %cst_124 {dimension_numbers = #tpu.dot_dimension_numbers<[1], [0], [0], [1], [0, 0, 1, 1], [], []>} : vector<32x128xbf16>, vector<128x384xbf16>, vector<32x384xf32> -> vector<32x384xf32>
    %579 = vector.extract_strided_slice %578 {offsets = [0, 0], sizes = [32, 128], strides = [1, 1]} : vector<32x384xf32> to vector<32x128xf32>
    %580 = vector.extract_strided_slice %0 {offsets = [6, 0], sizes = [1, 128], strides = [1, 1]} : vector<10x128xf32> to vector<1x128xf32>
    %581 = vector.broadcast %580 : vector<1x128xf32> to vector<32x128xf32>
    %582 = arith.addf %579, %581 : vector<32x128xf32>
    %583 = vector.extract_strided_slice %578 {offsets = [0, 128], sizes = [32, 128], strides = [1, 1]} : vector<32x384xf32> to vector<32x128xf32>
    %584 = vector.extract_strided_slice %0 {offsets = [7, 0], sizes = [1, 128], strides = [1, 1]} : vector<10x128xf32> to vector<1x128xf32>
    %585 = vector.broadcast %584 : vector<1x128xf32> to vector<32x128xf32>
    %586 = arith.addf %583, %585 : vector<32x128xf32>
    %587 = vector.extract_strided_slice %578 {offsets = [0, 256], sizes = [32, 128], strides = [1, 1]} : vector<32x384xf32> to vector<32x128xf32>
    %588 = vector.extract_strided_slice %0 {offsets = [8, 0], sizes = [1, 128], strides = [1, 1]} : vector<10x128xf32> to vector<1x128xf32>
    %589 = vector.broadcast %588 : vector<1x128xf32> to vector<32x128xf32>
    %590 = arith.addf %587, %589 : vector<32x128xf32>
    %cst_125 = arith.constant dense<0xFF800000> : vector<128xf32>
    %591 = vector.multi_reduction <maximumf>, %582, %cst_125 [0] : vector<32x128xf32> to vector<128xf32>
    %592 = vector.shape_cast %591 : vector<128xf32> to vector<1x128xf32>
    %cst_126 = arith.constant dense<0xFF800000> : vector<1xf32>
    %593 = vector.multi_reduction <maximumf>, %592, %cst_126 [1] : vector<1x128xf32> to vector<1xf32>
    %594 = vector.shape_cast %593 : vector<1xf32> to vector<1x1xf32>
    %595 = vector.broadcast %594 : vector<1x1xf32> to vector<32x128xf32>
    %596 = arith.subf %582, %595 : vector<32x128xf32>
    %597 = math.exp %596 : vector<32x128xf32>
    %c8_i32_127 = arith.constant 8 : i32
    %598 = tpu.dynamic_rotate %597 by %c8_i32_127 dim 1 : vector<32x128xf32>, i32 -> vector<32x128xf32>
    %599 = arith.addf %597, %598 : vector<32x128xf32>
    %c16_i32_128 = arith.constant 16 : i32
    %600 = tpu.dynamic_rotate %599 by %c16_i32_128 dim 1 : vector<32x128xf32>, i32 -> vector<32x128xf32>
    %601 = arith.addf %599, %600 : vector<32x128xf32>
    %c32_i32_129 = arith.constant 32 : i32
    %602 = tpu.dynamic_rotate %601 by %c32_i32_129 dim 1 : vector<32x128xf32>, i32 -> vector<32x128xf32>
    %603 = arith.addf %601, %602 : vector<32x128xf32>
    %c64_i32_130 = arith.constant 64 : i32
    %604 = tpu.dynamic_rotate %603 by %c64_i32_130 dim 1 : vector<32x128xf32>, i32 -> vector<32x128xf32>
    %605 = arith.addf %603, %604 : vector<32x128xf32>
    %606 = arith.mulf %597, %586 : vector<32x128xf32>
    %c8_i32_131 = arith.constant 8 : i32
    %607 = tpu.dynamic_rotate %606 by %c8_i32_131 dim 1 : vector<32x128xf32>, i32 -> vector<32x128xf32>
    %608 = arith.addf %606, %607 : vector<32x128xf32>
    %c16_i32_132 = arith.constant 16 : i32
    %609 = tpu.dynamic_rotate %608 by %c16_i32_132 dim 1 : vector<32x128xf32>, i32 -> vector<32x128xf32>
    %610 = arith.addf %608, %609 : vector<32x128xf32>
    %c32_i32_133 = arith.constant 32 : i32
    %611 = tpu.dynamic_rotate %610 by %c32_i32_133 dim 1 : vector<32x128xf32>, i32 -> vector<32x128xf32>
    %612 = arith.addf %610, %611 : vector<32x128xf32>
    %c64_i32_134 = arith.constant 64 : i32
    %613 = tpu.dynamic_rotate %612 by %c64_i32_134 dim 1 : vector<32x128xf32>, i32 -> vector<32x128xf32>
    %614 = arith.addf %612, %613 : vector<32x128xf32>
    %615 = vector.extract_strided_slice %605 {offsets = [0, 0], sizes = [16, 128], strides = [1, 1]} : vector<32x128xf32> to vector<16x128xf32>
    %cst_135 = arith.constant dense<0.000000e+00> : vector<128xf32>
    %616 = vector.multi_reduction <add>, %615, %cst_135 [0] : vector<16x128xf32> to vector<128xf32>
    %617 = vector.shape_cast %616 : vector<128xf32> to vector<1x128xf32>
    %618 = vector.extract_strided_slice %614 {offsets = [0, 0], sizes = [16, 128], strides = [1, 1]} : vector<32x128xf32> to vector<16x128xf32>
    %cst_136 = arith.constant dense<0.000000e+00> : vector<128xf32>
    %619 = vector.multi_reduction <add>, %618, %cst_136 [0] : vector<16x128xf32> to vector<128xf32>
    %620 = vector.shape_cast %619 : vector<128xf32> to vector<1x128xf32>
    %621 = arith.divf %620, %617 : vector<1x128xf32>
    %622 = vector.extract_strided_slice %605 {offsets = [16, 0], sizes = [16, 128], strides = [1, 1]} : vector<32x128xf32> to vector<16x128xf32>
    %cst_137 = arith.constant dense<0.000000e+00> : vector<128xf32>
    %623 = vector.multi_reduction <add>, %622, %cst_137 [0] : vector<16x128xf32> to vector<128xf32>
    %624 = vector.shape_cast %623 : vector<128xf32> to vector<1x128xf32>
    %625 = vector.extract_strided_slice %614 {offsets = [16, 0], sizes = [16, 128], strides = [1, 1]} : vector<32x128xf32> to vector<16x128xf32>
    %cst_138 = arith.constant dense<0.000000e+00> : vector<128xf32>
    %626 = vector.multi_reduction <add>, %625, %cst_138 [0] : vector<16x128xf32> to vector<128xf32>
    %627 = vector.shape_cast %626 : vector<128xf32> to vector<1x128xf32>
    %628 = arith.divf %627, %624 : vector<1x128xf32>
    %c16_i32_139 = arith.constant 16 : i32
    %629 = vector.broadcast %c16_i32_139 : i32 to vector<32x128xi32>
    %630 = arith.cmpi sge, %1, %629 : vector<32x128xi32>
    %631 = vector.shape_cast %628 : vector<1x128xf32> to vector<1x128xf32>
    %632 = vector.broadcast %631 : vector<1x128xf32> to vector<32x128xf32>
    %633 = vector.shape_cast %621 : vector<1x128xf32> to vector<1x128xf32>
    %634 = vector.broadcast %633 : vector<1x128xf32> to vector<32x128xf32>
    %635 = arith.select %630, %632, %634 : vector<32x128xi1>, vector<32x128xf32>
    %636 = arith.mulf %590, %635 : vector<32x128xf32>
    %637 = arith.truncf %636 : vector<32x128xf32> to vector<32x128xbf16>
    %c0_140 = arith.constant 0 : index
    %c0_141 = arith.constant 0 : index
    %638 = vector.load %arg7[%c0_140, %c0_141] : memref<128x128xbf16, #tpu.memory_space<vmem>>, vector<128x128xbf16>
    %cst_142 = arith.constant dense<0.000000e+00> : vector<32x128xf32>
    %639 = tpu.matmul %637, %638, %cst_142 {dimension_numbers = #tpu.dot_dimension_numbers<[1], [0], [0], [1], [0, 0, 1, 1], [], []>} : vector<32x128xbf16>, vector<128x128xbf16>, vector<32x128xf32> -> vector<32x128xf32>
    %640 = vector.extract_strided_slice %0 {offsets = [9, 0], sizes = [1, 128], strides = [1, 1]} : vector<10x128xf32> to vector<1x128xf32>
    %641 = vector.broadcast %640 : vector<1x128xf32> to vector<32x128xf32>
    %642 = arith.addf %639, %641 : vector<32x128xf32>
    %c0_143 = arith.constant 0 : index
    %c0_144 = arith.constant 0 : index
    %643 = vector.load %arg13[%c0_143, %c0_144] : memref<2x256xf32, #tpu.memory_space<vmem>>, vector<2x256xf32>
    %644 = tpu.concatenate %575, %642 in 1 : vector<32x128xf32>, vector<32x128xf32> -> vector<32x256xf32>
    %645 = arith.truncf %644 : vector<32x256xf32> to vector<32x256xbf16>
    %c0_145 = arith.constant 0 : index
    %c0_146 = arith.constant 0 : index
    %646 = vector.load %arg8[%c0_145, %c0_146] : memref<256x256xbf16, #tpu.memory_space<vmem>>, vector<256x256xbf16>
    %cst_147 = arith.constant dense<0.000000e+00> : vector<32x256xf32>
    %647 = tpu.matmul %645, %646, %cst_147 {dimension_numbers = #tpu.dot_dimension_numbers<[1], [0], [0], [1], [0, 0, 1, 1], [], []>} : vector<32x256xbf16>, vector<256x256xbf16>, vector<32x256xf32> -> vector<32x256xf32>
    %648 = vector.extract_strided_slice %643 {offsets = [0, 0], sizes = [1, 256], strides = [1, 1]} : vector<2x256xf32> to vector<1x256xf32>
    %649 = vector.broadcast %648 : vector<1x256xf32> to vector<32x256xf32>
    %650 = arith.addf %647, %649 : vector<32x256xf32>
    %cst_148 = arith.constant 0.000000e+00 : f32
    %651 = vector.broadcast %cst_148 : f32 to vector<32x256xf32>
    %652 = arith.maximumf %650, %651 : vector<32x256xf32>
    %653 = arith.truncf %652 : vector<32x256xf32> to vector<32x256xbf16>
    %c0_149 = arith.constant 0 : index
    %c0_150 = arith.constant 0 : index
    %654 = vector.load %arg9[%c0_149, %c0_150] : memref<256x256xbf16, #tpu.memory_space<vmem>>, vector<256x256xbf16>
    %cst_151 = arith.constant dense<0.000000e+00> : vector<32x256xf32>
    %655 = tpu.matmul %653, %654, %cst_151 {dimension_numbers = #tpu.dot_dimension_numbers<[1], [0], [0], [1], [0, 0, 1, 1], [], []>} : vector<32x256xbf16>, vector<256x256xbf16>, vector<32x256xf32> -> vector<32x256xf32>
    %656 = vector.extract_strided_slice %643 {offsets = [1, 0], sizes = [1, 256], strides = [1, 1]} : vector<2x256xf32> to vector<1x256xf32>
    %657 = vector.broadcast %656 : vector<1x256xf32> to vector<32x256xf32>
    %658 = arith.addf %655, %657 : vector<32x256xf32>
    %659 = arith.addf %658, %644 : vector<32x256xf32>
    %660 = arith.truncf %659 : vector<32x256xf32> to vector<32x256xbf16>
    %c0_152 = arith.constant 0 : index
    %c0_153 = arith.constant 0 : index
    %661 = vector.load %arg8[%c0_152, %c0_153] : memref<256x256xbf16, #tpu.memory_space<vmem>>, vector<256x256xbf16>
    %cst_154 = arith.constant dense<0.000000e+00> : vector<32x256xf32>
    %662 = tpu.matmul %660, %661, %cst_154 {dimension_numbers = #tpu.dot_dimension_numbers<[1], [0], [0], [1], [0, 0, 1, 1], [], []>} : vector<32x256xbf16>, vector<256x256xbf16>, vector<32x256xf32> -> vector<32x256xf32>
    %663 = vector.extract_strided_slice %643 {offsets = [0, 0], sizes = [1, 256], strides = [1, 1]} : vector<2x256xf32> to vector<1x256xf32>
    %664 = vector.broadcast %663 : vector<1x256xf32> to vector<32x256xf32>
    %665 = arith.addf %662, %664 : vector<32x256xf32>
    %cst_155 = arith.constant 0.000000e+00 : f32
    %666 = vector.broadcast %cst_155 : f32 to vector<32x256xf32>
    %667 = arith.maximumf %665, %666 : vector<32x256xf32>
    %668 = arith.truncf %667 : vector<32x256xf32> to vector<32x256xbf16>
    %c0_156 = arith.constant 0 : index
    %c0_157 = arith.constant 0 : index
    %669 = vector.load %arg9[%c0_156, %c0_157] : memref<256x256xbf16, #tpu.memory_space<vmem>>, vector<256x256xbf16>
    %cst_158 = arith.constant dense<0.000000e+00> : vector<32x256xf32>
    %670 = tpu.matmul %668, %669, %cst_158 {dimension_numbers = #tpu.dot_dimension_numbers<[1], [0], [0], [1], [0, 0, 1, 1], [], []>} : vector<32x256xbf16>, vector<256x256xbf16>, vector<32x256xf32> -> vector<32x256xf32>
    %671 = vector.extract_strided_slice %643 {offsets = [1, 0], sizes = [1, 256], strides = [1, 1]} : vector<2x256xf32> to vector<1x256xf32>
    %672 = vector.broadcast %671 : vector<1x256xf32> to vector<32x256xf32>
    %673 = arith.addf %670, %672 : vector<32x256xf32>
    %674 = arith.addf %673, %659 : vector<32x256xf32>
    %675 = arith.addf %674, %644 : vector<32x256xf32>
    %676 = vector.extract_strided_slice %675 {offsets = [0, 0], sizes = [32, 128], strides = [1, 1]} : vector<32x256xf32> to vector<32x128xf32>
    %c0_159 = arith.constant 0 : index
    %c0_160 = arith.constant 0 : index
    %677 = vector.load %arg14[%c0_159, %c0_160] : memref<32x128xf32, #tpu.memory_space<vmem>>, vector<32x128xf32>
    tpu.vector_store %arg14[%c0_159, %c0_160], %676 {strides = array<i32>} : memref<32x128xf32, #tpu.memory_space<vmem>>, vector<32x128xf32>,
    %678 = vector.extract_strided_slice %675 {offsets = [0, 128], sizes = [32, 128], strides = [1, 1]} : vector<32x256xf32> to vector<32x128xf32>
    %c0_161 = arith.constant 0 : index
    %c0_162 = arith.constant 0 : index
    %679 = vector.load %arg15[%c0_161, %c0_162] : memref<32x128xf32, #tpu.memory_space<vmem>>, vector<32x128xf32>
    tpu.vector_store %arg15[%c0_161, %c0_162], %678 {strides = array<i32>} : memref<32x128xf32, #tpu.memory_space<vmem>>, vector<32x128xf32>,
    return
  }
  func.func @transform_0(%arg0: i32) -> (i32, i32) {
    %c0_i32 = arith.constant 0 : i32
    %c0_i32_0 = arith.constant 0 : i32
    %c0_i32_1 = arith.constant 0 : i32
    return %c0_i32, %c0_i32_0 : i32, i32
  }
  func.func @transform_1(%arg0: i32) -> (i32, i32) {
    %c0_i32 = arith.constant 0 : i32
    %c0_i32_0 = arith.constant 0 : i32
    %c0_i32_1 = arith.constant 0 : i32
    return %c0_i32, %c0_i32_0 : i32, i32
  }
  func.func @transform_2(%arg0: i32) -> (i32, i32) {
    %c0_i32 = arith.constant 0 : i32
    %c0_i32_0 = arith.constant 0 : i32
    %c0_i32_1 = arith.constant 0 : i32
    return %c0_i32, %c0_i32_0 : i32, i32
  }
  func.func @transform_3(%arg0: i32) -> (i32, i32) {
    %c0_i32 = arith.constant 0 : i32
    %c0_i32_0 = arith.constant 0 : i32
    %c0_i32_1 = arith.constant 0 : i32
    return %c0_i32, %c0_i32_0 : i32, i32
  }
  func.func @transform_4(%arg0: i32) -> (i32, i32) {
    %c0_i32 = arith.constant 0 : i32
    %c0_i32_0 = arith.constant 0 : i32
    %c0_i32_1 = arith.constant 0 : i32
    return %c0_i32, %c0_i32_0 : i32, i32
  }
  func.func @transform_5(%arg0: i32) -> (i32, i32) {
    %c0_i32 = arith.constant 0 : i32
    %c0_i32_0 = arith.constant 0 : i32
    %c0_i32_1 = arith.constant 0 : i32
    return %c0_i32, %c0_i32_0 : i32, i32
  }
  func.func @transform_6(%arg0: i32) -> (i32, i32) {
    %c0_i32 = arith.constant 0 : i32
    %c0_i32_0 = arith.constant 0 : i32
    %c0_i32_1 = arith.constant 0 : i32
    return %c0_i32, %c0_i32_0 : i32, i32
  }
  func.func @transform_7(%arg0: i32) -> (i32, i32) {
    %c0_i32 = arith.constant 0 : i32
    %c0_i32_0 = arith.constant 0 : i32
    %c0_i32_1 = arith.constant 0 : i32
    return %c0_i32, %c0_i32_0 : i32, i32
  }
  func.func @transform_8(%arg0: i32) -> (i32, i32) {
    %c0_i32 = arith.constant 0 : i32
    %c0_i32_0 = arith.constant 0 : i32
    %c0_i32_1 = arith.constant 0 : i32
    return %c0_i32, %c0_i32_0 : i32, i32
  }
  func.func @transform_9(%arg0: i32) -> (i32, i32) {
    %c0_i32 = arith.constant 0 : i32
    %c0_i32_0 = arith.constant 0 : i32
    %c0_i32_1 = arith.constant 0 : i32
    return %c0_i32, %c0_i32_0 : i32, i32
  }
  func.func @transform_10(%arg0: i32) -> (i32, i32) {
    %c0_i32 = arith.constant 0 : i32
    %c0_i32_0 = arith.constant 0 : i32
    %c0_i32_1 = arith.constant 0 : i32
    return %c0_i32, %c0_i32_0 : i32, i32
  }
  func.func @transform_11(%arg0: i32) -> (i32, i32) {
    %c0_i32 = arith.constant 0 : i32
    %c0_i32_0 = arith.constant 0 : i32
    %c0_i32_1 = arith.constant 0 : i32
    return %c0_i32, %c0_i32_0 : i32, i32
  }
  func.func @transform_12(%arg0: i32) -> (i32, i32) {
    %c0_i32 = arith.constant 0 : i32
    %c0_i32_0 = arith.constant 0 : i32
    %c0_i32_1 = arith.constant 0 : i32
    return %c0_i32, %c0_i32_0 : i32, i32
  }
  func.func @transform_13(%arg0: i32) -> (i32, i32) {
    %c0_i32 = arith.constant 0 : i32
    %c0_i32_0 = arith.constant 0 : i32
    %c0_i32_1 = arith.constant 0 : i32
    return %c0_i32, %c0_i32_0 : i32, i32
  }
  func.func @transform_14(%arg0: i32) -> (i32, i32) {
    %c0_i32 = arith.constant 0 : i32
    %c0_i32_0 = arith.constant 0 : i32
    %c0_i32_1 = arith.constant 0 : i32
    return %c0_i32, %c0_i32_0 : i32, i32
  }
}

</mosaic_0001>

<llo_original>
// kernel: ctf_forward.1
$region0: #{ctf_forward.1}
  #allocation0 [shape = 'u32[]', space=smem, size = 0x4, offset = 0x4, fixed_abs, tag = 'smem constant byte address 0x4 - core index']
  #allocation1 [shape = 'u32[144,128]{1,0:T(1,128)}', space=vmem, size = 0x12000, scoped, tag = 'internal scratch']
  %s0 = inlined_call_operand.vmem [shape: f32[32,128], index: 0, kind: input, shape index: {}]
  %s1 = inlined_call_operand.vmem [shape: f32[32,128], index: 1, kind: input, shape index: {}]
  %s2 = inlined_call_operand.vmem [shape: bf16[384,128], index: 2, kind: input, shape index: {}]
  %s3 = inlined_call_operand.vmem [shape: bf16[128,128], index: 3, kind: input, shape index: {}]
  %s4 = inlined_call_operand.vmem [shape: bf16[128,128], index: 4, kind: input, shape index: {}]
  %s5 = inlined_call_operand.vmem [shape: bf16[128,384], index: 5, kind: input, shape index: {}]
  %s6 = inlined_call_operand.vmem [shape: bf16[128,128], index: 6, kind: input, shape index: {}]
  %s7 = inlined_call_operand.vmem [shape: bf16[256,256], index: 7, kind: input, shape index: {}]
  %s8 = inlined_call_operand.vmem [shape: bf16[256,256], index: 8, kind: input, shape index: {}]
  %s9 = inlined_call_operand.vmem [shape: f32[25,128], index: 9, kind: input, shape index: {}]
  %s10 = inlined_call_operand.vmem [shape: f32[49,128], index: 10, kind: input, shape index: {}]
  %s11 = inlined_call_operand.vmem [shape: f32[10,128], index: 11, kind: input, shape index: {}]
  %s12 = inlined_call_operand.vmem [shape: f32[2,256], index: 12, kind: input, shape index: {}]
  %s13 = inlined_call_operand.vmem [shape: f32[32,128], index: 13, kind: output, shape index: {0}]
  %s14 = inlined_call_operand.vmem [shape: f32[32,128], index: 14, kind: output, shape index: {1}]
  %15 = xla_tuple %s13, %s14
  %s16 = sld [smem:[#allocation0]]
  $region70: #{ctf_forward.1} parent=0
    _
  %s18 = ssub.s32 1, %s16
  %s19 = scalar_select 0, %s18, %s16
  // Predicated region
  $region2: #{ctf_forward.1} parent=0 // pred_check
    _
  $region3: #{ctf_forward.1} parent=0 // pred_check_branch
    %21 = sbr.rel (0) target = $region5
  $region4: #{ctf_forward.1} parent=0 // pred_region
    _
  $region5: #{ctf_forward.1} parent=0 // pred_fallthru
    _
  // Predicated region
  $region6: #{ctf_forward.1} parent=0 // pred_check
    _
  $region7: #{ctf_forward.1} parent=0 // pred_check_branch
    %23 = sbr.rel (0) target = $region9
  $region8: #{ctf_forward.1} parent=0 // pred_region
    _
  $region9: #{ctf_forward.1} parent=0 // pred_fallthru
    _
  // Predicated region
  $region10: #{ctf_forward.1} parent=0 // pred_check
    _
  $region11: #{ctf_forward.1} parent=0 // pred_check_branch
    %25 = sbr.rel (0) target = $region13
  $region12: #{ctf_forward.1} parent=0 // pred_region
    _
  $region13: #{ctf_forward.1} parent=0 // pred_fallthru
    _
  // Predicated region
  $region14: #{ctf_forward.1} parent=0 // pred_check
    _
  $region15: #{ctf_forward.1} parent=0 // pred_check_branch
    %27 = sbr.rel (0) target = $region17
  $region16: #{ctf_forward.1} parent=0 // pred_region
    _
  $region17: #{ctf_forward.1} parent=0 // pred_fallthru
    _
  // Predicated region
  $region18: #{ctf_forward.1} parent=0 // pred_check
    _
  $region19: #{ctf_forward.1} parent=0 // pred_check_branch
    %29 = sbr.rel (0) target = $region21
  $region20: #{ctf_forward.1} parent=0 // pred_region
    _
  $region21: #{ctf_forward.1} parent=0 // pred_fallthru
    _
  // Predicated region
  $region22: #{ctf_forward.1} parent=0 // pred_check
    _
  $region23: #{ctf_forward.1} parent=0 // pred_check_branch
    %31 = sbr.rel (0) target = $region25
  $region24: #{ctf_forward.1} parent=0 // pred_region
    _
  $region25: #{ctf_forward.1} parent=0 // pred_fallthru
    _
  // Predicated region
  $region26: #{ctf_forward.1} parent=0 // pred_check
    _
  $region27: #{ctf_forward.1} parent=0 // pred_check_branch
    %33 = sbr.rel (0) target = $region29
  $region28: #{ctf_forward.1} parent=0 // pred_region
    _
  $region29: #{ctf_forward.1} parent=0 // pred_fallthru
    _
  // Predicated region
  $region30: #{ctf_forward.1} parent=0 // pred_check
    _
  $region31: #{ctf_forward.1} parent=0 // pred_check_branch
    %35 = sbr.rel (0) target = $region33
  $region32: #{ctf_forward.1} parent=0 // pred_region
    _
  $region33: #{ctf_forward.1} parent=0 // pred_fallthru
    _
  // Predicated region
  $region34: #{ctf_forward.1} parent=0 // pred_check
    _
  $region35: #{ctf_forward.1} parent=0 // pred_check_branch
    %37 = sbr.rel (0) target = $region37
  $region36: #{ctf_forward.1} parent=0 // pred_region
    _
  $region37: #{ctf_forward.1} parent=0 // pred_fallthru
    _
  // Predicated region
  $region38: #{ctf_forward.1} parent=0 // pred_check
    _
  $region39: #{ctf_forward.1} parent=0 // pred_check_branch
    %39 = sbr.rel (0) target = $region41
  $region40: #{ctf_forward.1} parent=0 // pred_region
    _
  $region41: #{ctf_forward.1} parent=0 // pred_fallthru
    _
  // Predicated region
  $region42: #{ctf_forward.1} parent=0 // pred_check
    _
  $region43: #{ctf_forward.1} parent=0 // pred_check_branch
    %41 = sbr.rel (0) target = $region45
  $region44: #{ctf_forward.1} parent=0 // pred_region
    _
  $region45: #{ctf_forward.1} parent=0 // pred_fallthru
    _
  // Predicated region
  $region46: #{ctf_forward.1} parent=0 // pred_check
    _
  $region47: #{ctf_forward.1} parent=0 // pred_check_branch
    %43 = sbr.rel (0) target = $region49
  $region48: #{ctf_forward.1} parent=0 // pred_region
    _
  $region49: #{ctf_forward.1} parent=0 // pred_fallthru
    _
  // Predicated region
  $region50: #{ctf_forward.1} parent=0 // pred_check
    _
  $region51: #{ctf_forward.1} parent=0 // pred_check_branch
    %45 = sbr.rel (0) target = $region53
  $region52: #{ctf_forward.1} parent=0 // pred_region
    _
  $region53: #{ctf_forward.1} parent=0 // pred_fallthru
    _
  %v47 = vld [vmem:[%s11] sm:$0xff]
  %v48 = vld [vmem:[%s11 + $0x8] sm:$0x3]
  %v49 = vlaneseq
  %v50 = vshrl.u32 %v49, 7
  %v51 = vadd.s32 %v50, 8
  %v52 = vadd.s32 %v50, 16
  %v53 = vadd.s32 %v50, 24
  %v54 = vlaneseq
  %v55 = vand.u32 %v54, 127
  %vm56 = vcmp.ge.s32.totalorder %v50, 16
  %vm57 = vcmp.ge.s32.totalorder %v51, 16
  %vm58 = vcmp.ge.s32.totalorder %v52, 16
  %vm59 = vcmp.ge.s32.totalorder %v53, 16
  %v60 = vsub.s32 %v50, 16
  %v61 = vsub.s32 %v51, 16
  %v62 = vsub.s32 %v53, 16
  %v63 = vsel %vm56, %v60, %v50
  %v64 = vsel %vm57, %v61, %v51
  %v65 = vsel %vm58, %v50, %v52
  %v66 = vsel %vm59, %v62, %v53
  %v67 = vld [vmem:[%s0] sm:$0xff]
  %v68 = vld [vmem:[%s0 + $0x8] sm:$0xff]
  %v69 = vld [vmem:[%s0 + $0x10] sm:$0xff]
  %v70 = vld [vmem:[%s0 + $0x18] sm:$0xff]
  %v71 = vld [vmem:[%s1] sm:$0xff]
  %v72 = vld [vmem:[%s1 + $0x8] sm:$0xff]
  %v73 = vld [vmem:[%s1 + $0x10] sm:$0xff]
  %v74 = vld [vmem:[%s1 + $0x18] sm:$0xff]
  %vm75 = vcmp.ge.s32.totalorder %v55, 120
  %76 = vrot.lane.b32.xlu0 %v67, 120
  %v77 = vpop.permute.xlu0 %76
  %78 = vrot.lane.b32.xlu0 %v68, 120
  %v79 = vpop.permute.xlu0 %78
  %80 = vrot.lane.b32.xlu0 %v69, 120
  %v81 = vpop.permute.xlu0 %80
  %82 = vrot.lane.b32.xlu0 %v70, 120
  %v83 = vpop.permute.xlu0 %82
  %v84 = vsel %vm75, %v67, %v77
  %v85 = vsel %vm75, %v68, %v79
  %v86 = vsel %vm75, %v69, %v81
  %v87 = vsel %vm75, %v70, %v83
  %vm88 = vcmp.eq.s32.totalorder %v63, 15
  %vm89 = vcmp.eq.s32.totalorder %v64, 15
  %vm90 = vcmp.eq.s32.totalorder %v65, 15
  %vm91 = vcmp.eq.s32.totalorder %v66, 15
  %v92 = vrot.slane %v67, 1
  %v93 = vrot.slane %v68, 1
  %v94 = vrot.slane %v69, 1
  %v95 = vrot.slane %v70, 1
  %vm96 = vcmp.lt.s32.totalorder %v50, 7
  %v97 = vsel %vm96, %v94, %v95
  %v98 = vsel %vm96, %v93, %v94
  %v99 = vsel %vm96, %v92, %v93
  %v100 = vsel %vm96, %v95, %v92
  %v101 = vsel %vm88, %v67, %v99
  %v102 = vsel %vm89, %v68, %v98
  %v103 = vsel %vm90, %v69, %v97
  %v104 = vsel %vm91, %v70, %v100
  %v105 = vpack.c.bf16 %v68, %v67
  %v106 = vpack.c.bf16 %v85, %v84
  %v107 = vpack.c.bf16 %v102, %v101
  %v108 = vpack.c.bf16 %v70, %v69
  %v109 = vpack.c.bf16 %v87, %v86
  %v110 = vpack.c.bf16 %v104, %v103
  %v111 = vld [vmem:[%s2] sm:$0xf]
  %v112 = vld [vmem:[%s2 + $0x4] sm:$0xf]
  %v113 = vld [vmem:[%s2 + $0x8] sm:$0xf]
  %v114 = vld [vmem:[%s2 + $0xc] sm:$0xf]
  %v115 = vld [vmem:[%s2 + $0x10] sm:$0xf]
  %v116 = vld [vmem:[%s2 + $0x14] sm:$0xf]
  %v117 = vld [vmem:[%s2 + $0x18] sm:$0xf]
  %v118 = vld [vmem:[%s2 + $0x1c] sm:$0xf]
  %v119 = vld [vmem:[%s2 + $0x20] sm:$0xf]
  %v120 = vld [vmem:[%s2 + $0x24] sm:$0xf]
  %v121 = vld [vmem:[%s2 + $0x28] sm:$0xf]
  %v122 = vld [vmem:[%s2 + $0x2c] sm:$0xf]
  %v123 = vld [vmem:[%s2 + $0x30] sm:$0xf]
  %v124 = vld [vmem:[%s2 + $0x34] sm:$0xf]
  %v125 = vld [vmem:[%s2 + $0x38] sm:$0xf]
  %v126 = vld [vmem:[%s2 + $0x3c] sm:$0xf]
  %v127 = vld [vmem:[%s2 + $0x40] sm:$0xf]
  %v128 = vld [vmem:[%s2 + $0x44] sm:$0xf]
  %v129 = vld [vmem:[%s2 + $0x48] sm:$0xf]
  %v130 = vld [vmem:[%s2 + $0x4c] sm:$0xf]
  %v131 = vld [vmem:[%s2 + $0x50] sm:$0xf]
  %v132 = vld [vmem:[%s2 + $0x54] sm:$0xf]
  %v133 = vld [vmem:[%s2 + $0x58] sm:$0xf]
  %v134 = vld [vmem:[%s2 + $0x5c] sm:$0xf]
  %v135 = vld [vmem:[%s2 + $0x60] sm:$0xf]
  %v136 = vld [vmem:[%s2 + $0x64] sm:$0xf]
  %v137 = vld [vmem:[%s2 + $0x68] sm:$0xf]
  %v138 = vld [vmem:[%s2 + $0x6c] sm:$0xf]
  %v139 = vld [vmem:[%s2 + $0x70] sm:$0xf]
  %v140 = vld [vmem:[%s2 + $0x74] sm:$0xf]
  %v141 = vld [vmem:[%s2 + $0x78] sm:$0xf]
  %v142 = vld [vmem:[%s2 + $0x7c] sm:$0xf]
  %v143 = vld [vmem:[%s2 + $0x80] sm:$0xf]
  %v144 = vld [vmem:[%s2 + $0x84] sm:$0xf]
  %v145 = vld [vmem:[%s2 + $0x88] sm:$0xf]
  %v146 = vld [vmem:[%s2 + $0x8c] sm:$0xf]
  %v147 = vld [vmem:[%s2 + $0x90] sm:$0xf]
  %v148 = vld [vmem:[%s2 + $0x94] sm:$0xf]
  %v149 = vld [vmem:[%s2 + $0x98] sm:$0xf]
  %v150 = vld [vmem:[%s2 + $0x9c] sm:$0xf]
  %v151 = vld [vmem:[%s2 + $0xa0] sm:$0xf]
  %v152 = vld [vmem:[%s2 + $0xa4] sm:$0xf]
  %v153 = vld [vmem:[%s2 + $0xa8] sm:$0xf]
  %v154 = vld [vmem:[%s2 + $0xac] sm:$0xf]
  %v155 = vld [vmem:[%s2 + $0xb0] sm:$0xf]
  %v156 = vld [vmem:[%s2 + $0xb4] sm:$0xf]
  %v157 = vld [vmem:[%s2 + $0xb8] sm:$0xf]
  %v158 = vld [vmem:[%s2 + $0xbc] sm:$0xf]
  %v207 = vunpack.c.l.b16 %v111
  %v208 = vunpack.c.l.b16 %v112
  %v209 = vunpack.c.l.b16 %v113
  %v210 = vunpack.c.l.b16 %v114
  %v211 = vunpack.c.l.b16 %v115
  %v212 = vunpack.c.l.b16 %v116
  %v213 = vunpack.c.l.b16 %v117
  %v214 = vunpack.c.l.b16 %v118
  %v215 = vunpack.c.l.b16 %v119
  %v216 = vunpack.c.l.b16 %v120
  %v217 = vunpack.c.l.b16 %v121
  %v218 = vunpack.c.l.b16 %v122
  %v219 = vunpack.c.l.b16 %v123
  %v220 = vunpack.c.l.b16 %v124
  %v221 = vunpack.c.l.b16 %v125
  %v222 = vunpack.c.l.b16 %v126
  %v223 = vunpack.c.l.b16 %v127
  %v224 = vunpack.c.l.b16 %v128
  %v225 = vunpack.c.l.b16 %v129
  %v226 = vunpack.c.l.b16 %v130
  %v227 = vunpack.c.l.b16 %v131
  %v228 = vunpack.c.l.b16 %v132
  %v229 = vunpack.c.l.b16 %v133
  %v230 = vunpack.c.l.b16 %v134
  %v231 = vunpack.c.l.b16 %v135
  %v232 = vunpack.c.l.b16 %v136
  %v233 = vunpack.c.l.b16 %v137
  %v234 = vunpack.c.l.b16 %v138
  %v235 = vunpack.c.l.b16 %v139
  %v236 = vunpack.c.l.b16 %v140
  %v237 = vunpack.c.l.b16 %v141
  %v238 = vunpack.c.l.b16 %v142
  %v239 = vunpack.c.l.b16 %v143
  %v240 = vunpack.c.l.b16 %v144
  %v241 = vunpack.c.l.b16 %v145
  %v242 = vunpack.c.l.b16 %v146
  %v243 = vunpack.c.l.b16 %v147
  %v244 = vunpack.c.l.b16 %v148
  %v245 = vunpack.c.l.b16 %v149
  %v246 = vunpack.c.l.b16 %v150
  %v247 = vunpack.c.l.b16 %v151
  %v248 = vunpack.c.l.b16 %v152
  %v249 = vunpack.c.l.b16 %v153
  %v250 = vunpack.c.l.b16 %v154
  %v251 = vunpack.c.l.b16 %v155
  %v252 = vunpack.c.l.b16 %v156
  %v253 = vunpack.c.l.b16 %v157
  %v254 = vunpack.c.l.b16 %v158
  %v255 = vpack.c.b16 %v208, %v207
  %v256 = vpack.c.b16 %v210, %v209
  %v257 = vpack.c.b16 %v212, %v211
  %v258 = vpack.c.b16 %v214, %v213
  %v259 = vpack.c.b16 %v216, %v215
  %v260 = vpack.c.b16 %v218, %v217
  %v261 = vpack.c.b16 %v220, %v219
  %v262 = vpack.c.b16 %v222, %v221
  %v263 = vpack.c.b16 %v224, %v223
  %v264 = vpack.c.b16 %v226, %v225
  %v265 = vpack.c.b16 %v228, %v227
  %v266 = vpack.c.b16 %v230, %v229
  %v267 = vpack.c.b16 %v232, %v231
  %v268 = vpack.c.b16 %v234, %v233
  %v269 = vpack.c.b16 %v236, %v235
  %v270 = vpack.c.b16 %v238, %v237
  %v271 = vpack.c.b16 %v240, %v239
  %v272 = vpack.c.b16 %v242, %v241
  %v273 = vpack.c.b16 %v244, %v243
  %v274 = vpack.c.b16 %v246, %v245
  %v275 = vpack.c.b16 %v248, %v247
  %v276 = vpack.c.b16 %v250, %v249
  %v277 = vpack.c.b16 %v252, %v251
  %v278 = vpack.c.b16 %v254, %v253
  %303 = vmatprep.subr.bf16.mxu0 0
  %304 = vmatpush1.bf16.msra.mxu0 %v255
  %305 = vmatprep.subr.bf16.mxu0 0
  %306 = vmatpush1.bf16.msra.mxu0 %v256
  %307 = vmatprep.subr.bf16.mxu0 0
  %308 = vmatpush1.bf16.msra.mxu0 %v257
  %309 = vmatprep.subr.bf16.mxu0 0
  %310 = vmatpush1.bf16.msra.mxu0 %v258
  %311 = vmatprep.subr.bf16.mxu0 0
  %312 = vmatpush1.bf16.msra.mxu0 %v259
  %313 = vmatprep.subr.bf16.mxu0 0
  %314 = vmatpush1.bf16.msra.mxu0 %v260
  %315 = vmatprep.subr.bf16.mxu0 0
  %316 = vmatpush1.bf16.msra.mxu0 %v261
  %317 = vmatprep.subr.bf16.mxu0 0
  %318 = vmatpush1.bf16.msra.mxu0 %v262
  %319 = vmatprep.subr.bf16.mxu0 0
  %320 = vmatpush1.bf16.msra.mxu0 %v263
  %321 = vmatprep.subr.bf16.mxu0 0
  %322 = vmatpush1.bf16.msra.mxu0 %v264
  %323 = vmatprep.subr.bf16.mxu0 0
  %324 = vmatpush1.bf16.msra.mxu0 %v265
  %325 = vmatprep.subr.bf16.mxu0 0
  %326 = vmatpush1.bf16.msra.mxu0 %v266
  %327 = vmatprep.subr.bf16.mxu0 0
  %328 = vmatpush1.bf16.msra.mxu0 %v267
  %329 = vmatprep.subr.bf16.mxu0 0
  %330 = vmatpush1.bf16.msra.mxu0 %v268
  %331 = vmatprep.subr.bf16.mxu0 0
  %332 = vmatpush1.bf16.msra.mxu0 %v269
  %333 = vmatprep.subr.bf16.mxu0 0
  %334 = vmatpush1.bf16.msra.mxu0 %v270
  %335 = vmatprep.mubr.bf16.mxu0 %v106
  %336 = vmatmul.mubr.bf16.gmra.mrb[0].mxu0 %v105
  %v337 = vpop.f32.mrb[0].mxu0
  %v338 = vadd.f32 0.0, %v337
  %v339 = vpop.f32.mrb[0].mxu0
  %v340 = vpop.f32.mrb[0].mxu0
  %v341 = vadd.f32 0.0, %v340
  %v342 = vpop.f32.mrb[0].mxu0
  %343 = vmatprep.mubr.bf16.mxu0 %v109
  %344 = vmatmul.mubr.bf16.gmra.mrb[0].mxu0 %v108
  %v345 = vpop.f32.mrb[0].mxu0
  %v346 = vadd.f32 0.0, %v345
  %v347 = vpop.f32.mrb[0].mxu0
  %v348 = vpop.f32.mrb[0].mxu0
  %v349 = vadd.f32 0.0, %v348
  %v350 = vpop.f32.mrb[0].mxu0
  %351 = vdwg.mxu0
  %352 = vmatprep.subr.bf16.mxu0 0
  %353 = vmatpush1.bf16.msra.mxu0 %v271
  %354 = vmatprep.subr.bf16.mxu0 0
  %355 = vmatpush1.bf16.msra.mxu0 %v272
  %356 = vmatprep.subr.bf16.mxu0 0
  %357 = vmatpush1.bf16.msra.mxu0 %v273
  %358 = vmatprep.subr.bf16.mxu0 0
  %359 = vmatpush1.bf16.msra.mxu0 %v274
  %360 = vmatprep.subr.bf16.mxu0 0
  %361 = vmatpush1.bf16.msra.mxu0 %v275
  %362 = vmatprep.subr.bf16.mxu0 0
  %363 = vmatpush1.bf16.msra.mxu0 %v276
  %364 = vmatprep.subr.bf16.mxu0 0
  %365 = vmatpush1.bf16.msra.mxu0 %v277
  %366 = vmatprep.subr.bf16.mxu0 0
  %367 = vmatpush1.bf16.msra.mxu0 %v278
  %368 = vmatprep.subr.bf16.mxu0 0
  %369 = vmatpush1.bf16.msra.mxu0 0
  %370 = vmatprep.subr.bf16.mxu0 0
  %371 = vmatpush1.bf16.msra.mxu0 0
  %372 = vmatprep.subr.bf16.mxu0 0
  %373 = vmatpush1.bf16.msra.mxu0 0
  %374 = vmatprep.subr.bf16.mxu0 0
  %375 = vmatpush1.bf16.msra.mxu0 0
  %376 = vmatprep.subr.bf16.mxu0 0
  %377 = vmatpush1.bf16.msra.mxu0 0
  %378 = vmatprep.subr.bf16.mxu0 0
  %379 = vmatpush1.bf16.msra.mxu0 0
  %380 = vmatprep.subr.bf16.mxu0 0
  %381 = vmatpush1.bf16.msra.mxu0 0
  %382 = vmatprep.subr.bf16.mxu0 0
  %383 = vmatpush1.bf16.msra.mxu0 0
  %384 = vmatprep.mubr.bf16.mxu0 0
  %385 = vmatmul.mubr.bf16.gmra.mrb[0].mxu0 %v107
  %v386 = vpop.f32.mrb[0].mxu0
  %v387 = vadd.f32 %v338, %v386
  %v388 = vpop.f32.mrb[0].mxu0
  %v389 = vpop.f32.mrb[0].mxu0
  %v390 = vadd.f32 %v341, %v389
  %v391 = vpop.f32.mrb[0].mxu0
  %392 = vmatprep.mubr.bf16.mxu0 0
  %393 = vmatmul.mubr.bf16.gmra.mrb[0].mxu0 %v110
  %v394 = vpop.f32.mrb[0].mxu0
  %v395 = vadd.f32 %v346, %v394
  %v396 = vpop.f32.mrb[0].mxu0
  %v397 = vpop.f32.mrb[0].mxu0
  %v398 = vadd.f32 %v349, %v397
  %v399 = vpop.f32.mrb[0].mxu0
  %400 = vdwg.mxu0
  %401 = vrot.lane.b32.xlu0 %v387, 8
  %v402 = vpop.permute.xlu0 %401
  %403 = vrot.lane.b32.xlu0 %v390, 8
  %v404 = vpop.permute.xlu0 %403
  %405 = vrot.lane.b32.xlu0 %v395, 8
  %v406 = vpop.permute.xlu0 %405
  %407 = vrot.lane.b32.xlu0 %v398, 8
  %v408 = vpop.permute.xlu0 %407
  %v409 = vadd.f32 %v387, %v402
  %v410 = vadd.f32 %v390, %v404
  %v411 = vadd.f32 %v395, %v406
  %v412 = vadd.f32 %v398, %v408
  %413 = vrot.lane.b32.xlu0 %v409, 16
  %v414 = vpop.permute.xlu0 %413
  %415 = vrot.lane.b32.xlu0 %v410, 16
  %v416 = vpop.permute.xlu0 %415
  %417 = vrot.lane.b32.xlu0 %v411, 16
  %v418 = vpop.permute.xlu0 %417
  %419 = vrot.lane.b32.xlu0 %v412, 16
  %v420 = vpop.permute.xlu0 %419
  %v421 = vadd.f32 %v409, %v414
  %v422 = vadd.f32 %v410, %v416
  %v423 = vadd.f32 %v411, %v418
  %v424 = vadd.f32 %v412, %v420
  %425 = vrot.lane.b32.xlu0 %v421, 32
  %v426 = vpop.permute.xlu0 %425
  %427 = vrot.lane.b32.xlu0 %v422, 32
  %v428 = vpop.permute.xlu0 %427
  %429 = vrot.lane.b32.xlu0 %v423, 32
  %v430 = vpop.permute.xlu0 %429
  %431 = vrot.lane.b32.xlu0 %v424, 32
  %v432 = vpop.permute.xlu0 %431
  %v433 = vadd.f32 %v421, %v426
  %v434 = vadd.f32 %v422, %v428
  %v435 = vadd.f32 %v423, %v430
  %v436 = vadd.f32 %v424, %v432
  %437 = vrot.lane.b32.xlu0 %v433, 64
  %v438 = vpop.permute.xlu0 %437
  %439 = vrot.lane.b32.xlu0 %v434, 64
  %v440 = vpop.permute.xlu0 %439
  %441 = vrot.lane.b32.xlu0 %v435, 64
  %v442 = vpop.permute.xlu0 %441
  %443 = vrot.lane.b32.xlu0 %v436, 64
  %v444 = vpop.permute.xlu0 %443
  %v445 = vadd.f32 %v433, %v438
  %v446 = vadd.f32 %v434, %v440
  %v447 = vadd.f32 %v435, %v442
  %v448 = vadd.f32 %v436, %v444
  %v449 = vadd.f32 %v445, %v446
  %v450 = vadd.f32 %v449, %v447
  %v451 = vadd.f32 %v450, %v448
  %v452 = vrot.slane %v451, 4
  %v453 = vadd.f32 %v451, %v452
  %v454 = vrot.slane %v453, 2
  %v455 = vadd.f32 %v453, %v454
  %v456 = vrot.slane %v455, 1
  %v457 = vadd.f32 %v455, %v456
  %v458 = vmul.f32 %v457, 0.001953125
  %v459 = vsub.f32 %v387, %v458
  %v460 = vsub.f32 %v390, %v458
  %v461 = vsub.f32 %v395, %v458
  %v462 = vsub.f32 %v398, %v458
  %v463 = vmul.f32 %v459, %v459
  %v464 = vmul.f32 %v460, %v460
  %v465 = vmul.f32 %v461, %v461
  %v466 = vmul.f32 %v462, %v462
  %467 = vrot.lane.b32.xlu0 %v463, 8
  %v468 = vpop.permute.xlu0 %467
  %469 = vrot.lane.b32.xlu0 %v464, 8
  %v470 = vpop.permute.xlu0 %469
  %471 = vrot.lane.b32.xlu0 %v465, 8
  %v472 = vpop.permute.xlu0 %471
  %473 = vrot.lane.b32.xlu0 %v466, 8
  %v474 = vpop.permute.xlu0 %473
  %v475 = vadd.f32 %v463, %v468
  %v476 = vadd.f32 %v464, %v470
  %v477 = vadd.f32 %v465, %v472
  %v478 = vadd.f32 %v466, %v474
  %479 = vrot.lane.b32.xlu0 %v475, 16
  %v480 = vpop.permute.xlu0 %479
  %481 = vrot.lane.b32.xlu0 %v476, 16
  %v482 = vpop.permute.xlu0 %481
  %483 = vrot.lane.b32.xlu0 %v477, 16
  %v484 = vpop.permute.xlu0 %483
  %485 = vrot.lane.b32.xlu0 %v478, 16
  %v486 = vpop.permute.xlu0 %485
  %v487 = vadd.f32 %v475, %v480
  %v488 = vadd.f32 %v476, %v482
  %v489 = vadd.f32 %v477, %v484
  %v490 = vadd.f32 %v478, %v486
  %491 = vrot.lane.b32.xlu0 %v487, 32
  %v492 = vpop.permute.xlu0 %491
  %493 = vrot.lane.b32.xlu0 %v488, 32
  %v494 = vpop.permute.xlu0 %493
  %495 = vrot.lane.b32.xlu0 %v489, 32
  %v496 = vpop.permute.xlu0 %495
  %497 = vrot.lane.b32.xlu0 %v490, 32
  %v498 = vpop.permute.xlu0 %497
  %v499 = vadd.f32 %v487, %v492
  %v500 = vadd.f32 %v488, %v494
  %v501 = vadd.f32 %v489, %v496
  %v502 = vadd.f32 %v490, %v498
  %503 = vrot.lane.b32.xlu0 %v499, 64
  %v504 = vpop.permute.xlu0 %503
  %505 = vrot.lane.b32.xlu0 %v500, 64
  %v506 = vpop.permute.xlu0 %505
  %507 = vrot.lane.b32.xlu0 %v501, 64
  %v508 = vpop.permute.xlu0 %507
  %509 = vrot.lane.b32.xlu0 %v502, 64
  %v510 = vpop.permute.xlu0 %509
  %v511 = vadd.f32 %v499, %v504
  %v512 = vadd.f32 %v500, %v506
  %v513 = vadd.f32 %v501, %v508
  %v514 = vadd.f32 %v502, %v510
  %v515 = vadd.f32 %v511, %v512
  %v516 = vadd.f32 %v515, %v513
  %v517 = vadd.f32 %v516, %v514
  %v518 = vrot.slane %v517, 4
  %v519 = vadd.f32 %v517, %v518
  %v520 = vrot.slane %v519, 2
  %v521 = vadd.f32 %v519, %v520
  %v522 = vrot.slane %v521, 1
  %v523 = vadd.f32 %v521, %v522
  %v524 = vmul.f32 %v523, 0.001953125
  %v525 = vadd.f32 %v524, 1e-05
  %v526 = vrsqrt.pop %v525
  %v527 = vmul.f32 %v459, %v526
  %v528 = vmul.f32 %v460, %v526
  %v529 = vmul.f32 %v461, %v526
  %v530 = vmul.f32 %v462, %v526
  %v531 = vlaneseq
  %v532 = vshrl.u32 %v531, 7
  %v533 = vsub.s32 0, %v532
  %v534 = vrot.slane %v47, %v533
  %v535 = vmul.f32 %v527, %v534
  %v536 = vmul.f32 %v528, %v534
  %v537 = vmul.f32 %v529, %v534
  %v538 = vmul.f32 %v530, %v534
  %v539 = vlaneseq
  %v540 = vshrl.u32 %v539, 7
  %v541 = vsub.s32 1, %v540
  %v542 = vrot.slane %v47, %v541
  %v543 = vadd.f32 %v535, %v542
  %v544 = vadd.f32 %v536, %v542
  %v545 = vadd.f32 %v537, %v542
  %v546 = vadd.f32 %v538, %v542
  %v547 = vsub.f32 0.0, %v543
  %v548 = vsub.f32 0.0, %v544
  %v549 = vsub.f32 0.0, %v545
  %v550 = vsub.f32 0.0, %v546
  %v551 = vmul.f32 %v547, 1.442695
  %v552 = vpow.pop %v551
  %v553 = vmul.f32 %v548, 1.442695
  %v554 = vpow.pop %v553
  %v555 = vmul.f32 %v549, 1.442695
  %v556 = vpow.pop %v555
  %v557 = vmul.f32 %v550, 1.442695
  %v558 = vpow.pop %v557
  %v559 = vadd.f32 %v552, 1.0
  %v560 = vadd.f32 %v554, 1.0
  %v561 = vadd.f32 %v556, 1.0
  %v562 = vadd.f32 %v558, 1.0
  %v563 = vrcp.pop %v559
  %v564 = vmul.f32 1.0, %v563
  %v565 = vrcp.pop %v560
  %v566 = vmul.f32 1.0, %v565
  %v567 = vrcp.pop %v561
  %v568 = vmul.f32 1.0, %v567
  %v569 = vrcp.pop %v562
  %v570 = vmul.f32 1.0, %v569
  %v571 = vmul.f32 %v543, %v564
  %v572 = vmul.f32 %v544, %v566
  %v573 = vmul.f32 %v545, %v568
  %v574 = vmul.f32 %v546, %v570
  %v575 = vld [vmem:[%s9] sm:$0xff]
  %v576 = vld [vmem:[%s9 + $0x8] sm:$0xff]
  %v577 = vld [vmem:[%s9 + $0x10] sm:$0xff]
  %v578 = vld [vmem:[%s9 + $0x18] sm:$0x1]
  %v579 = vrot.slane %v571, 6
  %v580 = vrot.slane %v572, 6
  %v581 = vrot.slane %v573, 6
  %v582 = vrot.slane %v574, 6
  %vm583 = vcmp.lt.s32.totalorder %v50, 2
  %v584 = vsel %vm583, %v581, %v582
  %v585 = vsel %vm583, %v580, %v581
  %v586 = vsel %vm583, %v579, %v580
  %v587 = vsel %vm583, %v582, %v579
  %v588 = vadd.s32 %v63, 4294967294
  %v589 = vadd.s32 %v64, 4294967294
  %v590 = vadd.s32 %v65, 4294967294
  %v591 = vadd.s32 %v66, 4294967294
  %vm592 = vcmp.ge.s32.totalorder %v588, 0
  %vm593 = vcmp.ge.s32.totalorder %v589, 0
  %vm594 = vcmp.ge.s32.totalorder %v590, 0
  %vm595 = vcmp.ge.s32.totalorder %v591, 0
  %vm596 = vcmp.lt.s32.totalorder %v588, 16
  %vm597 = vcmp.lt.s32.totalorder %v589, 16
  %vm598 = vcmp.lt.s32.totalorder %v590, 16
  %vm599 = vcmp.lt.s32.totalorder %v591, 16
  %vm600 = vmand %vm592, %vm596
  %vm601 = vmand %vm593, %vm597
  %vm602 = vmand %vm594, %vm598
  %vm603 = vmand %vm595, %vm599
  %v604 = vsel %vm600, 1, 0
  %v605 = vsel %vm601, 1, 0
  %v606 = vsel %vm602, 1, 0
  %v607 = vsel %vm603, 1, 0
  %v608 = vcvt.s32.f32 %v604
  %v609 = vcvt.s32.f32 %v605
  %v610 = vcvt.s32.f32 %v606
  %v611 = vcvt.s32.f32 %v607
  %v612 = vmul.f32 %v587, %v608
  %v613 = vmul.f32 %v586, %v609
  %v614 = vmul.f32 %v585, %v610
  %v615 = vmul.f32 %v584, %v611
  %616 = vrot.lane.b32.xlu0 %v612, 16
  %v617 = vpop.permute.xlu0 %616
  %618 = vrot.lane.b32.xlu0 %v613, 16
  %v619 = vpop.permute.xlu0 %618
  %620 = vrot.lane.b32.xlu0 %v614, 16
  %v621 = vpop.permute.xlu0 %620
  %622 = vrot.lane.b32.xlu0 %v615, 16
  %v623 = vpop.permute.xlu0 %622
  %v624 = vlaneseq
  %v625 = vshrl.u32 %v624, 7
  %v626 = vsub.s32 0, %v625
  %v627 = vrot.slane %v575, %v626
  %v628 = vmul.f32 %v617, %v627
  %v629 = vmul.f32 %v619, %v627
  %v630 = vmul.f32 %v621, %v627
  %v631 = vmul.f32 %v623, %v627
  %632 = vrot.lane.b32.xlu0 %v612, 8
  %v633 = vpop.permute.xlu0 %632
  %634 = vrot.lane.b32.xlu0 %v613, 8
  %v635 = vpop.permute.xlu0 %634
  %636 = vrot.lane.b32.xlu0 %v614, 8
  %v637 = vpop.permute.xlu0 %636
  %638 = vrot.lane.b32.xlu0 %v615, 8
  %v639 = vpop.permute.xlu0 %638
  %v640 = vlaneseq
  %v641 = vshrl.u32 %v640, 7
  %v642 = vsub.s32 1, %v641
  %v643 = vrot.slane %v575, %v642
  %v644 = vmul.f32 %v633, %v643
  %v645 = vmul.f32 %v635, %v643
  %v646 = vmul.f32 %v637, %v643
  %v647 = vmul.f32 %v639, %v643
  %v648 = vadd.f32 %v628, %v644
  %v649 = vadd.f32 %v629, %v645
  %v650 = vadd.f32 %v630, %v646
  %v651 = vadd.f32 %v631, %v647
  %v652 = vlaneseq
  %v653 = vshrl.u32 %v652, 7
  %v654 = vsub.s32 2, %v653
  %v655 = vrot.slane %v575, %v654
  %v656 = vmul.f32 %v612, %v655
  %v657 = vmul.f32 %v613, %v655
  %v658 = vmul.f32 %v614, %v655
  %v659 = vmul.f32 %v615, %v655
  %v660 = vadd.f32 %v648, %v656
  %v661 = vadd.f32 %v649, %v657
  %v662 = vadd.f32 %v650, %v658
  %v663 = vadd.f32 %v651, %v659
  %664 = vrot.lane.b32.xlu0 %v612, 120
  %v665 = vpop.permute.xlu0 %664
  %666 = vrot.lane.b32.xlu0 %v613, 120
  %v667 = vpop.permute.xlu0 %666
  %668 = vrot.lane.b32.xlu0 %v614, 120
  %v669 = vpop.permute.xlu0 %668
  %670 = vrot.lane.b32.xlu0 %v615, 120
  %v671 = vpop.permute.xlu0 %670
  %v672 = vlaneseq
  %v673 = vshrl.u32 %v672, 7
  %v674 = vsub.s32 3, %v673
  %v675 = vrot.slane %v575, %v674
  %v676 = vmul.f32 %v665, %v675
  %v677 = vmul.f32 %v667, %v675
  %v678 = vmul.f32 %v669, %v675
  %v679 = vmul.f32 %v671, %v675
  %v680 = vadd.f32 %v660, %v676
  %v681 = vadd.f32 %v661, %v677
  %v682 = vadd.f32 %v662, %v678
  %v683 = vadd.f32 %v663, %v679
  %684 = vrot.lane.b32.xlu0 %v612, 112
  %v685 = vpop.permute.xlu0 %684
  %686 = vrot.lane.b32.xlu0 %v613, 112
  %v687 = vpop.permute.xlu0 %686
  %688 = vrot.lane.b32.xlu0 %v614, 112
  %v689 = vpop.permute.xlu0 %688
  %690 = vrot.lane.b32.xlu0 %v615, 112
  %v691 = vpop.permute.xlu0 %690
  %v692 = vlaneseq
  %v693 = vshrl.u32 %v692, 7
  %v694 = vsub.s32 4, %v693
  %v695 = vrot.slane %v575, %v694
  %v696 = vmul.f32 %v685, %v695
  %v697 = vmul.f32 %v687, %v695
  %v698 = vmul.f32 %v689, %v695
  %v699 = vmul.f32 %v691, %v695
  %v700 = vadd.f32 %v680, %v696
  %v701 = vadd.f32 %v681, %v697
  %v702 = vadd.f32 %v682, %v698
  %v703 = vadd.f32 %v683, %v699
  %v704 = vrot.slane %v571, 7
  %v705 = vrot.slane %v572, 7
  %v706 = vrot.slane %v573, 7
  %v707 = vrot.slane %v574, 7
  %vm708 = vcmp.lt.s32.totalorder %v50, 1
  %v709 = vsel %vm708, %v706, %v707
  %v710 = vsel %vm708, %v705, %v706
  %v711 = vsel %vm708, %v704, %v705
  %v712 = vsel %vm708, %v707, %v704
  %v713 = vadd.s32 %v63, 4294967295
  %v714 = vadd.s32 %v64, 4294967295
  %v715 = vadd.s32 %v65, 4294967295
  %v716 = vadd.s32 %v66, 4294967295
  %vm717 = vcmp.ge.s32.totalorder %v713, 0
  %vm718 = vcmp.ge.s32.totalorder %v714, 0
  %vm719 = vcmp.ge.s32.totalorder %v715, 0
  %vm720 = vcmp.ge.s32.totalorder %v716, 0
  %vm721 = vcmp.lt.s32.totalorder %v713, 16
  %vm722 = vcmp.lt.s32.totalorder %v714, 16
  %vm723 = vcmp.lt.s32.totalorder %v715, 16
  %vm724 = vcmp.lt.s32.totalorder %v716, 16
  %vm725 = vmand %vm717, %vm721
  %vm726 = vmand %vm718, %vm722
  %vm727 = vmand %vm719, %vm723
  %vm728 = vmand %vm720, %vm724
  %v729 = vsel %vm725, 1, 0
  %v730 = vsel %vm726, 1, 0
  %v731 = vsel %vm727, 1, 0
  %v732 = vsel %vm728, 1, 0
  %v733 = vcvt.s32.f32 %v729
  %v734 = vcvt.s32.f32 %v730
  %v735 = vcvt.s32.f32 %v731
  %v736 = vcvt.s32.f32 %v732
  %v737 = vmul.f32 %v712, %v733
  %v738 = vmul.f32 %v711, %v734
  %v739 = vmul.f32 %v710, %v735
  %v740 = vmul.f32 %v709, %v736
  %741 = vrot.lane.b32.xlu0 %v737, 16
  %v742 = vpop.permute.xlu0 %741
  %743 = vrot.lane.b32.xlu0 %v738, 16
  %v744 = vpop.permute.xlu0 %743
  %745 = vrot.lane.b32.xlu0 %v739, 16
  %v746 = vpop.permute.xlu0 %745
  %747 = vrot.lane.b32.xlu0 %v740, 16
  %v748 = vpop.permute.xlu0 %747
  %v749 = vlaneseq
  %v750 = vshrl.u32 %v749, 7
  %v751 = vsub.s32 5, %v750
  %v752 = vrot.slane %v575, %v751
  %v753 = vmul.f32 %v742, %v752
  %v754 = vmul.f32 %v744, %v752
  %v755 = vmul.f32 %v746, %v752
  %v756 = vmul.f32 %v748, %v752
  %v757 = vadd.f32 %v700, %v753
  %v758 = vadd.f32 %v701, %v754
  %v759 = vadd.f32 %v702, %v755
  %v760 = vadd.f32 %v703, %v756
  %761 = vrot.lane.b32.xlu0 %v737, 8
  %v762 = vpop.permute.xlu0 %761
  %763 = vrot.lane.b32.xlu0 %v738, 8
  %v764 = vpop.permute.xlu0 %763
  %765 = vrot.lane.b32.xlu0 %v739, 8
  %v766 = vpop.permute.xlu0 %765
  %767 = vrot.lane.b32.xlu0 %v740, 8
  %v768 = vpop.permute.xlu0 %767
  %v769 = vlaneseq
  %v770 = vshrl.u32 %v769, 7
  %v771 = vsub.s32 6, %v770
  %v772 = vrot.slane %v575, %v771
  %v773 = vmul.f32 %v762, %v772
  %v774 = vmul.f32 %v764, %v772
  %v775 = vmul.f32 %v766, %v772
  %v776 = vmul.f32 %v768, %v772
  %v777 = vadd.f32 %v757, %v773
  %v778 = vadd.f32 %v758, %v774
  %v779 = vadd.f32 %v759, %v775
  %v780 = vadd.f32 %v760, %v776
  %v781 = vlaneseq
  %v782 = vshrl.u32 %v781, 7
  %v783 = vsub.s32 7, %v782
  %v784 = vrot.slane %v575, %v783
  %v785 = vmul.f32 %v737, %v784
  %v786 = vmul.f32 %v738, %v784
  %v787 = vmul.f32 %v739, %v784
  %v788 = vmul.f32 %v740, %v784
  %v789 = vadd.f32 %v777, %v785
  %v790 = vadd.f32 %v778, %v786
  %v791 = vadd.f32 %v779, %v787
  %v792 = vadd.f32 %v780, %v788
  %793 = vrot.lane.b32.xlu0 %v737, 120
  %v794 = vpop.permute.xlu0 %793
  %795 = vrot.lane.b32.xlu0 %v738, 120
  %v796 = vpop.permute.xlu0 %795
  %797 = vrot.lane.b32.xlu0 %v739, 120
  %v798 = vpop.permute.xlu0 %797
  %799 = vrot.lane.b32.xlu0 %v740, 120
  %v800 = vpop.permute.xlu0 %799
  %v801 = vlaneseq
  %v802 = vshrl.u32 %v801, 7
  %v803 = vsub.s32 0, %v802
  %v804 = vrot.slane %v576, %v803
  %v805 = vmul.f32 %v794, %v804
  %v806 = vmul.f32 %v796, %v804
  %v807 = vmul.f32 %v798, %v804
  %v808 = vmul.f32 %v800, %v804
  %v809 = vadd.f32 %v789, %v805
  %v810 = vadd.f32 %v790, %v806
  %v811 = vadd.f32 %v791, %v807
  %v812 = vadd.f32 %v792, %v808
  %813 = vrot.lane.b32.xlu0 %v737, 112
  %v814 = vpop.permute.xlu0 %813
  %815 = vrot.lane.b32.xlu0 %v738, 112
  %v816 = vpop.permute.xlu0 %815
  %817 = vrot.lane.b32.xlu0 %v739, 112
  %v818 = vpop.permute.xlu0 %817
  %819 = vrot.lane.b32.xlu0 %v740, 112
  %v820 = vpop.permute.xlu0 %819
  %v821 = vlaneseq
  %v822 = vshrl.u32 %v821, 7
  %v823 = vsub.s32 1, %v822
  %v824 = vrot.slane %v576, %v823
  %v825 = vmul.f32 %v814, %v824
  %v826 = vmul.f32 %v816, %v824
  %v827 = vmul.f32 %v818, %v824
  %v828 = vmul.f32 %v820, %v824
  %v829 = vadd.f32 %v809, %v825
  %v830 = vadd.f32 %v810, %v826
  %v831 = vadd.f32 %v811, %v827
  %v832 = vadd.f32 %v812, %v828
  %833 = vrot.lane.b32.xlu0 %v571, 16
  %v834 = vpop.permute.xlu0 %833
  %835 = vrot.lane.b32.xlu0 %v572, 16
  %v836 = vpop.permute.xlu0 %835
  %837 = vrot.lane.b32.xlu0 %v573, 16
  %v838 = vpop.permute.xlu0 %837
  %839 = vrot.lane.b32.xlu0 %v574, 16
  %v840 = vpop.permute.xlu0 %839
  %v841 = vlaneseq
  %v842 = vshrl.u32 %v841, 7
  %v843 = vsub.s32 2, %v842
  %v844 = vrot.slane %v576, %v843
  %v845 = vmul.f32 %v834, %v844
  %v846 = vmul.f32 %v836, %v844
  %v847 = vmul.f32 %v838, %v844
  %v848 = vmul.f32 %v840, %v844
  %v849 = vadd.f32 %v829, %v845
  %v850 = vadd.f32 %v830, %v846
  %v851 = vadd.f32 %v831, %v847
  %v852 = vadd.f32 %v832, %v848
  %853 = vrot.lane.b32.xlu0 %v571, 8
  %v854 = vpop.permute.xlu0 %853
  %855 = vrot.lane.b32.xlu0 %v572, 8
  %v856 = vpop.permute.xlu0 %855
  %857 = vrot.lane.b32.xlu0 %v573, 8
  %v858 = vpop.permute.xlu0 %857
  %859 = vrot.lane.b32.xlu0 %v574, 8
  %v860 = vpop.permute.xlu0 %859
  %v861 = vlaneseq
  %v862 = vshrl.u32 %v861, 7
  %v863 = vsub.s32 3, %v862
  %v864 = vrot.slane %v576, %v863
  %v865 = vmul.f32 %v854, %v864
  %v866 = vmul.f32 %v856, %v864
  %v867 = vmul.f32 %v858, %v864
  %v868 = vmul.f32 %v860, %v864
  %v869 = vadd.f32 %v849, %v865
  %v870 = vadd.f32 %v850, %v866
  %v871 = vadd.f32 %v851, %v867
  %v872 = vadd.f32 %v852, %v868
  %v873 = vlaneseq
  %v874 = vshrl.u32 %v873, 7
  %v875 = vsub.s32 4, %v874
  %v876 = vrot.slane %v576, %v875
  %v877 = vmul.f32 %v571, %v876
  %v878 = vmul.f32 %v572, %v876
  %v879 = vmul.f32 %v573, %v876
  %v880 = vmul.f32 %v574, %v876
  %v881 = vadd.f32 %v869, %v877
  %v882 = vadd.f32 %v870, %v878
  %v883 = vadd.f32 %v871, %v879
  %v884 = vadd.f32 %v872, %v880
  %885 = vrot.lane.b32.xlu0 %v571, 120
  %v886 = vpop.permute.xlu0 %885
  %887 = vrot.lane.b32.xlu0 %v572, 120
  %v888 = vpop.permute.xlu0 %887
  %889 = vrot.lane.b32.xlu0 %v573, 120
  %v890 = vpop.permute.xlu0 %889
  %891 = vrot.lane.b32.xlu0 %v574, 120
  %v892 = vpop.permute.xlu0 %891
  %v893 = vlaneseq
  %v894 = vshrl.u32 %v893, 7
  %v895 = vsub.s32 5, %v894
  %v896 = vrot.slane %v576, %v895
  %v897 = vmul.f32 %v886, %v896
  %v898 = vmul.f32 %v888, %v896
  %v899 = vmul.f32 %v890, %v896
  %v900 = vmul.f32 %v892, %v896
  %v901 = vadd.f32 %v881, %v897
  %v902 = vadd.f32 %v882, %v898
  %v903 = vadd.f32 %v883, %v899
  %v904 = vadd.f32 %v884, %v900
  %905 = vrot.lane.b32.xlu0 %v571, 112
  %v906 = vpop.permute.xlu0 %905
  %907 = vrot.lane.b32.xlu0 %v572, 112
  %v908 = vpop.permute.xlu0 %907
  %909 = vrot.lane.b32.xlu0 %v573, 112
  %v910 = vpop.permute.xlu0 %909
  %911 = vrot.lane.b32.xlu0 %v574, 112
  %v912 = vpop.permute.xlu0 %911
  %v913 = vlaneseq
  %v914 = vshrl.u32 %v913, 7
  %v915 = vsub.s32 6, %v914
  %v916 = vrot.slane %v576, %v915
  %v917 = vmul.f32 %v906, %v916
  %v918 = vmul.f32 %v908, %v916
  %v919 = vmul.f32 %v910, %v916
  %v920 = vmul.f32 %v912, %v916
  %v921 = vadd.f32 %v901, %v917
  %v922 = vadd.f32 %v902, %v918
  %v923 = vadd.f32 %v903, %v919
  %v924 = vadd.f32 %v904, %v920
  %v925 = vrot.slane %v571, 1
  %v926 = vrot.slane %v572, 1
  %v927 = vrot.slane %v573, 1
  %v928 = vrot.slane %v574, 1
  %v929 = vsel %vm96, %v927, %v928
  %v930 = vsel %vm96, %v926, %v927
  %v931 = vsel %vm96, %v925, %v926
  %v932 = vsel %vm96, %v928, %v925
  %v933 = vadd.s32 %v63, 1
  %v934 = vadd.s32 %v64, 1
  %v935 = vadd.s32 %v65, 1
  %v936 = vadd.s32 %v66, 1
  %vm937 = vcmp.ge.s32.totalorder %v933, 0
  %vm938 = vcmp.ge.s32.totalorder %v934, 0
  %vm939 = vcmp.ge.s32.totalorder %v935, 0
  %vm940 = vcmp.ge.s32.totalorder %v936, 0
  %vm941 = vcmp.lt.s32.totalorder %v933, 16
  %vm942 = vcmp.lt.s32.totalorder %v934, 16
  %vm943 = vcmp.lt.s32.totalorder %v935, 16
  %vm944 = vcmp.lt.s32.totalorder %v936, 16
  %vm945 = vmand %vm937, %vm941
  %vm946 = vmand %vm938, %vm942
  %vm947 = vmand %vm939, %vm943
  %vm948 = vmand %vm940, %vm944
  %v949 = vsel %vm945, 1, 0
  %v950 = vsel %vm946, 1, 0
  %v951 = vsel %vm947, 1, 0
  %v952 = vsel %vm948, 1, 0
  %v953 = vcvt.s32.f32 %v949
  %v954 = vcvt.s32.f32 %v950
  %v955 = vcvt.s32.f32 %v951
  %v956 = vcvt.s32.f32 %v952
  %v957 = vmul.f32 %v931, %v953
  %v958 = vmul.f32 %v930, %v954
  %v959 = vmul.f32 %v929, %v955
  %v960 = vmul.f32 %v932, %v956
  %961 = vrot.lane.b32.xlu0 %v957, 16
  %v962 = vpop.permute.xlu0 %961
  %963 = vrot.lane.b32.xlu0 %v958, 16
  %v964 = vpop.permute.xlu0 %963
  %965 = vrot.lane.b32.xlu0 %v959, 16
  %v966 = vpop.permute.xlu0 %965
  %967 = vrot.lane.b32.xlu0 %v960, 16
  %v968 = vpop.permute.xlu0 %967
  %v969 = vlaneseq
  %v970 = vshrl.u32 %v969, 7
  %v971 = vsub.s32 7, %v970
  %v972 = vrot.slane %v576, %v971
  %v973 = vmul.f32 %v962, %v972
  %v974 = vmul.f32 %v964, %v972
  %v975 = vmul.f32 %v966, %v972
  %v976 = vmul.f32 %v968, %v972
  %v977 = vadd.f32 %v921, %v973
  %v978 = vadd.f32 %v922, %v974
  %v979 = vadd.f32 %v923, %v975
  %v980 = vadd.f32 %v924, %v976
  %981 = vrot.lane.b32.xlu0 %v957, 8
  %v982 = vpop.permute.xlu0 %981
  %983 = vrot.lane.b32.xlu0 %v958, 8
  %v984 = vpop.permute.xlu0 %983
  %985 = vrot.lane.b32.xlu0 %v959, 8
  %v986 = vpop.permute.xlu0 %985
  %987 = vrot.lane.b32.xlu0 %v960, 8
  %v988 = vpop.permute.xlu0 %987
  %v989 = vlaneseq
  %v990 = vshrl.u32 %v989, 7
  %v991 = vsub.s32 0, %v990
  %v992 = vrot.slane %v577, %v991
  %v993 = vmul.f32 %v982, %v992
  %v994 = vmul.f32 %v984, %v992
  %v995 = vmul.f32 %v986, %v992
  %v996 = vmul.f32 %v988, %v992
  %v997 = vadd.f32 %v977, %v993
  %v998 = vadd.f32 %v978, %v994
  %v999 = vadd.f32 %v979, %v995
  %v1000 = vadd.f32 %v980, %v996
  %v1001 = vlaneseq
  %v1002 = vshrl.u32 %v1001, 7
  %v1003 = vsub.s32 1, %v1002
  %v1004 = vrot.slane %v577, %v1003
  %v1005 = vmul.f32 %v957, %v1004
  %v1006 = vmul.f32 %v958, %v1004
  %v1007 = vmul.f32 %v959, %v1004
  %v1008 = vmul.f32 %v960, %v1004
  %v1009 = vadd.f32 %v997, %v1005
  %v1010 = vadd.f32 %v998, %v1006
  %v1011 = vadd.f32 %v999, %v1007
  %v1012 = vadd.f32 %v1000, %v1008
  %1013 = vrot.lane.b32.xlu0 %v957, 120
  %v1014 = vpop.permute.xlu0 %1013
  %1015 = vrot.lane.b32.xlu0 %v958, 120
  %v1016 = vpop.permute.xlu0 %1015
  %1017 = vrot.lane.b32.xlu0 %v959, 120
  %v1018 = vpop.permute.xlu0 %1017
  %1019 = vrot.lane.b32.xlu0 %v960, 120
  %v1020 = vpop.permute.xlu0 %1019
  %v1021 = vlaneseq
  %v1022 = vshrl.u32 %v1021, 7
  %v1023 = vsub.s32 2, %v1022
  %v1024 = vrot.slane %v577, %v1023
  %v1025 = vmul.f32 %v1014, %v1024
  %v1026 = vmul.f32 %v1016, %v1024
  %v1027 = vmul.f32 %v1018, %v1024
  %v1028 = vmul.f32 %v1020, %v1024
  %v1029 = vadd.f32 %v1009, %v1025
  %v1030 = vadd.f32 %v1010, %v1026
  %v1031 = vadd.f32 %v1011, %v1027
  %v1032 = vadd.f32 %v1012, %v1028
  %1033 = vrot.lane.b32.xlu0 %v957, 112
  %v1034 = vpop.permute.xlu0 %1033
  %1035 = vrot.lane.b32.xlu0 %v958, 112
  %v1036 = vpop.permute.xlu0 %1035
  %1037 = vrot.lane.b32.xlu0 %v959, 112
  %v1038 = vpop.permute.xlu0 %1037
  %1039 = vrot.lane.b32.xlu0 %v960, 112
  %v1040 = vpop.permute.xlu0 %1039
  %v1041 = vlaneseq
  %v1042 = vshrl.u32 %v1041, 7
  %v1043 = vsub.s32 3, %v1042
  %v1044 = vrot.slane %v577, %v1043
  %v1045 = vmul.f32 %v1034, %v1044
  %v1046 = vmul.f32 %v1036, %v1044
  %v1047 = vmul.f32 %v1038, %v1044
  %v1048 = vmul.f32 %v1040, %v1044
  %v1049 = vadd.f32 %v1029, %v1045
  %v1050 = vadd.f32 %v1030, %v1046
  %v1051 = vadd.f32 %v1031, %v1047
  %v1052 = vadd.f32 %v1032, %v1048
  %v1053 = vrot.slane %v571, 2
  %v1054 = vrot.slane %v572, 2
  %v1055 = vrot.slane %v573, 2
  %v1056 = vrot.slane %v574, 2
  %vm1057 = vcmp.lt.s32.totalorder %v50, 6
  %v1058 = vsel %vm1057, %v1055, %v1056
  %v1059 = vsel %vm1057, %v1054, %v1055
  %v1060 = vsel %vm1057, %v1053, %v1054
  %v1061 = vsel %vm1057, %v1056, %v1053
  %v1062 = vadd.s32 %v63, 2
  %v1063 = vadd.s32 %v64, 2
  %v1064 = vadd.s32 %v65, 2
  %v1065 = vadd.s32 %v66, 2
  %vm1066 = vcmp.ge.s32.totalorder %v1062, 0
  %vm1067 = vcmp.ge.s32.totalorder %v1063, 0
  %vm1068 = vcmp.ge.s32.totalorder %v1064, 0
  %vm1069 = vcmp.ge.s32.totalorder %v1065, 0
  %vm1070 = vcmp.lt.s32.totalorder %v1062, 16
  %vm1071 = vcmp.lt.s32.totalorder %v1063, 16
  %vm1072 = vcmp.lt.s32.totalorder %v1064, 16
  %vm1073 = vcmp.lt.s32.totalorder %v1065, 16
  %vm1074 = vmand %vm1066, %vm1070
  %vm1075 = vmand %vm1067, %vm1071
  %vm1076 = vmand %vm1068, %vm1072
  %vm1077 = vmand %vm1069, %vm1073
  %v1078 = vsel %vm1074, 1, 0
  %v1079 = vsel %vm1075, 1, 0
  %v1080 = vsel %vm1076, 1, 0
  %v1081 = vsel %vm1077, 1, 0
  %v1082 = vcvt.s32.f32 %v1078
  %v1083 = vcvt.s32.f32 %v1079
  %v1084 = vcvt.s32.f32 %v1080
  %v1085 = vcvt.s32.f32 %v1081
  %v1086 = vmul.f32 %v1060, %v1082
  %v1087 = vmul.f32 %v1059, %v1083
  %v1088 = vmul.f32 %v1058, %v1084
  %v1089 = vmul.f32 %v1061, %v1085
  %1090 = vrot.lane.b32.xlu0 %v1086, 16
  %v1091 = vpop.permute.xlu0 %1090
  %1092 = vrot.lane.b32.xlu0 %v1087, 16
  %v1093 = vpop.permute.xlu0 %1092
  %1094 = vrot.lane.b32.xlu0 %v1088, 16
  %v1095 = vpop.permute.xlu0 %1094
  %1096 = vrot.lane.b32.xlu0 %v1089, 16
  %v1097 = vpop.permute.xlu0 %1096
  %v1098 = vlaneseq
  %v1099 = vshrl.u32 %v1098, 7
  %v1100 = vsub.s32 4, %v1099
  %v1101 = vrot.slane %v577, %v1100
  %v1102 = vmul.f32 %v1091, %v1101
  %v1103 = vmul.f32 %v1093, %v1101
  %v1104 = vmul.f32 %v1095, %v1101
  %v1105 = vmul.f32 %v1097, %v1101
  %v1106 = vadd.f32 %v1049, %v1102
  %v1107 = vadd.f32 %v1050, %v1103
  %v1108 = vadd.f32 %v1051, %v1104
  %v1109 = vadd.f32 %v1052, %v1105
  %1110 = vrot.lane.b32.xlu0 %v1086, 8
  %v1111 = vpop.permute.xlu0 %1110
  %1112 = vrot.lane.b32.xlu0 %v1087, 8
  %v1113 = vpop.permute.xlu0 %1112
  %1114 = vrot.lane.b32.xlu0 %v1088, 8
  %v1115 = vpop.permute.xlu0 %1114
  %1116 = vrot.lane.b32.xlu0 %v1089, 8
  %v1117 = vpop.permute.xlu0 %1116
  %v1118 = vlaneseq
  %v1119 = vshrl.u32 %v1118, 7
  %v1120 = vsub.s32 5, %v1119
  %v1121 = vrot.slane %v577, %v1120
  %v1122 = vmul.f32 %v1111, %v1121
  %v1123 = vmul.f32 %v1113, %v1121
  %v1124 = vmul.f32 %v1115, %v1121
  %v1125 = vmul.f32 %v1117, %v1121
  %v1126 = vadd.f32 %v1106, %v1122
  %v1127 = vadd.f32 %v1107, %v1123
  %v1128 = vadd.f32 %v1108, %v1124
  %v1129 = vadd.f32 %v1109, %v1125
  %v1130 = vlaneseq
  %v1131 = vshrl.u32 %v1130, 7
  %v1132 = vsub.s32 6, %v1131
  %v1133 = vrot.slane %v577, %v1132
  %v1134 = vmul.f32 %v1086, %v1133
  %v1135 = vmul.f32 %v1087, %v1133
  %v1136 = vmul.f32 %v1088, %v1133
  %v1137 = vmul.f32 %v1089, %v1133
  %v1138 = vadd.f32 %v1126, %v1134
  %v1139 = vadd.f32 %v1127, %v1135
  %v1140 = vadd.f32 %v1128, %v1136
  %v1141 = vadd.f32 %v1129, %v1137
  %1142 = vrot.lane.b32.xlu0 %v1086, 120
  %v1143 = vpop.permute.xlu0 %1142
  %1144 = vrot.lane.b32.xlu0 %v1087, 120
  %v1145 = vpop.permute.xlu0 %1144
  %1146 = vrot.lane.b32.xlu0 %v1088, 120
  %v1147 = vpop.permute.xlu0 %1146
  %1148 = vrot.lane.b32.xlu0 %v1089, 120
  %v1149 = vpop.permute.xlu0 %1148
  %v1150 = vlaneseq
  %v1151 = vshrl.u32 %v1150, 7
  %v1152 = vsub.s32 7, %v1151
  %v1153 = vrot.slane %v577, %v1152
  %v1154 = vmul.f32 %v1143, %v1153
  %v1155 = vmul.f32 %v1145, %v1153
  %v1156 = vmul.f32 %v1147, %v1153
  %v1157 = vmul.f32 %v1149, %v1153
  %v1158 = vadd.f32 %v1138, %v1154
  %v1159 = vadd.f32 %v1139, %v1155
  %v1160 = vadd.f32 %v1140, %v1156
  %v1161 = vadd.f32 %v1141, %v1157
  %1162 = vrot.lane.b32.xlu0 %v1086, 112
  %v1163 = vpop.permute.xlu0 %1162
  %1164 = vrot.lane.b32.xlu0 %v1087, 112
  %v1165 = vpop.permute.xlu0 %1164
  %1166 = vrot.lane.b32.xlu0 %v1088, 112
  %v1167 = vpop.permute.xlu0 %1166
  %1168 = vrot.lane.b32.xlu0 %v1089, 112
  %v1169 = vpop.permute.xlu0 %1168
  %v1170 = vlaneseq
  %v1171 = vshrl.u32 %v1170, 7
  %v1172 = vsub.s32 0, %v1171
  %v1173 = vrot.slane %v578, %v1172
  %v1174 = vmul.f32 %v1163, %v1173
  %v1175 = vmul.f32 %v1165, %v1173
  %v1176 = vmul.f32 %v1167, %v1173
  %v1177 = vmul.f32 %v1169, %v1173
  %v1178 = vadd.f32 %v1158, %v1174
  %v1179 = vadd.f32 %v1159, %v1175
  %v1180 = vadd.f32 %v1160, %v1176
  %v1181 = vadd.f32 %v1161, %v1177
  %v1182 = vlaneseq
  %v1183 = vshrl.u32 %v1182, 7
  %v1184 = vsub.s32 2, %v1183
  %v1185 = vrot.slane %v47, %v1184
  %v1186 = vadd.f32 %v1178, %v1185
  %v1187 = vadd.f32 %v1179, %v1185
  %v1188 = vadd.f32 %v1180, %v1185
  %v1189 = vadd.f32 %v1181, %v1185
  %v1190 = vld [vmem:[%s10] sm:$0xff]
  %v1191 = vld [vmem:[%s10 + $0x8] sm:$0xff]
  %v1192 = vld [vmem:[%s10 + $0x10] sm:$0xff]
  %v1193 = vld [vmem:[%s10 + $0x18] sm:$0xff]
  %v1194 = vld [vmem:[%s10 + $0x20] sm:$0xff]
  %v1195 = vld [vmem:[%s10 + $0x28] sm:$0xff]
  %v1196 = vld [vmem:[%s10 + $0x30] sm:$0x1]
  %v1197 = vrot.slane %v1186, 7
  %v1198 = vrot.slane %v1187, 7
  %v1199 = vrot.slane %v1188, 7
  %v1200 = vrot.slane %v1189, 7
  %v1201 = vsel %vm708, %v1199, %v1200
  %v1202 = vsel %vm708, %v1198, %v1199
  %v1203 = vsel %vm708, %v1197, %v1198
  %v1204 = vsel %vm708, %v1200, %v1197
  %v1205 = vadd.s32 %v63, 4294967287
  %v1206 = vadd.s32 %v64, 4294967287
  %v1207 = vadd.s32 %v65, 4294967287
  %v1208 = vadd.s32 %v66, 4294967287
  %vm1209 = vcmp.ge.s32.totalorder %v1205, 0
  %vm1210 = vcmp.ge.s32.totalorder %v1206, 0
  %vm1211 = vcmp.ge.s32.totalorder %v1207, 0
  %vm1212 = vcmp.ge.s32.totalorder %v1208, 0
  %vm1213 = vcmp.lt.s32.totalorder %v1205, 16
  %vm1214 = vcmp.lt.s32.totalorder %v1206, 16
  %vm1215 = vcmp.lt.s32.totalorder %v1207, 16
  %vm1216 = vcmp.lt.s32.totalorder %v1208, 16
  %vm1217 = vmand %vm1209, %vm1213
  %vm1218 = vmand %vm1210, %vm1214
  %vm1219 = vmand %vm1211, %vm1215
  %vm1220 = vmand %vm1212, %vm1216
  %v1221 = vsel %vm1217, 1, 0
  %v1222 = vsel %vm1218, 1, 0
  %v1223 = vsel %vm1219, 1, 0
  %v1224 = vsel %vm1220, 1, 0
  %v1225 = vcvt.s32.f32 %v1221
  %v1226 = vcvt.s32.f32 %v1222
  %v1227 = vcvt.s32.f32 %v1223
  %v1228 = vcvt.s32.f32 %v1224
  %v1229 = vmul.f32 %v1201, %v1225
  %v1230 = vmul.f32 %v1204, %v1226
  %v1231 = vmul.f32 %v1203, %v1227
  %v1232 = vmul.f32 %v1202, %v1228
  %1233 = vrot.lane.b32.xlu0 %v1229, 72
  %v1234 = vpop.permute.xlu0 %1233
  %1235 = vrot.lane.b32.xlu0 %v1230, 72
  %v1236 = vpop.permute.xlu0 %1235
  %1237 = vrot.lane.b32.xlu0 %v1231, 72
  %v1238 = vpop.permute.xlu0 %1237
  %1239 = vrot.lane.b32.xlu0 %v1232, 72
  %v1240 = vpop.permute.xlu0 %1239
  %v1241 = vlaneseq
  %v1242 = vshrl.u32 %v1241, 7
  %v1243 = vsub.s32 0, %v1242
  %v1244 = vrot.slane %v1190, %v1243
  %v1245 = vmul.f32 %v1234, %v1244
  %v1246 = vmul.f32 %v1236, %v1244
  %v1247 = vmul.f32 %v1238, %v1244
  %v1248 = vmul.f32 %v1240, %v1244
  %1249 = vrot.lane.b32.xlu0 %v1229, 48
  %v1250 = vpop.permute.xlu0 %1249
  %1251 = vrot.lane.b32.xlu0 %v1230, 48
  %v1252 = vpop.permute.xlu0 %1251
  %1253 = vrot.lane.b32.xlu0 %v1231, 48
  %v1254 = vpop.permute.xlu0 %1253
  %1255 = vrot.lane.b32.xlu0 %v1232, 48
  %v1256 = vpop.permute.xlu0 %1255
  %v1257 = vlaneseq
  %v1258 = vshrl.u32 %v1257, 7
  %v1259 = vsub.s32 1, %v1258
  %v1260 = vrot.slane %v1190, %v1259
  %v1261 = vmul.f32 %v1250, %v1260
  %v1262 = vmul.f32 %v1252, %v1260
  %v1263 = vmul.f32 %v1254, %v1260
  %v1264 = vmul.f32 %v1256, %v1260
  %v1265 = vadd.f32 %v1245, %v1261
  %v1266 = vadd.f32 %v1246, %v1262
  %v1267 = vadd.f32 %v1247, %v1263
  %v1268 = vadd.f32 %v1248, %v1264
  %1269 = vrot.lane.b32.xlu0 %v1229, 24
  %v1270 = vpop.permute.xlu0 %1269
  %1271 = vrot.lane.b32.xlu0 %v1230, 24
  %v1272 = vpop.permute.xlu0 %1271
  %1273 = vrot.lane.b32.xlu0 %v1231, 24
  %v1274 = vpop.permute.xlu0 %1273
  %1275 = vrot.lane.b32.xlu0 %v1232, 24
  %v1276 = vpop.permute.xlu0 %1275
  %v1277 = vlaneseq
  %v1278 = vshrl.u32 %v1277, 7
  %v1279 = vsub.s32 2, %v1278
  %v1280 = vrot.slane %v1190, %v1279
  %v1281 = vmul.f32 %v1270, %v1280
  %v1282 = vmul.f32 %v1272, %v1280
  %v1283 = vmul.f32 %v1274, %v1280
  %v1284 = vmul.f32 %v1276, %v1280
  %v1285 = vadd.f32 %v1265, %v1281
  %v1286 = vadd.f32 %v1266, %v1282
  %v1287 = vadd.f32 %v1267, %v1283
  %v1288 = vadd.f32 %v1268, %v1284
  %v1289 = vlaneseq
  %v1290 = vshrl.u32 %v1289, 7
  %v1291 = vsub.s32 3, %v1290
  %v1292 = vrot.slane %v1190, %v1291
  %v1293 = vmul.f32 %v1229, %v1292
  %v1294 = vmul.f32 %v1230, %v1292
  %v1295 = vmul.f32 %v1231, %v1292
  %v1296 = vmul.f32 %v1232, %v1292
  %v1297 = vadd.f32 %v1285, %v1293
  %v1298 = vadd.f32 %v1286, %v1294
  %v1299 = vadd.f32 %v1287, %v1295
  %v1300 = vadd.f32 %v1288, %v1296
  %1301 = vrot.lane.b32.xlu0 %v1229, 104
  %v1302 = vpop.permute.xlu0 %1301
  %1303 = vrot.lane.b32.xlu0 %v1230, 104
  %v1304 = vpop.permute.xlu0 %1303
  %1305 = vrot.lane.b32.xlu0 %v1231, 104
  %v1306 = vpop.permute.xlu0 %1305
  %1307 = vrot.lane.b32.xlu0 %v1232, 104
  %v1308 = vpop.permute.xlu0 %1307
  %v1309 = vlaneseq
  %v1310 = vshrl.u32 %v1309, 7
  %v1311 = vsub.s32 4, %v1310
  %v1312 = vrot.slane %v1190, %v1311
  %v1313 = vmul.f32 %v1302, %v1312
  %v1314 = vmul.f32 %v1304, %v1312
  %v1315 = vmul.f32 %v1306, %v1312
  %v1316 = vmul.f32 %v1308, %v1312
  %v1317 = vadd.f32 %v1297, %v1313
  %v1318 = vadd.f32 %v1298, %v1314
  %v1319 = vadd.f32 %v1299, %v1315
  %v1320 = vadd.f32 %v1300, %v1316
  %1321 = vrot.lane.b32.xlu0 %v1229, 80
  %v1322 = vpop.permute.xlu0 %1321
  %1323 = vrot.lane.b32.xlu0 %v1230, 80
  %v1324 = vpop.permute.xlu0 %1323
  %1325 = vrot.lane.b32.xlu0 %v1231, 80
  %v1326 = vpop.permute.xlu0 %1325
  %1327 = vrot.lane.b32.xlu0 %v1232, 80
  %v1328 = vpop.permute.xlu0 %1327
  %v1329 = vlaneseq
  %v1330 = vshrl.u32 %v1329, 7
  %v1331 = vsub.s32 5, %v1330
  %v1332 = vrot.slane %v1190, %v1331
  %v1333 = vmul.f32 %v1322, %v1332
  %v1334 = vmul.f32 %v1324, %v1332
  %v1335 = vmul.f32 %v1326, %v1332
  %v1336 = vmul.f32 %v1328, %v1332
  %v1337 = vadd.f32 %v1317, %v1333
  %v1338 = vadd.f32 %v1318, %v1334
  %v1339 = vadd.f32 %v1319, %v1335
  %v1340 = vadd.f32 %v1320, %v1336
  %1341 = vrot.lane.b32.xlu0 %v1229, 56
  %v1342 = vpop.permute.xlu0 %1341
  %1343 = vrot.lane.b32.xlu0 %v1230, 56
  %v1344 = vpop.permute.xlu0 %1343
  %1345 = vrot.lane.b32.xlu0 %v1231, 56
  %v1346 = vpop.permute.xlu0 %1345
  %1347 = vrot.lane.b32.xlu0 %v1232, 56
  %v1348 = vpop.permute.xlu0 %1347
  %v1349 = vlaneseq
  %v1350 = vshrl.u32 %v1349, 7
  %v1351 = vsub.s32 6, %v1350
  %v1352 = vrot.slane %v1190, %v1351
  %v1353 = vmul.f32 %v1342, %v1352
  %v1354 = vmul.f32 %v1344, %v1352
  %v1355 = vmul.f32 %v1346, %v1352
  %v1356 = vmul.f32 %v1348, %v1352
  %v1357 = vadd.f32 %v1337, %v1353
  %v1358 = vadd.f32 %v1338, %v1354
  %v1359 = vadd.f32 %v1339, %v1355
  %v1360 = vadd.f32 %v1340, %v1356
  %v1361 = vrot.slane %v1186, 2
  %v1362 = vrot.slane %v1187, 2
  %v1363 = vrot.slane %v1188, 2
  %v1364 = vrot.slane %v1189, 2
  %v1365 = vsel %vm1057, %v1363, %v1364
  %v1366 = vsel %vm1057, %v1362, %v1363
  %v1367 = vsel %vm1057, %v1361, %v1362
  %v1368 = vsel %vm1057, %v1364, %v1361
  %v1369 = vadd.s32 %v63, 4294967290
  %v1370 = vadd.s32 %v64, 4294967290
  %v1371 = vadd.s32 %v65, 4294967290
  %v1372 = vadd.s32 %v66, 4294967290
  %vm1373 = vcmp.ge.s32.totalorder %v1369, 0
  %vm1374 = vcmp.ge.s32.totalorder %v1370, 0
  %vm1375 = vcmp.ge.s32.totalorder %v1371, 0
  %vm1376 = vcmp.ge.s32.totalorder %v1372, 0
  %vm1377 = vcmp.lt.s32.totalorder %v1369, 16
  %vm1378 = vcmp.lt.s32.totalorder %v1370, 16
  %vm1379 = vcmp.lt.s32.totalorder %v1371, 16
  %vm1380 = vcmp.lt.s32.totalorder %v1372, 16
  %vm1381 = vmand %vm1373, %vm1377
  %vm1382 = vmand %vm1374, %vm1378
  %vm1383 = vmand %vm1375, %vm1379
  %vm1384 = vmand %vm1376, %vm1380
  %v1385 = vsel %vm1381, 1, 0
  %v1386 = vsel %vm1382, 1, 0
  %v1387 = vsel %vm1383, 1, 0
  %v1388 = vsel %vm1384, 1, 0
  %v1389 = vcvt.s32.f32 %v1385
  %v1390 = vcvt.s32.f32 %v1386
  %v1391 = vcvt.s32.f32 %v1387
  %v1392 = vcvt.s32.f32 %v1388
  %v1393 = vmul.f32 %v1368, %v1389
  %v1394 = vmul.f32 %v1367, %v1390
  %v1395 = vmul.f32 %v1366, %v1391
  %v1396 = vmul.f32 %v1365, %v1392
  %1397 = vrot.lane.b32.xlu0 %v1393, 72
  %v1398 = vpop.permute.xlu0 %1397
  %1399 = vrot.lane.b32.xlu0 %v1394, 72
  %v1400 = vpop.permute.xlu0 %1399
  %1401 = vrot.lane.b32.xlu0 %v1395, 72
  %v1402 = vpop.permute.xlu0 %1401
  %1403 = vrot.lane.b32.xlu0 %v1396, 72
  %v1404 = vpop.permute.xlu0 %1403
  %v1405 = vlaneseq
  %v1406 = vshrl.u32 %v1405, 7
  %v1407 = vsub.s32 7, %v1406
  %v1408 = vrot.slane %v1190, %v1407
  %v1409 = vmul.f32 %v1398, %v1408
  %v1410 = vmul.f32 %v1400, %v1408
  %v1411 = vmul.f32 %v1402, %v1408
  %v1412 = vmul.f32 %v1404, %v1408
  %v1413 = vadd.f32 %v1357, %v1409
  %v1414 = vadd.f32 %v1358, %v1410
  %v1415 = vadd.f32 %v1359, %v1411
  %v1416 = vadd.f32 %v1360, %v1412
  %1417 = vrot.lane.b32.xlu0 %v1393, 48
  %v1418 = vpop.permute.xlu0 %1417
  %1419 = vrot.lane.b32.xlu0 %v1394, 48
  %v1420 = vpop.permute.xlu0 %1419
  %1421 = vrot.lane.b32.xlu0 %v1395, 48
  %v1422 = vpop.permute.xlu0 %1421
  %1423 = vrot.lane.b32.xlu0 %v1396, 48
  %v1424 = vpop.permute.xlu0 %1423
  %v1425 = vlaneseq
  %v1426 = vshrl.u32 %v1425, 7
  %v1427 = vsub.s32 0, %v1426
  %v1428 = vrot.slane %v1191, %v1427
  %v1429 = vmul.f32 %v1418, %v1428
  %v1430 = vmul.f32 %v1420, %v1428
  %v1431 = vmul.f32 %v1422, %v1428
  %v1432 = vmul.f32 %v1424, %v1428
  %v1433 = vadd.f32 %v1413, %v1429
  %v1434 = vadd.f32 %v1414, %v1430
  %v1435 = vadd.f32 %v1415, %v1431
  %v1436 = vadd.f32 %v1416, %v1432
  %1437 = vrot.lane.b32.xlu0 %v1393, 24
  %v1438 = vpop.permute.xlu0 %1437
  %1439 = vrot.lane.b32.xlu0 %v1394, 24
  %v1440 = vpop.permute.xlu0 %1439
  %1441 = vrot.lane.b32.xlu0 %v1395, 24
  %v1442 = vpop.permute.xlu0 %1441
  %1443 = vrot.lane.b32.xlu0 %v1396, 24
  %v1444 = vpop.permute.xlu0 %1443
  %v1445 = vlaneseq
  %v1446 = vshrl.u32 %v1445, 7
  %v1447 = vsub.s32 1, %v1446
  %v1448 = vrot.slane %v1191, %v1447
  %v1449 = vmul.f32 %v1438, %v1448
  %v1450 = vmul.f32 %v1440, %v1448
  %v1451 = vmul.f32 %v1442, %v1448
  %v1452 = vmul.f32 %v1444, %v1448
  %v1453 = vadd.f32 %v1433, %v1449
  %v1454 = vadd.f32 %v1434, %v1450
  %v1455 = vadd.f32 %v1435, %v1451
  %v1456 = vadd.f32 %v1436, %v1452
  %v1457 = vlaneseq
  %v1458 = vshrl.u32 %v1457, 7
  %v1459 = vsub.s32 2, %v1458
  %v1460 = vrot.slane %v1191, %v1459
  %v1461 = vmul.f32 %v1393, %v1460
  %v1462 = vmul.f32 %v1394, %v1460
  %v1463 = vmul.f32 %v1395, %v1460
  %v1464 = vmul.f32 %v1396, %v1460
  %v1465 = vadd.f32 %v1453, %v1461
  %v1466 = vadd.f32 %v1454, %v1462
  %v1467 = vadd.f32 %v1455, %v1463
  %v1468 = vadd.f32 %v1456, %v1464
  %1469 = vrot.lane.b32.xlu0 %v1393, 104
  %v1470 = vpop.permute.xlu0 %1469
  %1471 = vrot.lane.b32.xlu0 %v1394, 104
  %v1472 = vpop.permute.xlu0 %1471
  %1473 = vrot.lane.b32.xlu0 %v1395, 104
  %v1474 = vpop.permute.xlu0 %1473
  %1475 = vrot.lane.b32.xlu0 %v1396, 104
  %v1476 = vpop.permute.xlu0 %1475
  %v1477 = vlaneseq
  %v1478 = vshrl.u32 %v1477, 7
  %v1479 = vsub.s32 3, %v1478
  %v1480 = vrot.slane %v1191, %v1479
  %v1481 = vmul.f32 %v1470, %v1480
  %v1482 = vmul.f32 %v1472, %v1480
  %v1483 = vmul.f32 %v1474, %v1480
  %v1484 = vmul.f32 %v1476, %v1480
  %v1485 = vadd.f32 %v1465, %v1481
  %v1486 = vadd.f32 %v1466, %v1482
  %v1487 = vadd.f32 %v1467, %v1483
  %v1488 = vadd.f32 %v1468, %v1484
  %1489 = vrot.lane.b32.xlu0 %v1393, 80
  %v1490 = vpop.permute.xlu0 %1489
  %1491 = vrot.lane.b32.xlu0 %v1394, 80
  %v1492 = vpop.permute.xlu0 %1491
  %1493 = vrot.lane.b32.xlu0 %v1395, 80
  %v1494 = vpop.permute.xlu0 %1493
  %1495 = vrot.lane.b32.xlu0 %v1396, 80
  %v1496 = vpop.permute.xlu0 %1495
  %v1497 = vlaneseq
  %v1498 = vshrl.u32 %v1497, 7
  %v1499 = vsub.s32 4, %v1498
  %v1500 = vrot.slane %v1191, %v1499
  %v1501 = vmul.f32 %v1490, %v1500
  %v1502 = vmul.f32 %v1492, %v1500
  %v1503 = vmul.f32 %v1494, %v1500
  %v1504 = vmul.f32 %v1496, %v1500
  %v1505 = vadd.f32 %v1485, %v1501
  %v1506 = vadd.f32 %v1486, %v1502
  %v1507 = vadd.f32 %v1487, %v1503
  %v1508 = vadd.f32 %v1488, %v1504
  %1509 = vrot.lane.b32.xlu0 %v1393, 56
  %v1510 = vpop.permute.xlu0 %1509
  %1511 = vrot.lane.b32.xlu0 %v1394, 56
  %v1512 = vpop.permute.xlu0 %1511
  %1513 = vrot.lane.b32.xlu0 %v1395, 56
  %v1514 = vpop.permute.xlu0 %1513
  %1515 = vrot.lane.b32.xlu0 %v1396, 56
  %v1516 = vpop.permute.xlu0 %1515
  %v1517 = vlaneseq
  %v1518 = vshrl.u32 %v1517, 7
  %v1519 = vsub.s32 5, %v1518
  %v1520 = vrot.slane %v1191, %v1519
  %v1521 = vmul.f32 %v1510, %v1520
  %v1522 = vmul.f32 %v1512, %v1520
  %v1523 = vmul.f32 %v1514, %v1520
  %v1524 = vmul.f32 %v1516, %v1520
  %v1525 = vadd.f32 %v1505, %v1521
  %v1526 = vadd.f32 %v1506, %v1522
  %v1527 = vadd.f32 %v1507, %v1523
  %v1528 = vadd.f32 %v1508, %v1524
  %v1529 = vrot.slane %v1186, 5
  %v1530 = vrot.slane %v1187, 5
  %v1531 = vrot.slane %v1188, 5
  %v1532 = vrot.slane %v1189, 5
  %vm1533 = vcmp.lt.s32.totalorder %v50, 3
  %v1534 = vsel %vm1533, %v1531, %v1532
  %v1535 = vsel %vm1533, %v1530, %v1531
  %v1536 = vsel %vm1533, %v1529, %v1530
  %v1537 = vsel %vm1533, %v1532, %v1529
  %v1538 = vadd.s32 %v63, 4294967293
  %v1539 = vadd.s32 %v64, 4294967293
  %v1540 = vadd.s32 %v65, 4294967293
  %v1541 = vadd.s32 %v66, 4294967293
  %vm1542 = vcmp.ge.s32.totalorder %v1538, 0
  %vm1543 = vcmp.ge.s32.totalorder %v1539, 0
  %vm1544 = vcmp.ge.s32.totalorder %v1540, 0
  %vm1545 = vcmp.ge.s32.totalorder %v1541, 0
  %vm1546 = vcmp.lt.s32.totalorder %v1538, 16
  %vm1547 = vcmp.lt.s32.totalorder %v1539, 16
  %vm1548 = vcmp.lt.s32.totalorder %v1540, 16
  %vm1549 = vcmp.lt.s32.totalorder %v1541, 16
  %vm1550 = vmand %vm1542, %vm1546
  %vm1551 = vmand %vm1543, %vm1547
  %vm1552 = vmand %vm1544, %vm1548
  %vm1553 = vmand %vm1545, %vm1549
  %v1554 = vsel %vm1550, 1, 0
  %v1555 = vsel %vm1551, 1, 0
  %v1556 = vsel %vm1552, 1, 0
  %v1557 = vsel %vm1553, 1, 0
  %v1558 = vcvt.s32.f32 %v1554
  %v1559 = vcvt.s32.f32 %v1555
  %v1560 = vcvt.s32.f32 %v1556
  %v1561 = vcvt.s32.f32 %v1557
  %v1562 = vmul.f32 %v1537, %v1558
  %v1563 = vmul.f32 %v1536, %v1559
  %v1564 = vmul.f32 %v1535, %v1560
  %v1565 = vmul.f32 %v1534, %v1561
  %1566 = vrot.lane.b32.xlu0 %v1562, 72
  %v1567 = vpop.permute.xlu0 %1566
  %1568 = vrot.lane.b32.xlu0 %v1563, 72
  %v1569 = vpop.permute.xlu0 %1568
  %1570 = vrot.lane.b32.xlu0 %v1564, 72
  %v1571 = vpop.permute.xlu0 %1570
  %1572 = vrot.lane.b32.xlu0 %v1565, 72
  %v1573 = vpop.permute.xlu0 %1572
  %v1574 = vlaneseq
  %v1575 = vshrl.u32 %v1574, 7
  %v1576 = vsub.s32 6, %v1575
  %v1577 = vrot.slane %v1191, %v1576
  %v1578 = vmul.f32 %v1567, %v1577
  %v1579 = vmul.f32 %v1569, %v1577
  %v1580 = vmul.f32 %v1571, %v1577
  %v1581 = vmul.f32 %v1573, %v1577
  %v1582 = vadd.f32 %v1525, %v1578
  %v1583 = vadd.f32 %v1526, %v1579
  %v1584 = vadd.f32 %v1527, %v1580
  %v1585 = vadd.f32 %v1528, %v1581
  %1586 = vrot.lane.b32.xlu0 %v1562, 48
  %v1587 = vpop.permute.xlu0 %1586
  %1588 = vrot.lane.b32.xlu0 %v1563, 48
  %v1589 = vpop.permute.xlu0 %1588
  %1590 = vrot.lane.b32.xlu0 %v1564, 48
  %v1591 = vpop.permute.xlu0 %1590
  %1592 = vrot.lane.b32.xlu0 %v1565, 48
  %v1593 = vpop.permute.xlu0 %1592
  %v1594 = vlaneseq
  %v1595 = vshrl.u32 %v1594, 7
  %v1596 = vsub.s32 7, %v1595
  %v1597 = vrot.slane %v1191, %v1596
  %v1598 = vmul.f32 %v1587, %v1597
  %v1599 = vmul.f32 %v1589, %v1597
  %v1600 = vmul.f32 %v1591, %v1597
  %v1601 = vmul.f32 %v1593, %v1597
  %v1602 = vadd.f32 %v1582, %v1598
  %v1603 = vadd.f32 %v1583, %v1599
  %v1604 = vadd.f32 %v1584, %v1600
  %v1605 = vadd.f32 %v1585, %v1601
  %1606 = vrot.lane.b32.xlu0 %v1562, 24
  %v1607 = vpop.permute.xlu0 %1606
  %1608 = vrot.lane.b32.xlu0 %v1563, 24
  %v1609 = vpop.permute.xlu0 %1608
  %1610 = vrot.lane.b32.xlu0 %v1564, 24
  %v1611 = vpop.permute.xlu0 %1610
  %1612 = vrot.lane.b32.xlu0 %v1565, 24
  %v1613 = vpop.permute.xlu0 %1612
  %v1614 = vlaneseq
  %v1615 = vshrl.u32 %v1614, 7
  %v1616 = vsub.s32 0, %v1615
  %v1617 = vrot.slane %v1192, %v1616
  %v1618 = vmul.f32 %v1607, %v1617
  %v1619 = vmul.f32 %v1609, %v1617
  %v1620 = vmul.f32 %v1611, %v1617
  %v1621 = vmul.f32 %v1613, %v1617
  %v1622 = vadd.f32 %v1602, %v1618
  %v1623 = vadd.f32 %v1603, %v1619
  %v1624 = vadd.f32 %v1604, %v1620
  %v1625 = vadd.f32 %v1605, %v1621
  %v1626 = vlaneseq
  %v1627 = vshrl.u32 %v1626, 7
  %v1628 = vsub.s32 1, %v1627
  %v1629 = vrot.slane %v1192, %v1628
  %v1630 = vmul.f32 %v1562, %v1629
  %v1631 = vmul.f32 %v1563, %v1629
  %v1632 = vmul.f32 %v1564, %v1629
  %v1633 = vmul.f32 %v1565, %v1629
  %v1634 = vadd.f32 %v1622, %v1630
  %v1635 = vadd.f32 %v1623, %v1631
  %v1636 = vadd.f32 %v1624, %v1632
  %v1637 = vadd.f32 %v1625, %v1633
  %1638 = vrot.lane.b32.xlu0 %v1562, 104
  %v1639 = vpop.permute.xlu0 %1638
  %1640 = vrot.lane.b32.xlu0 %v1563, 104
  %v1641 = vpop.permute.xlu0 %1640
  %1642 = vrot.lane.b32.xlu0 %v1564, 104
  %v1643 = vpop.permute.xlu0 %1642
  %1644 = vrot.lane.b32.xlu0 %v1565, 104
  %v1645 = vpop.permute.xlu0 %1644
  %v1646 = vlaneseq
  %v1647 = vshrl.u32 %v1646, 7
  %v1648 = vsub.s32 2, %v1647
  %v1649 = vrot.slane %v1192, %v1648
  %v1650 = vmul.f32 %v1639, %v1649
  %v1651 = vmul.f32 %v1641, %v1649
  %v1652 = vmul.f32 %v1643, %v1649
  %v1653 = vmul.f32 %v1645, %v1649
  %v1654 = vadd.f32 %v1634, %v1650
  %v1655 = vadd.f32 %v1635, %v1651
  %v1656 = vadd.f32 %v1636, %v1652
  %v1657 = vadd.f32 %v1637, %v1653
  %1658 = vrot.lane.b32.xlu0 %v1562, 80
  %v1659 = vpop.permute.xlu0 %1658
  %1660 = vrot.lane.b32.xlu0 %v1563, 80
  %v1661 = vpop.permute.xlu0 %1660
  %1662 = vrot.lane.b32.xlu0 %v1564, 80
  %v1663 = vpop.permute.xlu0 %1662
  %1664 = vrot.lane.b32.xlu0 %v1565, 80
  %v1665 = vpop.permute.xlu0 %1664
  %v1666 = vlaneseq
  %v1667 = vshrl.u32 %v1666, 7
  %v1668 = vsub.s32 3, %v1667
  %v1669 = vrot.slane %v1192, %v1668
  %v1670 = vmul.f32 %v1659, %v1669
  %v1671 = vmul.f32 %v1661, %v1669
  %v1672 = vmul.f32 %v1663, %v1669
  %v1673 = vmul.f32 %v1665, %v1669
  %v1674 = vadd.f32 %v1654, %v1670
  %v1675 = vadd.f32 %v1655, %v1671
  %v1676 = vadd.f32 %v1656, %v1672
  %v1677 = vadd.f32 %v1657, %v1673
  %1678 = vrot.lane.b32.xlu0 %v1562, 56
  %v1679 = vpop.permute.xlu0 %1678
  %1680 = vrot.lane.b32.xlu0 %v1563, 56
  %v1681 = vpop.permute.xlu0 %1680
  %1682 = vrot.lane.b32.xlu0 %v1564, 56
  %v1683 = vpop.permute.xlu0 %1682
  %1684 = vrot.lane.b32.xlu0 %v1565, 56
  %v1685 = vpop.permute.xlu0 %1684
  %v1686 = vlaneseq
  %v1687 = vshrl.u32 %v1686, 7
  %v1688 = vsub.s32 4, %v1687
  %v1689 = vrot.slane %v1192, %v1688
  %v1690 = vmul.f32 %v1679, %v1689
  %v1691 = vmul.f32 %v1681, %v1689
  %v1692 = vmul.f32 %v1683, %v1689
  %v1693 = vmul.f32 %v1685, %v1689
  %v1694 = vadd.f32 %v1674, %v1690
  %v1695 = vadd.f32 %v1675, %v1691
  %v1696 = vadd.f32 %v1676, %v1692
  %v1697 = vadd.f32 %v1677, %v1693
  %1698 = vrot.lane.b32.xlu0 %v1186, 72
  %v1699 = vpop.permute.xlu0 %1698
  %1700 = vrot.lane.b32.xlu0 %v1187, 72
  %v1701 = vpop.permute.xlu0 %1700
  %1702 = vrot.lane.b32.xlu0 %v1188, 72
  %v1703 = vpop.permute.xlu0 %1702
  %1704 = vrot.lane.b32.xlu0 %v1189, 72
  %v1705 = vpop.permute.xlu0 %1704
  %v1706 = vlaneseq
  %v1707 = vshrl.u32 %v1706, 7
  %v1708 = vsub.s32 5, %v1707
  %v1709 = vrot.slane %v1192, %v1708
  %v1710 = vmul.f32 %v1699, %v1709
  %v1711 = vmul.f32 %v1701, %v1709
  %v1712 = vmul.f32 %v1703, %v1709
  %v1713 = vmul.f32 %v1705, %v1709
  %v1714 = vadd.f32 %v1694, %v1710
  %v1715 = vadd.f32 %v1695, %v1711
  %v1716 = vadd.f32 %v1696, %v1712
  %v1717 = vadd.f32 %v1697, %v1713
  %1718 = vrot.lane.b32.xlu0 %v1186, 48
  %v1719 = vpop.permute.xlu0 %1718
  %1720 = vrot.lane.b32.xlu0 %v1187, 48
  %v1721 = vpop.permute.xlu0 %1720
  %1722 = vrot.lane.b32.xlu0 %v1188, 48
  %v1723 = vpop.permute.xlu0 %1722
  %1724 = vrot.lane.b32.xlu0 %v1189, 48
  %v1725 = vpop.permute.xlu0 %1724
  %v1726 = vlaneseq
  %v1727 = vshrl.u32 %v1726, 7
  %v1728 = vsub.s32 6, %v1727
  %v1729 = vrot.slane %v1192, %v1728
  %v1730 = vmul.f32 %v1719, %v1729
  %v1731 = vmul.f32 %v1721, %v1729
  %v1732 = vmul.f32 %v1723, %v1729
  %v1733 = vmul.f32 %v1725, %v1729
  %v1734 = vadd.f32 %v1714, %v1730
  %v1735 = vadd.f32 %v1715, %v1731
  %v1736 = vadd.f32 %v1716, %v1732
  %v1737 = vadd.f32 %v1717, %v1733
  %1738 = vrot.lane.b32.xlu0 %v1186, 24
  %v1739 = vpop.permute.xlu0 %1738
  %1740 = vrot.lane.b32.xlu0 %v1187, 24
  %v1741 = vpop.permute.xlu0 %1740
  %1742 = vrot.lane.b32.xlu0 %v1188, 24
  %v1743 = vpop.permute.xlu0 %1742
  %1744 = vrot.lane.b32.xlu0 %v1189, 24
  %v1745 = vpop.permute.xlu0 %1744
  %v1746 = vlaneseq
  %v1747 = vshrl.u32 %v1746, 7
  %v1748 = vsub.s32 7, %v1747
  %v1749 = vrot.slane %v1192, %v1748
  %v1750 = vmul.f32 %v1739, %v1749
  %v1751 = vmul.f32 %v1741, %v1749
  %v1752 = vmul.f32 %v1743, %v1749
  %v1753 = vmul.f32 %v1745, %v1749
  %v1754 = vadd.f32 %v1734, %v1750
  %v1755 = vadd.f32 %v1735, %v1751
  %v1756 = vadd.f32 %v1736, %v1752
  %v1757 = vadd.f32 %v1737, %v1753
  %v1758 = vlaneseq
  %v1759 = vshrl.u32 %v1758, 7
  %v1760 = vsub.s32 0, %v1759
  %v1761 = vrot.slane %v1193, %v1760
  %v1762 = vmul.f32 %v1186, %v1761
  %v1763 = vmul.f32 %v1187, %v1761
  %v1764 = vmul.f32 %v1188, %v1761
  %v1765 = vmul.f32 %v1189, %v1761
  %v1766 = vadd.f32 %v1754, %v1762
  %v1767 = vadd.f32 %v1755, %v1763
  %v1768 = vadd.f32 %v1756, %v1764
  %v1769 = vadd.f32 %v1757, %v1765
  %1770 = vrot.lane.b32.xlu0 %v1186, 104
  %v1771 = vpop.permute.xlu0 %1770
  %1772 = vrot.lane.b32.xlu0 %v1187, 104
  %v1773 = vpop.permute.xlu0 %1772
  %1774 = vrot.lane.b32.xlu0 %v1188, 104
  %v1775 = vpop.permute.xlu0 %1774
  %1776 = vrot.lane.b32.xlu0 %v1189, 104
  %v1777 = vpop.permute.xlu0 %1776
  %v1778 = vlaneseq
  %v1779 = vshrl.u32 %v1778, 7
  %v1780 = vsub.s32 1, %v1779
  %v1781 = vrot.slane %v1193, %v1780
  %v1782 = vmul.f32 %v1771, %v1781
  %v1783 = vmul.f32 %v1773, %v1781
  %v1784 = vmul.f32 %v1775, %v1781
  %v1785 = vmul.f32 %v1777, %v1781
  %v1786 = vadd.f32 %v1766, %v1782
  %v1787 = vadd.f32 %v1767, %v1783
  %v1788 = vadd.f32 %v1768, %v1784
  %v1789 = vadd.f32 %v1769, %v1785
  %1790 = vrot.lane.b32.xlu0 %v1186, 80
  %v1791 = vpop.permute.xlu0 %1790
  %1792 = vrot.lane.b32.xlu0 %v1187, 80
  %v1793 = vpop.permute.xlu0 %1792
  %1794 = vrot.lane.b32.xlu0 %v1188, 80
  %v1795 = vpop.permute.xlu0 %1794
  %1796 = vrot.lane.b32.xlu0 %v1189, 80
  %v1797 = vpop.permute.xlu0 %1796
  %v1798 = vlaneseq
  %v1799 = vshrl.u32 %v1798, 7
  %v1800 = vsub.s32 2, %v1799
  %v1801 = vrot.slane %v1193, %v1800
  %v1802 = vmul.f32 %v1791, %v1801
  %v1803 = vmul.f32 %v1793, %v1801
  %v1804 = vmul.f32 %v1795, %v1801
  %v1805 = vmul.f32 %v1797, %v1801
  %v1806 = vadd.f32 %v1786, %v1802
  %v1807 = vadd.f32 %v1787, %v1803
  %v1808 = vadd.f32 %v1788, %v1804
  %v1809 = vadd.f32 %v1789, %v1805
  %1810 = vrot.lane.b32.xlu0 %v1186, 56
  %v1811 = vpop.permute.xlu0 %1810
  %1812 = vrot.lane.b32.xlu0 %v1187, 56
  %v1813 = vpop.permute.xlu0 %1812
  %1814 = vrot.lane.b32.xlu0 %v1188, 56
  %v1815 = vpop.permute.xlu0 %1814
  %1816 = vrot.lane.b32.xlu0 %v1189, 56
  %v1817 = vpop.permute.xlu0 %1816
  %v1818 = vlaneseq
  %v1819 = vshrl.u32 %v1818, 7
  %v1820 = vsub.s32 3, %v1819
  %v1821 = vrot.slane %v1193, %v1820
  %v1822 = vmul.f32 %v1811, %v1821
  %v1823 = vmul.f32 %v1813, %v1821
  %v1824 = vmul.f32 %v1815, %v1821
  %v1825 = vmul.f32 %v1817, %v1821
  %v1826 = vadd.f32 %v1806, %v1822
  %v1827 = vadd.f32 %v1807, %v1823
  %v1828 = vadd.f32 %v1808, %v1824
  %v1829 = vadd.f32 %v1809, %v1825
  %v1830 = vrot.slane %v1186, 3
  %v1831 = vrot.slane %v1187, 3
  %v1832 = vrot.slane %v1188, 3
  %v1833 = vrot.slane %v1189, 3
  %vm1834 = vcmp.lt.s32.totalorder %v50, 5
  %v1835 = vsel %vm1834, %v1832, %v1833
  %v1836 = vsel %vm1834, %v1831, %v1832
  %v1837 = vsel %vm1834, %v1830, %v1831
  %v1838 = vsel %vm1834, %v1833, %v1830
  %v1839 = vadd.s32 %v63, 3
  %v1840 = vadd.s32 %v64, 3
  %v1841 = vadd.s32 %v65, 3
  %v1842 = vadd.s32 %v66, 3
  %vm1843 = vcmp.ge.s32.totalorder %v1839, 0
  %vm1844 = vcmp.ge.s32.totalorder %v1840, 0
  %vm1845 = vcmp.ge.s32.totalorder %v1841, 0
  %vm1846 = vcmp.ge.s32.totalorder %v1842, 0
  %vm1847 = vcmp.lt.s32.totalorder %v1839, 16
  %vm1848 = vcmp.lt.s32.totalorder %v1840, 16
  %vm1849 = vcmp.lt.s32.totalorder %v1841, 16
  %vm1850 = vcmp.lt.s32.totalorder %v1842, 16
  %vm1851 = vmand %vm1843, %vm1847
  %vm1852 = vmand %vm1844, %vm1848
  %vm1853 = vmand %vm1845, %vm1849
  %vm1854 = vmand %vm1846, %vm1850
  %v1855 = vsel %vm1851, 1, 0
  %v1856 = vsel %vm1852, 1, 0
  %v1857 = vsel %vm1853, 1, 0
  %v1858 = vsel %vm1854, 1, 0
  %v1859 = vcvt.s32.f32 %v1855
  %v1860 = vcvt.s32.f32 %v1856
  %v1861 = vcvt.s32.f32 %v1857
  %v1862 = vcvt.s32.f32 %v1858
  %v1863 = vmul.f32 %v1837, %v1859
  %v1864 = vmul.f32 %v1836, %v1860
  %v1865 = vmul.f32 %v1835, %v1861
  %v1866 = vmul.f32 %v1838, %v1862
  %1867 = vrot.lane.b32.xlu0 %v1863, 72
  %v1868 = vpop.permute.xlu0 %1867
  %1869 = vrot.lane.b32.xlu0 %v1864, 72
  %v1870 = vpop.permute.xlu0 %1869
  %1871 = vrot.lane.b32.xlu0 %v1865, 72
  %v1872 = vpop.permute.xlu0 %1871
  %1873 = vrot.lane.b32.xlu0 %v1866, 72
  %v1874 = vpop.permute.xlu0 %1873
  %v1875 = vlaneseq
  %v1876 = vshrl.u32 %v1875, 7
  %v1877 = vsub.s32 4, %v1876
  %v1878 = vrot.slane %v1193, %v1877
  %v1879 = vmul.f32 %v1868, %v1878
  %v1880 = vmul.f32 %v1870, %v1878
  %v1881 = vmul.f32 %v1872, %v1878
  %v1882 = vmul.f32 %v1874, %v1878
  %v1883 = vadd.f32 %v1826, %v1879
  %v1884 = vadd.f32 %v1827, %v1880
  %v1885 = vadd.f32 %v1828, %v1881
  %v1886 = vadd.f32 %v1829, %v1882
  %1887 = vrot.lane.b32.xlu0 %v1863, 48
  %v1888 = vpop.permute.xlu0 %1887
  %1889 = vrot.lane.b32.xlu0 %v1864, 48
  %v1890 = vpop.permute.xlu0 %1889
  %1891 = vrot.lane.b32.xlu0 %v1865, 48
  %v1892 = vpop.permute.xlu0 %1891
  %1893 = vrot.lane.b32.xlu0 %v1866, 48
  %v1894 = vpop.permute.xlu0 %1893
  %v1895 = vlaneseq
  %v1896 = vshrl.u32 %v1895, 7
  %v1897 = vsub.s32 5, %v1896
  %v1898 = vrot.slane %v1193, %v1897
  %v1899 = vmul.f32 %v1888, %v1898
  %v1900 = vmul.f32 %v1890, %v1898
  %v1901 = vmul.f32 %v1892, %v1898
  %v1902 = vmul.f32 %v1894, %v1898
  %v1903 = vadd.f32 %v1883, %v1899
  %v1904 = vadd.f32 %v1884, %v1900
  %v1905 = vadd.f32 %v1885, %v1901
  %v1906 = vadd.f32 %v1886, %v1902
  %1907 = vrot.lane.b32.xlu0 %v1863, 24
  %v1908 = vpop.permute.xlu0 %1907
  %1909 = vrot.lane.b32.xlu0 %v1864, 24
  %v1910 = vpop.permute.xlu0 %1909
  %1911 = vrot.lane.b32.xlu0 %v1865, 24
  %v1912 = vpop.permute.xlu0 %1911
  %1913 = vrot.lane.b32.xlu0 %v1866, 24
  %v1914 = vpop.permute.xlu0 %1913
  %v1915 = vlaneseq
  %v1916 = vshrl.u32 %v1915, 7
  %v1917 = vsub.s32 6, %v1916
  %v1918 = vrot.slane %v1193, %v1917
  %v1919 = vmul.f32 %v1908, %v1918
  %v1920 = vmul.f32 %v1910, %v1918
  %v1921 = vmul.f32 %v1912, %v1918
  %v1922 = vmul.f32 %v1914, %v1918
  %v1923 = vadd.f32 %v1903, %v1919
  %v1924 = vadd.f32 %v1904, %v1920
  %v1925 = vadd.f32 %v1905, %v1921
  %v1926 = vadd.f32 %v1906, %v1922
  %v1927 = vlaneseq
  %v1928 = vshrl.u32 %v1927, 7
  %v1929 = vsub.s32 7, %v1928
  %v1930 = vrot.slane %v1193, %v1929
  %v1931 = vmul.f32 %v1863, %v1930
  %v1932 = vmul.f32 %v1864, %v1930
  %v1933 = vmul.f32 %v1865, %v1930
  %v1934 = vmul.f32 %v1866, %v1930
  %v1935 = vadd.f32 %v1923, %v1931
  %v1936 = vadd.f32 %v1924, %v1932
  %v1937 = vadd.f32 %v1925, %v1933
  %v1938 = vadd.f32 %v1926, %v1934
  %1939 = vrot.lane.b32.xlu0 %v1863, 104
  %v1940 = vpop.permute.xlu0 %1939
  %1941 = vrot.lane.b32.xlu0 %v1864, 104
  %v1942 = vpop.permute.xlu0 %1941
  %1943 = vrot.lane.b32.xlu0 %v1865, 104
  %v1944 = vpop.permute.xlu0 %1943
  %1945 = vrot.lane.b32.xlu0 %v1866, 104
  %v1946 = vpop.permute.xlu0 %1945
  %v1947 = vlaneseq
  %v1948 = vshrl.u32 %v1947, 7
  %v1949 = vsub.s32 0, %v1948
  %v1950 = vrot.slane %v1194, %v1949
  %v1951 = vmul.f32 %v1940, %v1950
  %v1952 = vmul.f32 %v1942, %v1950
  %v1953 = vmul.f32 %v1944, %v1950
  %v1954 = vmul.f32 %v1946, %v1950
  %v1955 = vadd.f32 %v1935, %v1951
  %v1956 = vadd.f32 %v1936, %v1952
  %v1957 = vadd.f32 %v1937, %v1953
  %v1958 = vadd.f32 %v1938, %v1954
  %1959 = vrot.lane.b32.xlu0 %v1863, 80
  %v1960 = vpop.permute.xlu0 %1959
  %1961 = vrot.lane.b32.xlu0 %v1864, 80
  %v1962 = vpop.permute.xlu0 %1961
  %1963 = vrot.lane.b32.xlu0 %v1865, 80
  %v1964 = vpop.permute.xlu0 %1963
  %1965 = vrot.lane.b32.xlu0 %v1866, 80
  %v1966 = vpop.permute.xlu0 %1965
  %v1967 = vlaneseq
  %v1968 = vshrl.u32 %v1967, 7
  %v1969 = vsub.s32 1, %v1968
  %v1970 = vrot.slane %v1194, %v1969
  %v1971 = vmul.f32 %v1960, %v1970
  %v1972 = vmul.f32 %v1962, %v1970
  %v1973 = vmul.f32 %v1964, %v1970
  %v1974 = vmul.f32 %v1966, %v1970
  %v1975 = vadd.f32 %v1955, %v1971
  %v1976 = vadd.f32 %v1956, %v1972
  %v1977 = vadd.f32 %v1957, %v1973
  %v1978 = vadd.f32 %v1958, %v1974
  %1979 = vrot.lane.b32.xlu0 %v1863, 56
  %v1980 = vpop.permute.xlu0 %1979
  %1981 = vrot.lane.b32.xlu0 %v1864, 56
  %v1982 = vpop.permute.xlu0 %1981
  %1983 = vrot.lane.b32.xlu0 %v1865, 56
  %v1984 = vpop.permute.xlu0 %1983
  %1985 = vrot.lane.b32.xlu0 %v1866, 56
  %v1986 = vpop.permute.xlu0 %1985
  %v1987 = vlaneseq
  %v1988 = vshrl.u32 %v1987, 7
  %v1989 = vsub.s32 2, %v1988
  %v1990 = vrot.slane %v1194, %v1989
  %v1991 = vmul.f32 %v1980, %v1990
  %v1992 = vmul.f32 %v1982, %v1990
  %v1993 = vmul.f32 %v1984, %v1990
  %v1994 = vmul.f32 %v1986, %v1990
  %v1995 = vadd.f32 %v1975, %v1991
  %v1996 = vadd.f32 %v1976, %v1992
  %v1997 = vadd.f32 %v1977, %v1993
  %v1998 = vadd.f32 %v1978, %v1994
  %v1999 = vrot.slane %v1186, 6
  %v2000 = vrot.slane %v1187, 6
  %v2001 = vrot.slane %v1188, 6
  %v2002 = vrot.slane %v1189, 6
  %v2003 = vsel %vm583, %v2001, %v2002
  %v2004 = vsel %vm583, %v2000, %v2001
  %v2005 = vsel %vm583, %v1999, %v2000
  %v2006 = vsel %vm583, %v2002, %v1999
  %v2007 = vadd.s32 %v63, 6
  %v2008 = vadd.s32 %v64, 6
  %v2009 = vadd.s32 %v65, 6
  %v2010 = vadd.s32 %v66, 6
  %vm2011 = vcmp.ge.s32.totalorder %v2007, 0
  %vm2012 = vcmp.ge.s32.totalorder %v2008, 0
  %vm2013 = vcmp.ge.s32.totalorder %v2009, 0
  %vm2014 = vcmp.ge.s32.totalorder %v2010, 0
  %vm2015 = vcmp.lt.s32.totalorder %v2007, 16
  %vm2016 = vcmp.lt.s32.totalorder %v2008, 16
  %vm2017 = vcmp.lt.s32.totalorder %v2009, 16
  %vm2018 = vcmp.lt.s32.totalorder %v2010, 16
  %vm2019 = vmand %vm2011, %vm2015
  %vm2020 = vmand %vm2012, %vm2016
  %vm2021 = vmand %vm2013, %vm2017
  %vm2022 = vmand %vm2014, %vm2018
  %v2023 = vsel %vm2019, 1, 0
  %v2024 = vsel %vm2020, 1, 0
  %v2025 = vsel %vm2021, 1, 0
  %v2026 = vsel %vm2022, 1, 0
  %v2027 = vcvt.s32.f32 %v2023
  %v2028 = vcvt.s32.f32 %v2024
  %v2029 = vcvt.s32.f32 %v2025
  %v2030 = vcvt.s32.f32 %v2026
  %v2031 = vmul.f32 %v2005, %v2027
  %v2032 = vmul.f32 %v2004, %v2028
  %v2033 = vmul.f32 %v2003, %v2029
  %v2034 = vmul.f32 %v2006, %v2030
  %2035 = vrot.lane.b32.xlu0 %v2031, 72
  %v2036 = vpop.permute.xlu0 %2035
  %2037 = vrot.lane.b32.xlu0 %v2032, 72
  %v2038 = vpop.permute.xlu0 %2037
  %2039 = vrot.lane.b32.xlu0 %v2033, 72
  %v2040 = vpop.permute.xlu0 %2039
  %2041 = vrot.lane.b32.xlu0 %v2034, 72
  %v2042 = vpop.permute.xlu0 %2041
  %v2043 = vlaneseq
  %v2044 = vshrl.u32 %v2043, 7
  %v2045 = vsub.s32 3, %v2044
  %v2046 = vrot.slane %v1194, %v2045
  %v2047 = vmul.f32 %v2036, %v2046
  %v2048 = vmul.f32 %v2038, %v2046
  %v2049 = vmul.f32 %v2040, %v2046
  %v2050 = vmul.f32 %v2042, %v2046
  %v2051 = vadd.f32 %v1995, %v2047
  %v2052 = vadd.f32 %v1996, %v2048
  %v2053 = vadd.f32 %v1997, %v2049
  %v2054 = vadd.f32 %v1998, %v2050
  %2055 = vrot.lane.b32.xlu0 %v2031, 48
  %v2056 = vpop.permute.xlu0 %2055
  %2057 = vrot.lane.b32.xlu0 %v2032, 48
  %v2058 = vpop.permute.xlu0 %2057
  %2059 = vrot.lane.b32.xlu0 %v2033, 48
  %v2060 = vpop.permute.xlu0 %2059
  %2061 = vrot.lane.b32.xlu0 %v2034, 48
  %v2062 = vpop.permute.xlu0 %2061
  %v2063 = vlaneseq
  %v2064 = vshrl.u32 %v2063, 7
  %v2065 = vsub.s32 4, %v2064
  %v2066 = vrot.slane %v1194, %v2065
  %v2067 = vmul.f32 %v2056, %v2066
  %v2068 = vmul.f32 %v2058, %v2066
  %v2069 = vmul.f32 %v2060, %v2066
  %v2070 = vmul.f32 %v2062, %v2066
  %v2071 = vadd.f32 %v2051, %v2067
  %v2072 = vadd.f32 %v2052, %v2068
  %v2073 = vadd.f32 %v2053, %v2069
  %v2074 = vadd.f32 %v2054, %v2070
  %2075 = vrot.lane.b32.xlu0 %v2031, 24
  %v2076 = vpop.permute.xlu0 %2075
  %2077 = vrot.lane.b32.xlu0 %v2032, 24
  %v2078 = vpop.permute.xlu0 %2077
  %2079 = vrot.lane.b32.xlu0 %v2033, 24
  %v2080 = vpop.permute.xlu0 %2079
  %2081 = vrot.lane.b32.xlu0 %v2034, 24
  %v2082 = vpop.permute.xlu0 %2081
  %v2083 = vlaneseq
  %v2084 = vshrl.u32 %v2083, 7
  %v2085 = vsub.s32 5, %v2084
  %v2086 = vrot.slane %v1194, %v2085
  %v2087 = vmul.f32 %v2076, %v2086
  %v2088 = vmul.f32 %v2078, %v2086
  %v2089 = vmul.f32 %v2080, %v2086
  %v2090 = vmul.f32 %v2082, %v2086
  %v2091 = vadd.f32 %v2071, %v2087
  %v2092 = vadd.f32 %v2072, %v2088
  %v2093 = vadd.f32 %v2073, %v2089
  %v2094 = vadd.f32 %v2074, %v2090
  %v2095 = vlaneseq
  %v2096 = vshrl.u32 %v2095, 7
  %v2097 = vsub.s32 6, %v2096
  %v2098 = vrot.slane %v1194, %v2097
  %v2099 = vmul.f32 %v2031, %v2098
  %v2100 = vmul.f32 %v2032, %v2098
  %v2101 = vmul.f32 %v2033, %v2098
  %v2102 = vmul.f32 %v2034, %v2098
  %v2103 = vadd.f32 %v2091, %v2099
  %v2104 = vadd.f32 %v2092, %v2100
  %v2105 = vadd.f32 %v2093, %v2101
  %v2106 = vadd.f32 %v2094, %v2102
  %2107 = vrot.lane.b32.xlu0 %v2031, 104
  %v2108 = vpop.permute.xlu0 %2107
  %2109 = vrot.lane.b32.xlu0 %v2032, 104
  %v2110 = vpop.permute.xlu0 %2109
  %2111 = vrot.lane.b32.xlu0 %v2033, 104
  %v2112 = vpop.permute.xlu0 %2111
  %2113 = vrot.lane.b32.xlu0 %v2034, 104
  %v2114 = vpop.permute.xlu0 %2113
  %v2115 = vlaneseq
  %v2116 = vshrl.u32 %v2115, 7
  %v2117 = vsub.s32 7, %v2116
  %v2118 = vrot.slane %v1194, %v2117
  %v2119 = vmul.f32 %v2108, %v2118
  %v2120 = vmul.f32 %v2110, %v2118
  %v2121 = vmul.f32 %v2112, %v2118
  %v2122 = vmul.f32 %v2114, %v2118
  %v2123 = vadd.f32 %v2103, %v2119
  %v2124 = vadd.f32 %v2104, %v2120
  %v2125 = vadd.f32 %v2105, %v2121
  %v2126 = vadd.f32 %v2106, %v2122
  %2127 = vrot.lane.b32.xlu0 %v2031, 80
  %v2128 = vpop.permute.xlu0 %2127
  %2129 = vrot.lane.b32.xlu0 %v2032, 80
  %v2130 = vpop.permute.xlu0 %2129
  %2131 = vrot.lane.b32.xlu0 %v2033, 80
  %v2132 = vpop.permute.xlu0 %2131
  %2133 = vrot.lane.b32.xlu0 %v2034, 80
  %v2134 = vpop.permute.xlu0 %2133
  %v2135 = vlaneseq
  %v2136 = vshrl.u32 %v2135, 7
  %v2137 = vsub.s32 0, %v2136
  %v2138 = vrot.slane %v1195, %v2137
  %v2139 = vmul.f32 %v2128, %v2138
  %v2140 = vmul.f32 %v2130, %v2138
  %v2141 = vmul.f32 %v2132, %v2138
  %v2142 = vmul.f32 %v2134, %v2138
  %v2143 = vadd.f32 %v2123, %v2139
  %v2144 = vadd.f32 %v2124, %v2140
  %v2145 = vadd.f32 %v2125, %v2141
  %v2146 = vadd.f32 %v2126, %v2142
  %2147 = vrot.lane.b32.xlu0 %v2031, 56
  %v2148 = vpop.permute.xlu0 %2147
  %2149 = vrot.lane.b32.xlu0 %v2032, 56
  %v2150 = vpop.permute.xlu0 %2149
  %2151 = vrot.lane.b32.xlu0 %v2033, 56
  %v2152 = vpop.permute.xlu0 %2151
  %2153 = vrot.lane.b32.xlu0 %v2034, 56
  %v2154 = vpop.permute.xlu0 %2153
  %v2155 = vlaneseq
  %v2156 = vshrl.u32 %v2155, 7
  %v2157 = vsub.s32 1, %v2156
  %v2158 = vrot.slane %v1195, %v2157
  %v2159 = vmul.f32 %v2148, %v2158
  %v2160 = vmul.f32 %v2150, %v2158
  %v2161 = vmul.f32 %v2152, %v2158
  %v2162 = vmul.f32 %v2154, %v2158
  %v2163 = vadd.f32 %v2143, %v2159
  %v2164 = vadd.f32 %v2144, %v2160
  %v2165 = vadd.f32 %v2145, %v2161
  %v2166 = vadd.f32 %v2146, %v2162
  %v2167 = vrot.slane %v1186, 1
  %v2168 = vrot.slane %v1187, 1
  %v2169 = vrot.slane %v1188, 1
  %v2170 = vrot.slane %v1189, 1
  %v2171 = vsel %vm96, %v2169, %v2170
  %v2172 = vsel %vm96, %v2168, %v2169
  %v2173 = vsel %vm96, %v2167, %v2168
  %v2174 = vsel %vm96, %v2170, %v2167
  %v2175 = vadd.s32 %v63, 9
  %v2176 = vadd.s32 %v64, 9
  %v2177 = vadd.s32 %v65, 9
  %v2178 = vadd.s32 %v66, 9
  %vm2179 = vcmp.ge.s32.totalorder %v2175, 0
  %vm2180 = vcmp.ge.s32.totalorder %v2176, 0
  %vm2181 = vcmp.ge.s32.totalorder %v2177, 0
  %vm2182 = vcmp.ge.s32.totalorder %v2178, 0
  %vm2183 = vcmp.lt.s32.totalorder %v2175, 16
  %vm2184 = vcmp.lt.s32.totalorder %v2176, 16
  %vm2185 = vcmp.lt.s32.totalorder %v2177, 16
  %vm2186 = vcmp.lt.s32.totalorder %v2178, 16
  %vm2187 = vmand %vm2179, %vm2183
  %vm2188 = vmand %vm2180, %vm2184
  %vm2189 = vmand %vm2181, %vm2185
  %vm2190 = vmand %vm2182, %vm2186
  %v2191 = vsel %vm2187, 1, 0
  %v2192 = vsel %vm2188, 1, 0
  %v2193 = vsel %vm2189, 1, 0
  %v2194 = vsel %vm2190, 1, 0
  %v2195 = vcvt.s32.f32 %v2191
  %v2196 = vcvt.s32.f32 %v2192
  %v2197 = vcvt.s32.f32 %v2193
  %v2198 = vcvt.s32.f32 %v2194
  %v2199 = vmul.f32 %v2172, %v2195
  %v2200 = vmul.f32 %v2171, %v2196
  %v2201 = vmul.f32 %v2174, %v2197
  %v2202 = vmul.f32 %v2173, %v2198
  %2203 = vrot.lane.b32.xlu0 %v2199, 72
  %v2204 = vpop.permute.xlu0 %2203
  %2205 = vrot.lane.b32.xlu0 %v2200, 72
  %v2206 = vpop.permute.xlu0 %2205
  %2207 = vrot.lane.b32.xlu0 %v2201, 72
  %v2208 = vpop.permute.xlu0 %2207
  %2209 = vrot.lane.b32.xlu0 %v2202, 72
  %v2210 = vpop.permute.xlu0 %2209
  %v2211 = vlaneseq
  %v2212 = vshrl.u32 %v2211, 7
  %v2213 = vsub.s32 2, %v2212
  %v2214 = vrot.slane %v1195, %v2213
  %v2215 = vmul.f32 %v2204, %v2214
  %v2216 = vmul.f32 %v2206, %v2214
  %v2217 = vmul.f32 %v2208, %v2214
  %v2218 = vmul.f32 %v2210, %v2214
  %v2219 = vadd.f32 %v2163, %v2215
  %v2220 = vadd.f32 %v2164, %v2216
  %v2221 = vadd.f32 %v2165, %v2217
  %v2222 = vadd.f32 %v2166, %v2218
  %2223 = vrot.lane.b32.xlu0 %v2199, 48
  %v2224 = vpop.permute.xlu0 %2223
  %2225 = vrot.lane.b32.xlu0 %v2200, 48
  %v2226 = vpop.permute.xlu0 %2225
  %2227 = vrot.lane.b32.xlu0 %v2201, 48
  %v2228 = vpop.permute.xlu0 %2227
  %2229 = vrot.lane.b32.xlu0 %v2202, 48
  %v2230 = vpop.permute.xlu0 %2229
  %v2231 = vlaneseq
  %v2232 = vshrl.u32 %v2231, 7
  %v2233 = vsub.s32 3, %v2232
  %v2234 = vrot.slane %v1195, %v2233
  %v2235 = vmul.f32 %v2224, %v2234
  %v2236 = vmul.f32 %v2226, %v2234
  %v2237 = vmul.f32 %v2228, %v2234
  %v2238 = vmul.f32 %v2230, %v2234
  %v2239 = vadd.f32 %v2219, %v2235
  %v2240 = vadd.f32 %v2220, %v2236
  %v2241 = vadd.f32 %v2221, %v2237
  %v2242 = vadd.f32 %v2222, %v2238
  %2243 = vrot.lane.b32.xlu0 %v2199, 24
  %v2244 = vpop.permute.xlu0 %2243
  %2245 = vrot.lane.b32.xlu0 %v2200, 24
  %v2246 = vpop.permute.xlu0 %2245
  %2247 = vrot.lane.b32.xlu0 %v2201, 24
  %v2248 = vpop.permute.xlu0 %2247
  %2249 = vrot.lane.b32.xlu0 %v2202, 24
  %v2250 = vpop.permute.xlu0 %2249
  %v2251 = vlaneseq
  %v2252 = vshrl.u32 %v2251, 7
  %v2253 = vsub.s32 4, %v2252
  %v2254 = vrot.slane %v1195, %v2253
  %v2255 = vmul.f32 %v2244, %v2254
  %v2256 = vmul.f32 %v2246, %v2254
  %v2257 = vmul.f32 %v2248, %v2254
  %v2258 = vmul.f32 %v2250, %v2254
  %v2259 = vadd.f32 %v2239, %v2255
  %v2260 = vadd.f32 %v2240, %v2256
  %v2261 = vadd.f32 %v2241, %v2257
  %v2262 = vadd.f32 %v2242, %v2258
  %v2263 = vlaneseq
  %v2264 = vshrl.u32 %v2263, 7
  %v2265 = vsub.s32 5, %v2264
  %v2266 = vrot.slane %v1195, %v2265
  %v2267 = vmul.f32 %v2199, %v2266
  %v2268 = vmul.f32 %v2200, %v2266
  %v2269 = vmul.f32 %v2201, %v2266
  %v2270 = vmul.f32 %v2202, %v2266
  %v2271 = vadd.f32 %v2259, %v2267
  %v2272 = vadd.f32 %v2260, %v2268
  %v2273 = vadd.f32 %v2261, %v2269
  %v2274 = vadd.f32 %v2262, %v2270
  %2275 = vrot.lane.b32.xlu0 %v2199, 104
  %v2276 = vpop.permute.xlu0 %2275
  %2277 = vrot.lane.b32.xlu0 %v2200, 104
  %v2278 = vpop.permute.xlu0 %2277
  %2279 = vrot.lane.b32.xlu0 %v2201, 104
  %v2280 = vpop.permute.xlu0 %2279
  %2281 = vrot.lane.b32.xlu0 %v2202, 104
  %v2282 = vpop.permute.xlu0 %2281
  %v2283 = vlaneseq
  %v2284 = vshrl.u32 %v2283, 7
  %v2285 = vsub.s32 6, %v2284
  %v2286 = vrot.slane %v1195, %v2285
  %v2287 = vmul.f32 %v2276, %v2286
  %v2288 = vmul.f32 %v2278, %v2286
  %v2289 = vmul.f32 %v2280, %v2286
  %v2290 = vmul.f32 %v2282, %v2286
  %v2291 = vadd.f32 %v2271, %v2287
  %v2292 = vadd.f32 %v2272, %v2288
  %v2293 = vadd.f32 %v2273, %v2289
  %v2294 = vadd.f32 %v2274, %v2290
  %2295 = vrot.lane.b32.xlu0 %v2199, 80
  %v2296 = vpop.permute.xlu0 %2295
  %2297 = vrot.lane.b32.xlu0 %v2200, 80
  %v2298 = vpop.permute.xlu0 %2297
  %2299 = vrot.lane.b32.xlu0 %v2201, 80
  %v2300 = vpop.permute.xlu0 %2299
  %2301 = vrot.lane.b32.xlu0 %v2202, 80
  %v2302 = vpop.permute.xlu0 %2301
  %v2303 = vlaneseq
  %v2304 = vshrl.u32 %v2303, 7
  %v2305 = vsub.s32 7, %v2304
  %v2306 = vrot.slane %v1195, %v2305
  %v2307 = vmul.f32 %v2296, %v2306
  %v2308 = vmul.f32 %v2298, %v2306
  %v2309 = vmul.f32 %v2300, %v2306
  %v2310 = vmul.f32 %v2302, %v2306
  %v2311 = vadd.f32 %v2291, %v2307
  %v2312 = vadd.f32 %v2292, %v2308
  %v2313 = vadd.f32 %v2293, %v2309
  %v2314 = vadd.f32 %v2294, %v2310
  %2315 = vrot.lane.b32.xlu0 %v2199, 56
  %v2316 = vpop.permute.xlu0 %2315
  %2317 = vrot.lane.b32.xlu0 %v2200, 56
  %v2318 = vpop.permute.xlu0 %2317
  %2319 = vrot.lane.b32.xlu0 %v2201, 56
  %v2320 = vpop.permute.xlu0 %2319
  %2321 = vrot.lane.b32.xlu0 %v2202, 56
  %v2322 = vpop.permute.xlu0 %2321
  %v2323 = vlaneseq
  %v2324 = vshrl.u32 %v2323, 7
  %v2325 = vsub.s32 0, %v2324
  %v2326 = vrot.slane %v1196, %v2325
  %v2327 = vmul.f32 %v2316, %v2326
  %v2328 = vmul.f32 %v2318, %v2326
  %v2329 = vmul.f32 %v2320, %v2326
  %v2330 = vmul.f32 %v2322, %v2326
  %v2331 = vadd.f32 %v2311, %v2327
  %v2332 = vadd.f32 %v2312, %v2328
  %v2333 = vadd.f32 %v2313, %v2329
  %v2334 = vadd.f32 %v2314, %v2330
  %v2335 = vlaneseq
  %v2336 = vshrl.u32 %v2335, 7
  %v2337 = vsub.s32 3, %v2336
  %v2338 = vrot.slane %v47, %v2337
  %v2339 = vadd.f32 %v2331, %v2338
  %v2340 = vadd.f32 %v2332, %v2338
  %v2341 = vadd.f32 %v2333, %v2338
  %v2342 = vadd.f32 %v2334, %v2338
  %v2343 = vpack.c.bf16 %v2340, %v2339
  %v2344 = vpack.c.bf16 %v2342, %v2341
  %v2345 = vld [vmem:[%s3] sm:$0xf]
  %v2346 = vld [vmem:[%s3 + $0x4] sm:$0xf]
  %v2347 = vld [vmem:[%s3 + $0x8] sm:$0xf]
  %v2348 = vld [vmem:[%s3 + $0xc] sm:$0xf]
  %v2349 = vld [vmem:[%s3 + $0x10] sm:$0xf]
  %v2350 = vld [vmem:[%s3 + $0x14] sm:$0xf]
  %v2351 = vld [vmem:[%s3 + $0x18] sm:$0xf]
  %v2352 = vld [vmem:[%s3 + $0x1c] sm:$0xf]
  %v2353 = vld [vmem:[%s3 + $0x20] sm:$0xf]
  %v2354 = vld [vmem:[%s3 + $0x24] sm:$0xf]
  %v2355 = vld [vmem:[%s3 + $0x28] sm:$0xf]
  %v2356 = vld [vmem:[%s3 + $0x2c] sm:$0xf]
  %v2357 = vld [vmem:[%s3 + $0x30] sm:$0xf]
  %v2358 = vld [vmem:[%s3 + $0x34] sm:$0xf]
  %v2359 = vld [vmem:[%s3 + $0x38] sm:$0xf]
  %v2360 = vld [vmem:[%s3 + $0x3c] sm:$0xf]
  %v2361 = vlaneseq
  %v2362 = vshrl.u32 %v2361, 7
  %v2363 = vsub.s32 4, %v2362
  %v2364 = vrot.slane %v47, %v2363
  %v2381 = vunpack.c.l.b16 %v2345
  %v2382 = vunpack.c.l.b16 %v2346
  %v2383 = vunpack.c.l.b16 %v2347
  %v2384 = vunpack.c.l.b16 %v2348
  %v2385 = vunpack.c.l.b16 %v2349
  %v2386 = vunpack.c.l.b16 %v2350
  %v2387 = vunpack.c.l.b16 %v2351
  %v2388 = vunpack.c.l.b16 %v2352
  %v2389 = vunpack.c.l.b16 %v2353
  %v2390 = vunpack.c.l.b16 %v2354
  %v2391 = vunpack.c.l.b16 %v2355
  %v2392 = vunpack.c.l.b16 %v2356
  %v2393 = vunpack.c.l.b16 %v2357
  %v2394 = vunpack.c.l.b16 %v2358
  %v2395 = vunpack.c.l.b16 %v2359
  %v2396 = vunpack.c.l.b16 %v2360
  %v2397 = vpack.c.b16 %v2382, %v2381
  %v2398 = vpack.c.b16 %v2384, %v2383
  %v2399 = vpack.c.b16 %v2386, %v2385
  %v2400 = vpack.c.b16 %v2388, %v2387
  %v2401 = vpack.c.b16 %v2390, %v2389
  %v2402 = vpack.c.b16 %v2392, %v2391
  %v2403 = vpack.c.b16 %v2394, %v2393
  %v2404 = vpack.c.b16 %v2396, %v2395
  %2413 = vmatprep.subr.bf16.mxu0 0
  %2414 = vmatpush1.bf16.msra.mxu0 %v2397
  %2415 = vmatprep.subr.bf16.mxu0 0
  %2416 = vmatpush1.bf16.msra.mxu0 %v2398
  %2417 = vmatprep.subr.bf16.mxu0 0
  %2418 = vmatpush1.bf16.msra.mxu0 %v2399
  %2419 = vmatprep.subr.bf16.mxu0 0
  %2420 = vmatpush1.bf16.msra.mxu0 %v2400
  %2421 = vmatprep.subr.bf16.mxu0 0
  %2422 = vmatpush1.bf16.msra.mxu0 %v2401
  %2423 = vmatprep.subr.bf16.mxu0 0
  %2424 = vmatpush1.bf16.msra.mxu0 %v2402
  %2425 = vmatprep.subr.bf16.mxu0 0
  %2426 = vmatpush1.bf16.msra.mxu0 %v2403
  %2427 = vmatprep.subr.bf16.mxu0 0
  %2428 = vmatpush1.bf16.msra.mxu0 %v2404
  %2429 = vmatprep.subr.bf16.mxu0 0
  %2430 = vmatpush1.bf16.msra.mxu0 0
  %2431 = vmatprep.subr.bf16.mxu0 0
  %2432 = vmatpush1.bf16.msra.mxu0 0
  %2433 = vmatprep.subr.bf16.mxu0 0
  %2434 = vmatpush1.bf16.msra.mxu0 0
  %2435 = vmatprep.subr.bf16.mxu0 0
  %2436 = vmatpush1.bf16.msra.mxu0 0
  %2437 = vmatprep.subr.bf16.mxu0 0
  %2438 = vmatpush1.bf16.msra.mxu0 0
  %2439 = vmatprep.subr.bf16.mxu0 0
  %2440 = vmatpush1.bf16.msra.mxu0 0
  %2441 = vmatprep.subr.bf16.mxu0 0
  %2442 = vmatpush1.bf16.msra.mxu0 0
  %2443 = vmatprep.subr.bf16.mxu0 0
  %2444 = vmatpush1.bf16.msra.mxu0 0
  %2445 = vmatprep.mubr.bf16.mxu0 0
  %2446 = vmatmul.mubr.bf16.gmra.mrb[0].mxu0 %v2343
  %v2447 = vpop.f32.mrb[0].mxu0
  %v2448 = vadd.f32 %v2364, %v2447
  %v2449 = vpop.f32.mrb[0].mxu0
  %v2450 = vpop.f32.mrb[0].mxu0
  %v2451 = vadd.f32 %v2364, %v2450
  %v2452 = vpop.f32.mrb[0].mxu0
  %2453 = vmatprep.mubr.bf16.mxu0 0
  %2454 = vmatmul.mubr.bf16.gmra.mrb[0].mxu0 %v2344
  %v2455 = vpop.f32.mrb[0].mxu0
  %v2456 = vadd.f32 %v2364, %v2455
  %v2457 = vpop.f32.mrb[0].mxu0
  %v2458 = vpop.f32.mrb[0].mxu0
  %v2459 = vadd.f32 %v2364, %v2458
  %v2460 = vpop.f32.mrb[0].mxu0
  %2461 = vdwg.mxu0
  %v2462 = vmul.f32 %v571, %v2448
  %v2463 = vmul.f32 %v572, %v2451
  %v2464 = vmul.f32 %v573, %v2456
  %v2465 = vmul.f32 %v574, %v2459
  %v2466 = vpack.c.bf16 %v2463, %v2462
  %v2467 = vpack.c.bf16 %v2465, %v2464
  %v2468 = vld [vmem:[%s4] sm:$0xf]
  %v2469 = vld [vmem:[%s4 + $0x4] sm:$0xf]
  %v2470 = vld [vmem:[%s4 + $0x8] sm:$0xf]
  %v2471 = vld [vmem:[%s4 + $0xc] sm:$0xf]
  %v2472 = vld [vmem:[%s4 + $0x10] sm:$0xf]
  %v2473 = vld [vmem:[%s4 + $0x14] sm:$0xf]
  %v2474 = vld [vmem:[%s4 + $0x18] sm:$0xf]
  %v2475 = vld [vmem:[%s4 + $0x1c] sm:$0xf]
  %v2476 = vld [vmem:[%s4 + $0x20] sm:$0xf]
  %v2477 = vld [vmem:[%s4 + $0x24] sm:$0xf]
  %v2478 = vld [vmem:[%s4 + $0x28] sm:$0xf]
  %v2479 = vld [vmem:[%s4 + $0x2c] sm:$0xf]
  %v2480 = vld [vmem:[%s4 + $0x30] sm:$0xf]
  %v2481 = vld [vmem:[%s4 + $0x34] sm:$0xf]
  %v2482 = vld [vmem:[%s4 + $0x38] sm:$0xf]
  %v2483 = vld [vmem:[%s4 + $0x3c] sm:$0xf]
  %v2484 = vlaneseq
  %v2485 = vshrl.u32 %v2484, 7
  %v2486 = vsub.s32 5, %v2485
  %v2487 = vrot.slane %v47, %v2486
  %v2504 = vunpack.c.l.b16 %v2468
  %v2505 = vunpack.c.l.b16 %v2469
  %v2506 = vunpack.c.l.b16 %v2470
  %v2507 = vunpack.c.l.b16 %v2471
  %v2508 = vunpack.c.l.b16 %v2472
  %v2509 = vunpack.c.l.b16 %v2473
  %v2510 = vunpack.c.l.b16 %v2474
  %v2511 = vunpack.c.l.b16 %v2475
  %v2512 = vunpack.c.l.b16 %v2476
  %v2513 = vunpack.c.l.b16 %v2477
  %v2514 = vunpack.c.l.b16 %v2478
  %v2515 = vunpack.c.l.b16 %v2479
  %v2516 = vunpack.c.l.b16 %v2480
  %v2517 = vunpack.c.l.b16 %v2481
  %v2518 = vunpack.c.l.b16 %v2482
  %v2519 = vunpack.c.l.b16 %v2483
  %v2520 = vpack.c.b16 %v2505, %v2504
  %v2521 = vpack.c.b16 %v2507, %v2506
  %v2522 = vpack.c.b16 %v2509, %v2508
  %v2523 = vpack.c.b16 %v2511, %v2510
  %v2524 = vpack.c.b16 %v2513, %v2512
  %v2525 = vpack.c.b16 %v2515, %v2514
  %v2526 = vpack.c.b16 %v2517, %v2516
  %v2527 = vpack.c.b16 %v2519, %v2518
  %2536 = vmatprep.subr.bf16.mxu0 0
  %2537 = vmatpush1.bf16.msra.mxu0 %v2520
  %2538 = vmatprep.subr.bf16.mxu0 0
  %2539 = vmatpush1.bf16.msra.mxu0 %v2521
  %2540 = vmatprep.subr.bf16.mxu0 0
  %2541 = vmatpush1.bf16.msra.mxu0 %v2522
  %2542 = vmatprep.subr.bf16.mxu0 0
  %2543 = vmatpush1.bf16.msra.mxu0 %v2523
  %2544 = vmatprep.subr.bf16.mxu0 0
  %2545 = vmatpush1.bf16.msra.mxu0 %v2524
  %2546 = vmatprep.subr.bf16.mxu0 0
  %2547 = vmatpush1.bf16.msra.mxu0 %v2525
  %2548 = vmatprep.subr.bf16.mxu0 0
  %2549 = vmatpush1.bf16.msra.mxu0 %v2526
  %2550 = vmatprep.subr.bf16.mxu0 0
  %2551 = vmatpush1.bf16.msra.mxu0 %v2527
  %2552 = vmatprep.subr.bf16.mxu0 0
  %2553 = vmatpush1.bf16.msra.mxu0 0
  %2554 = vmatprep.subr.bf16.mxu0 0
  %2555 = vmatpush1.bf16.msra.mxu0 0
  %2556 = vmatprep.subr.bf16.mxu0 0
  %2557 = vmatpush1.bf16.msra.mxu0 0
  %2558 = vmatprep.subr.bf16.mxu0 0
  %2559 = vmatpush1.bf16.msra.mxu0 0
  %2560 = vmatprep.subr.bf16.mxu0 0
  %2561 = vmatpush1.bf16.msra.mxu0 0
  %2562 = vmatprep.subr.bf16.mxu0 0
  %2563 = vmatpush1.bf16.msra.mxu0 0
  %2564 = vmatprep.subr.bf16.mxu0 0
  %2565 = vmatpush1.bf16.msra.mxu0 0
  %2566 = vmatprep.subr.bf16.mxu0 0
  %2567 = vmatpush1.bf16.msra.mxu0 0
  %2568 = vmatprep.mubr.bf16.mxu0 0
  %2569 = vmatmul.mubr.bf16.gmra.mrb[0].mxu0 %v2466
  %v2570 = vpop.f32.mrb[0].mxu0
  %v2571 = vadd.f32 %v2487, %v2570
  %v2572 = vpop.f32.mrb[0].mxu0
  %v2573 = vpop.f32.mrb[0].mxu0
  %v2574 = vadd.f32 %v2487, %v2573
  %v2575 = vpop.f32.mrb[0].mxu0
  %2576 = vmatprep.mubr.bf16.mxu0 0
  %2577 = vmatmul.mubr.bf16.gmra.mrb[0].mxu0 %v2467
  %v2578 = vpop.f32.mrb[0].mxu0
  %v2579 = vadd.f32 %v2487, %v2578
  %v2580 = vpop.f32.mrb[0].mxu0
  %v2581 = vpop.f32.mrb[0].mxu0
  %v2582 = vadd.f32 %v2487, %v2581
  %v2583 = vpop.f32.mrb[0].mxu0
  %2584 = vdwg.mxu0
  %v2585 = vadd.f32 %v2571, %v67
  %v2586 = vadd.f32 %v2574, %v68
  %v2587 = vadd.f32 %v2579, %v69
  %v2588 = vadd.f32 %v2582, %v70
  %v2589 = vpack.c.bf16 %v72, %v71
  %v2590 = vpack.c.bf16 %v74, %v73
  %v2591 = vld [vmem:[%s5] sm:$0xff]
  %v2592 = vld [vmem:[%s5 + $0x8] sm:$0xf]
  %v2593 = vld [vmem:[%s5 + $0xc] sm:$0xff]
  %v2594 = vld [vmem:[%s5 + $0x14] sm:$0xf]
  %v2595 = vld [vmem:[%s5 + $0x18] sm:$0xff]
  %v2596 = vld [vmem:[%s5 + $0x20] sm:$0xf]
  %v2597 = vld [vmem:[%s5 + $0x24] sm:$0xff]
  %v2598 = vld [vmem:[%s5 + $0x2c] sm:$0xf]
  %v2599 = vld [vmem:[%s5 + $0x30] sm:$0xff]
  %v2600 = vld [vmem:[%s5 + $0x38] sm:$0xf]
  %v2601 = vld [vmem:[%s5 + $0x3c] sm:$0xff]
  %v2602 = vld [vmem:[%s5 + $0x44] sm:$0xf]
  %v2603 = vld [vmem:[%s5 + $0x48] sm:$0xff]
  %v2604 = vld [vmem:[%s5 + $0x50] sm:$0xf]
  %v2605 = vld [vmem:[%s5 + $0x54] sm:$0xff]
  %v2606 = vld [vmem:[%s5 + $0x5c] sm:$0xf]
  %v2607 = vld [vmem:[%s5 + $0x60] sm:$0xff]
  %v2608 = vld [vmem:[%s5 + $0x68] sm:$0xf]
  %v2609 = vld [vmem:[%s5 + $0x6c] sm:$0xff]
  %v2610 = vld [vmem:[%s5 + $0x74] sm:$0xf]
  %v2611 = vld [vmem:[%s5 + $0x78] sm:$0xff]
  %v2612 = vld [vmem:[%s5 + $0x80] sm:$0xf]
  %v2613 = vld [vmem:[%s5 + $0x84] sm:$0xff]
  %v2614 = vld [vmem:[%s5 + $0x8c] sm:$0xf]
  %v2615 = vld [vmem:[%s5 + $0x90] sm:$0xff]
  %v2616 = vld [vmem:[%s5 + $0x98] sm:$0xf]
  %v2617 = vld [vmem:[%s5 + $0x9c] sm:$0xff]
  %v2618 = vld [vmem:[%s5 + $0xa4] sm:$0xf]
  %v2619 = vld [vmem:[%s5 + $0xa8] sm:$0xff]
  %v2620 = vld [vmem:[%s5 + $0xb0] sm:$0xf]
  %v2621 = vld [vmem:[%s5 + $0xb4] sm:$0xff]
  %v2622 = vld [vmem:[%s5 + $0xbc] sm:$0xf]
  %v2655 = vunpack.c.l.b16 %v2591
  %v2656 = vunpack.c.h.b16 %v2591
  %v2657 = vunpack.c.l.b16 %v2592
  %v2658 = vunpack.c.l.b16 %v2593
  %v2659 = vunpack.c.h.b16 %v2593
  %v2660 = vunpack.c.l.b16 %v2594
  %v2661 = vunpack.c.l.b16 %v2595
  %v2662 = vunpack.c.h.b16 %v2595
  %v2663 = vunpack.c.l.b16 %v2596
  %v2664 = vunpack.c.l.b16 %v2597
  %v2665 = vunpack.c.h.b16 %v2597
  %v2666 = vunpack.c.l.b16 %v2598
  %v2667 = vunpack.c.l.b16 %v2599
  %v2668 = vunpack.c.h.b16 %v2599
  %v2669 = vunpack.c.l.b16 %v2600
  %v2670 = vunpack.c.l.b16 %v2601
  %v2671 = vunpack.c.h.b16 %v2601
  %v2672 = vunpack.c.l.b16 %v2602
  %v2673 = vunpack.c.l.b16 %v2603
  %v2674 = vunpack.c.h.b16 %v2603
  %v2675 = vunpack.c.l.b16 %v2604
  %v2676 = vunpack.c.l.b16 %v2605
  %v2677 = vunpack.c.h.b16 %v2605
  %v2678 = vunpack.c.l.b16 %v2606
  %v2679 = vunpack.c.l.b16 %v2607
  %v2680 = vunpack.c.h.b16 %v2607
  %v2681 = vunpack.c.l.b16 %v2608
  %v2682 = vunpack.c.l.b16 %v2609
  %v2683 = vunpack.c.h.b16 %v2609
  %v2684 = vunpack.c.l.b16 %v2610
  %v2685 = vunpack.c.l.b16 %v2611
  %v2686 = vunpack.c.h.b16 %v2611
  %v2687 = vunpack.c.l.b16 %v2612
  %v2688 = vunpack.c.l.b16 %v2613
  %v2689 = vunpack.c.h.b16 %v2613
  %v2690 = vunpack.c.l.b16 %v2614
  %v2691 = vunpack.c.l.b16 %v2615
  %v2692 = vunpack.c.h.b16 %v2615
  %v2693 = vunpack.c.l.b16 %v2616
  %v2694 = vunpack.c.l.b16 %v2617
  %v2695 = vunpack.c.h.b16 %v2617
  %v2696 = vunpack.c.l.b16 %v2618
  %v2697 = vunpack.c.l.b16 %v2619
  %v2698 = vunpack.c.h.b16 %v2619
  %v2699 = vunpack.c.l.b16 %v2620
  %v2700 = vunpack.c.l.b16 %v2621
  %v2701 = vunpack.c.h.b16 %v2621
  %v2702 = vunpack.c.l.b16 %v2622
  %v2703 = vpack.c.b16 %v2658, %v2655
  %v2704 = vpack.c.b16 %v2659, %v2656
  %v2705 = vpack.c.b16 %v2660, %v2657
  %v2706 = vpack.c.b16 %v2664, %v2661
  %v2707 = vpack.c.b16 %v2665, %v2662
  %v2708 = vpack.c.b16 %v2666, %v2663
  %v2709 = vpack.c.b16 %v2670, %v2667
  %v2710 = vpack.c.b16 %v2671, %v2668
  %v2711 = vpack.c.b16 %v2672, %v2669
  %v2712 = vpack.c.b16 %v2676, %v2673
  %v2713 = vpack.c.b16 %v2677, %v2674
  %v2714 = vpack.c.b16 %v2678, %v2675
  %v2715 = vpack.c.b16 %v2682, %v2679
  %v2716 = vpack.c.b16 %v2683, %v2680
  %v2717 = vpack.c.b16 %v2684, %v2681
  %v2718 = vpack.c.b16 %v2688, %v2685
  %v2719 = vpack.c.b16 %v2689, %v2686
  %v2720 = vpack.c.b16 %v2690, %v2687
  %v2721 = vpack.c.b16 %v2694, %v2691
  %v2722 = vpack.c.b16 %v2695, %v2692
  %v2723 = vpack.c.b16 %v2696, %v2693
  %v2724 = vpack.c.b16 %v2700, %v2697
  %v2725 = vpack.c.b16 %v2701, %v2698
  %v2726 = vpack.c.b16 %v2702, %v2699
  %2751 = vmatprep.subr.bf16.mxu0 %v2704
  %2752 = vmatpush1.bf16.msra.mxu0 %v2703
  %2753 = vmatprep.subr.bf16.mxu0 %v2707
  %2754 = vmatpush1.bf16.msra.mxu0 %v2706
  %2755 = vmatprep.subr.bf16.mxu0 %v2710
  %2756 = vmatpush1.bf16.msra.mxu0 %v2709
  %2757 = vmatprep.subr.bf16.mxu0 %v2713
  %2758 = vmatpush1.bf16.msra.mxu0 %v2712
  %2759 = vmatprep.subr.bf16.mxu0 %v2716
  %2760 = vmatpush1.bf16.msra.mxu0 %v2715
  %2761 = vmatprep.subr.bf16.mxu0 %v2719
  %2762 = vmatpush1.bf16.msra.mxu0 %v2718
  %2763 = vmatprep.subr.bf16.mxu0 %v2722
  %2764 = vmatpush1.bf16.msra.mxu0 %v2721
  %2765 = vmatprep.subr.bf16.mxu0 %v2725
  %2766 = vmatpush1.bf16.msra.mxu0 %v2724
  %2767 = vmatprep.subr.bf16.mxu0 0
  %2768 = vmatpush1.bf16.msra.mxu0 0
  %2769 = vmatprep.subr.bf16.mxu0 0
  %2770 = vmatpush1.bf16.msra.mxu0 0
  %2771 = vmatprep.subr.bf16.mxu0 0
  %2772 = vmatpush1.bf16.msra.mxu0 0
  %2773 = vmatprep.subr.bf16.mxu0 0
  %2774 = vmatpush1.bf16.msra.mxu0 0
  %2775 = vmatprep.subr.bf16.mxu0 0
  %2776 = vmatpush1.bf16.msra.mxu0 0
  %2777 = vmatprep.subr.bf16.mxu0 0
  %2778 = vmatpush1.bf16.msra.mxu0 0
  %2779 = vmatprep.subr.bf16.mxu0 0
  %2780 = vmatpush1.bf16.msra.mxu0 0
  %2781 = vmatprep.subr.bf16.mxu0 0
  %2782 = vmatpush1.bf16.msra.mxu0 0
  %2783 = vmatprep.mubr.bf16.mxu0 0
  %2784 = vmatmul.mubr.bf16.gmra.mrb[0].mxu0 %v2589
  %v2785 = vpop.f32.mrb[0].mxu0
  %v2786 = vadd.f32 0.0, %v2785
  %v2787 = vpop.f32.mrb[0].mxu0
  %v2788 = vadd.f32 0.0, %v2787
  %v2789 = vpop.f32.mrb[0].mxu0
  %v2790 = vadd.f32 0.0, %v2789
  %v2791 = vpop.f32.mrb[0].mxu0
  %v2792 = vadd.f32 0.0, %v2791
  %2793 = vmatprep.mubr.bf16.mxu0 0
  %2794 = vmatmul.mubr.bf16.gmra.mrb[0].mxu0 %v2590
  %v2795 = vpop.f32.mrb[0].mxu0
  %v2796 = vadd.f32 0.0, %v2795
  %v2797 = vpop.f32.mrb[0].mxu0
  %v2798 = vadd.f32 0.0, %v2797
  %v2799 = vpop.f32.mrb[0].mxu0
  %v2800 = vadd.f32 0.0, %v2799
  %v2801 = vpop.f32.mrb[0].mxu0
  %v2802 = vadd.f32 0.0, %v2801
  %2803 = vdwg.mxu0
  %2804 = vmatprep.subr.bf16.mxu0 0
  %2805 = vmatpush1.bf16.msra.mxu0 %v2705
  %2806 = vmatprep.subr.bf16.mxu0 0
  %2807 = vmatpush1.bf16.msra.mxu0 %v2708
  %2808 = vmatprep.subr.bf16.mxu0 0
  %2809 = vmatpush1.bf16.msra.mxu0 %v2711
  %2810 = vmatprep.subr.bf16.mxu0 0
  %2811 = vmatpush1.bf16.msra.mxu0 %v2714
  %2812 = vmatprep.subr.bf16.mxu0 0
  %2813 = vmatpush1.bf16.msra.mxu0 %v2717
  %2814 = vmatprep.subr.bf16.mxu0 0
  %2815 = vmatpush1.bf16.msra.mxu0 %v2720
  %2816 = vmatprep.subr.bf16.mxu0 0
  %2817 = vmatpush1.bf16.msra.mxu0 %v2723
  %2818 = vmatprep.subr.bf16.mxu0 0
  %2819 = vmatpush1.bf16.msra.mxu0 %v2726
  %2820 = vmatprep.subr.bf16.mxu0 0
  %2821 = vmatpush1.bf16.msra.mxu0 0
  %2822 = vmatprep.subr.bf16.mxu0 0
  %2823 = vmatpush1.bf16.msra.mxu0 0
  %2824 = vmatprep.subr.bf16.mxu0 0
  %2825 = vmatpush1.bf16.msra.mxu0 0
  %2826 = vmatprep.subr.bf16.mxu0 0
  %2827 = vmatpush1.bf16.msra.mxu0 0
  %2828 = vmatprep.subr.bf16.mxu0 0
  %2829 = vmatpush1.bf16.msra.mxu0 0
  %2830 = vmatprep.subr.bf16.mxu0 0
  %2831 = vmatpush1.bf16.msra.mxu0 0
  %2832 = vmatprep.subr.bf16.mxu0 0
  %2833 = vmatpush1.bf16.msra.mxu0 0
  %2834 = vmatprep.subr.bf16.mxu0 0
  %2835 = vmatpush1.bf16.msra.mxu0 0
  %2836 = vmatprep.mubr.bf16.mxu0 0
  %2837 = vmatmul.mubr.bf16.gmra.mrb[0].mxu0 %v2589
  %v2838 = vpop.f32.mrb[0].mxu0
  %v2839 = vadd.f32 0.0, %v2838
  %v2840 = vpop.f32.mrb[0].mxu0
  %v2841 = vpop.f32.mrb[0].mxu0
  %v2842 = vadd.f32 0.0, %v2841
  %v2843 = vpop.f32.mrb[0].mxu0
  %2844 = vmatprep.mubr.bf16.mxu0 0
  %2845 = vmatmul.mubr.bf16.gmra.mrb[0].mxu0 %v2590
  %v2846 = vpop.f32.mrb[0].mxu0
  %v2847 = vadd.f32 0.0, %v2846
  %v2848 = vpop.f32.mrb[0].mxu0
  %v2849 = vpop.f32.mrb[0].mxu0
  %v2850 = vadd.f32 0.0, %v2849
  %v2851 = vpop.f32.mrb[0].mxu0
  %2852 = vdwg.mxu0
  %v2853 = vlaneseq
  %v2854 = vshrl.u32 %v2853, 7
  %v2855 = vsub.s32 6, %v2854
  %v2856 = vrot.slane %v47, %v2855
  %v2857 = vadd.f32 %v2786, %v2856
  %v2858 = vadd.f32 %v2790, %v2856
  %v2859 = vadd.f32 %v2796, %v2856
  %v2860 = vadd.f32 %v2800, %v2856
  %v2861 = vlaneseq
  %v2862 = vshrl.u32 %v2861, 7
  %v2863 = vsub.s32 7, %v2862
  %v2864 = vrot.slane %v47, %v2863
  %v2865 = vadd.f32 %v2788, %v2864
  %v2866 = vadd.f32 %v2792, %v2864
  %v2867 = vadd.f32 %v2798, %v2864
  %v2868 = vadd.f32 %v2802, %v2864
  %v2869 = vlaneseq
  %v2870 = vshrl.u32 %v2869, 7
  %v2871 = vsub.s32 0, %v2870
  %v2872 = vrot.slane %v48, %v2871
  %v2873 = vadd.f32 %v2839, %v2872
  %v2874 = vadd.f32 %v2842, %v2872
  %v2875 = vadd.f32 %v2847, %v2872
  %v2876 = vadd.f32 %v2850, %v2872
  %v2877 = vmax.f32 %v2857, %v2858
  %v2878 = vmax.f32 %v2859, %v2860
  %v2879 = vmax.f32 %v2877, %v2878
  %v2880 = vrot.slane %v2879, 4
  %v2881 = vmax.f32 %v2879, %v2880
  %v2882 = vrot.slane %v2881, 2
  %v2883 = vmax.f32 %v2881, %v2882
  %v2884 = vrot.slane %v2883, 1
  %v2885 = vmax.f32 %v2883, %v2884
  %2886 = vmax.xlane.f32.xlu0 %v2885
  %v2887 = vpop.xlane.xlu0 %2886
  %v2888 = vsub.f32 %v2857, %v2887
  %v2889 = vsub.f32 %v2858, %v2887
  %v2890 = vsub.f32 %v2859, %v2887
  %v2891 = vsub.f32 %v2860, %v2887
  %v2892 = vmul.f32 %v2888, 1.442695
  %v2893 = vpow.pop %v2892
  %v2894 = vmul.f32 %v2889, 1.442695
  %v2895 = vpow.pop %v2894
  %v2896 = vmul.f32 %v2890, 1.442695
  %v2897 = vpow.pop %v2896
  %v2898 = vmul.f32 %v2891, 1.442695
  %v2899 = vpow.pop %v2898
  %2900 = vrot.lane.b32.xlu0 %v2893, 8
  %v2901 = vpop.permute.xlu0 %2900
  %2902 = vrot.lane.b32.xlu0 %v2895, 8
  %v2903 = vpop.permute.xlu0 %2902
  %2904 = vrot.lane.b32.xlu0 %v2897, 8
  %v2905 = vpop.permute.xlu0 %2904
  %2906 = vrot.lane.b32.xlu0 %v2899, 8
  %v2907 = vpop.permute.xlu0 %2906
  %v2908 = vadd.f32 %v2893, %v2901
  %v2909 = vadd.f32 %v2895, %v2903
  %v2910 = vadd.f32 %v2897, %v2905
  %v2911 = vadd.f32 %v2899, %v2907
  %2912 = vrot.lane.b32.xlu0 %v2908, 16
  %v2913 = vpop.permute.xlu0 %2912
  %2914 = vrot.lane.b32.xlu0 %v2909, 16
  %v2915 = vpop.permute.xlu0 %2914
  %2916 = vrot.lane.b32.xlu0 %v2910, 16
  %v2917 = vpop.permute.xlu0 %2916
  %2918 = vrot.lane.b32.xlu0 %v2911, 16
  %v2919 = vpop.permute.xlu0 %2918
  %v2920 = vadd.f32 %v2908, %v2913
  %v2921 = vadd.f32 %v2909, %v2915
  %v2922 = vadd.f32 %v2910, %v2917
  %v2923 = vadd.f32 %v2911, %v2919
  %2924 = vrot.lane.b32.xlu0 %v2920, 32
  %v2925 = vpop.permute.xlu0 %2924
  %2926 = vrot.lane.b32.xlu0 %v2921, 32
  %v2927 = vpop.permute.xlu0 %2926
  %2928 = vrot.lane.b32.xlu0 %v2922, 32
  %v2929 = vpop.permute.xlu0 %2928
  %2930 = vrot.lane.b32.xlu0 %v2923, 32
  %v2931 = vpop.permute.xlu0 %2930
  %v2932 = vadd.f32 %v2920, %v2925
  %v2933 = vadd.f32 %v2921, %v2927
  %v2934 = vadd.f32 %v2922, %v2929
  %v2935 = vadd.f32 %v2923, %v2931
  %2936 = vrot.lane.b32.xlu0 %v2932, 64
  %v2937 = vpop.permute.xlu0 %2936
  %2938 = vrot.lane.b32.xlu0 %v2933, 64
  %v2939 = vpop.permute.xlu0 %2938
  %2940 = vrot.lane.b32.xlu0 %v2934, 64
  %v2941 = vpop.permute.xlu0 %2940
  %2942 = vrot.lane.b32.xlu0 %v2935, 64
  %v2943 = vpop.permute.xlu0 %2942
  %v2944 = vadd.f32 %v2932, %v2937
  %v2945 = vadd.f32 %v2933, %v2939
  %v2946 = vadd.f32 %v2934, %v2941
  %v2947 = vadd.f32 %v2935, %v2943
  %v2948 = vmul.f32 %v2893, %v2865
  %v2949 = vmul.f32 %v2895, %v2866
  %v2950 = vmul.f32 %v2897, %v2867
  %v2951 = vmul.f32 %v2899, %v2868
  %2952 = vrot.lane.b32.xlu0 %v2948, 8
  %v2953 = vpop.permute.xlu0 %2952
  %2954 = vrot.lane.b32.xlu0 %v2949, 8
  %v2955 = vpop.permute.xlu0 %2954
  %2956 = vrot.lane.b32.xlu0 %v2950, 8
  %v2957 = vpop.permute.xlu0 %2956
  %2958 = vrot.lane.b32.xlu0 %v2951, 8
  %v2959 = vpop.permute.xlu0 %2958
  %v2960 = vadd.f32 %v2948, %v2953
  %v2961 = vadd.f32 %v2949, %v2955
  %v2962 = vadd.f32 %v2950, %v2957
  %v2963 = vadd.f32 %v2951, %v2959
  %2964 = vrot.lane.b32.xlu0 %v2960, 16
  %v2965 = vpop.permute.xlu0 %2964
  %2966 = vrot.lane.b32.xlu0 %v2961, 16
  %v2967 = vpop.permute.xlu0 %2966
  %2968 = vrot.lane.b32.xlu0 %v2962, 16
  %v2969 = vpop.permute.xlu0 %2968
  %2970 = vrot.lane.b32.xlu0 %v2963, 16
  %v2971 = vpop.permute.xlu0 %2970
  %v2972 = vadd.f32 %v2960, %v2965
  %v2973 = vadd.f32 %v2961, %v2967
  %v2974 = vadd.f32 %v2962, %v2969
  %v2975 = vadd.f32 %v2963, %v2971
  %2976 = vrot.lane.b32.xlu0 %v2972, 32
  %v2977 = vpop.permute.xlu0 %2976
  %2978 = vrot.lane.b32.xlu0 %v2973, 32
  %v2979 = vpop.permute.xlu0 %2978
  %2980 = vrot.lane.b32.xlu0 %v2974, 32
  %v2981 = vpop.permute.xlu0 %2980
  %2982 = vrot.lane.b32.xlu0 %v2975, 32
  %v2983 = vpop.permute.xlu0 %2982
  %v2984 = vadd.f32 %v2972, %v2977
  %v2985 = vadd.f32 %v2973, %v2979
  %v2986 = vadd.f32 %v2974, %v2981
  %v2987 = vadd.f32 %v2975, %v2983
  %2988 = vrot.lane.b32.xlu0 %v2984, 64
  %v2989 = vpop.permute.xlu0 %2988
  %2990 = vrot.lane.b32.xlu0 %v2985, 64
  %v2991 = vpop.permute.xlu0 %2990
  %2992 = vrot.lane.b32.xlu0 %v2986, 64
  %v2993 = vpop.permute.xlu0 %2992
  %2994 = vrot.lane.b32.xlu0 %v2987, 64
  %v2995 = vpop.permute.xlu0 %2994
  %v2996 = vadd.f32 %v2984, %v2989
  %v2997 = vadd.f32 %v2985, %v2991
  %v2998 = vadd.f32 %v2986, %v2993
  %v2999 = vadd.f32 %v2987, %v2995
  %v3000 = vadd.f32 %v2944, %v2945
  %v3001 = vrot.slane %v3000, 4
  %v3002 = vadd.f32 %v3000, %v3001
  %v3003 = vrot.slane %v3002, 2
  %v3004 = vadd.f32 %v3002, %v3003
  %v3005 = vrot.slane %v3004, 1
  %v3006 = vadd.f32 %v3004, %v3005
  %v3007 = vadd.f32 %v2996, %v2997
  %v3008 = vrot.slane %v3007, 4
  %v3009 = vadd.f32 %v3007, %v3008
  %v3010 = vrot.slane %v3009, 2
  %v3011 = vadd.f32 %v3009, %v3010
  %v3012 = vrot.slane %v3011, 1
  %v3013 = vadd.f32 %v3011, %v3012
  %v3014 = vrcp.pop %v3006
  %v3015 = vmul.f32 %v3013, %v3014
  %v3016 = vadd.f32 %v2946, %v2947
  %v3017 = vrot.slane %v3016, 4
  %v3018 = vadd.f32 %v3016, %v3017
  %v3019 = vrot.slane %v3018, 2
  %v3020 = vadd.f32 %v3018, %v3019
  %v3021 = vrot.slane %v3020, 1
  %v3022 = vadd.f32 %v3020, %v3021
  %v3023 = vadd.f32 %v2998, %v2999
  %v3024 = vrot.slane %v3023, 4
  %v3025 = vadd.f32 %v3023, %v3024
  %v3026 = vrot.slane %v3025, 2
  %v3027 = vadd.f32 %v3025, %v3026
  %v3028 = vrot.slane %v3027, 1
  %v3029 = vadd.f32 %v3027, %v3028
  %v3030 = vrcp.pop %v3022
  %v3031 = vmul.f32 %v3029, %v3030
  %v3032 = vsel %vm56, %v3031, %v3015
  %v3033 = vsel %vm57, %v3031, %v3015
  %v3034 = vsel %vm58, %v3031, %v3015
  %v3035 = vsel %vm59, %v3031, %v3015
  %v3036 = vmul.f32 %v2873, %v3032
  %v3037 = vmul.f32 %v2874, %v3033
  %v3038 = vmul.f32 %v2875, %v3034
  %v3039 = vmul.f32 %v2876, %v3035
  %v3040 = vpack.c.bf16 %v3037, %v3036
  %v3041 = vpack.c.bf16 %v3039, %v3038
  %v3042 = vld [vmem:[%s6] sm:$0xf]
  %v3043 = vld [vmem:[%s6 + $0x4] sm:$0xf]
  %v3044 = vld [vmem:[%s6 + $0x8] sm:$0xf]
  %v3045 = vld [vmem:[%s6 + $0xc] sm:$0xf]
  %v3046 = vld [vmem:[%s6 + $0x10] sm:$0xf]
  %v3047 = vld [vmem:[%s6 + $0x14] sm:$0xf]
  %v3048 = vld [vmem:[%s6 + $0x18] sm:$0xf]
  %v3049 = vld [vmem:[%s6 + $0x1c] sm:$0xf]
  %v3050 = vld [vmem:[%s6 + $0x20] sm:$0xf]
  %v3051 = vld [vmem:[%s6 + $0x24] sm:$0xf]
  %v3052 = vld [vmem:[%s6 + $0x28] sm:$0xf]
  %v3053 = vld [vmem:[%s6 + $0x2c] sm:$0xf]
  %v3054 = vld [vmem:[%s6 + $0x30] sm:$0xf]
  %v3055 = vld [vmem:[%s6 + $0x34] sm:$0xf]
  %v3056 = vld [vmem:[%s6 + $0x38] sm:$0xf]
  %v3057 = vld [vmem:[%s6 + $0x3c] sm:$0xf]
  %v3058 = vlaneseq
  %v3059 = vshrl.u32 %v3058, 7
  %v3060 = vsub.s32 1, %v3059
  %v3061 = vrot.slane %v48, %v3060
  %v3078 = vunpack.c.l.b16 %v3042
  %v3079 = vunpack.c.l.b16 %v3043
  %v3080 = vunpack.c.l.b16 %v3044
  %v3081 = vunpack.c.l.b16 %v3045
  %v3082 = vunpack.c.l.b16 %v3046
  %v3083 = vunpack.c.l.b16 %v3047
  %v3084 = vunpack.c.l.b16 %v3048
  %v3085 = vunpack.c.l.b16 %v3049
  %v3086 = vunpack.c.l.b16 %v3050
  %v3087 = vunpack.c.l.b16 %v3051
  %v3088 = vunpack.c.l.b16 %v3052
  %v3089 = vunpack.c.l.b16 %v3053
  %v3090 = vunpack.c.l.b16 %v3054
  %v3091 = vunpack.c.l.b16 %v3055
  %v3092 = vunpack.c.l.b16 %v3056
  %v3093 = vunpack.c.l.b16 %v3057
  %v3094 = vpack.c.b16 %v3079, %v3078
  %v3095 = vpack.c.b16 %v3081, %v3080
  %v3096 = vpack.c.b16 %v3083, %v3082
  %v3097 = vpack.c.b16 %v3085, %v3084
  %v3098 = vpack.c.b16 %v3087, %v3086
  %v3099 = vpack.c.b16 %v3089, %v3088
  %v3100 = vpack.c.b16 %v3091, %v3090
  %v3101 = vpack.c.b16 %v3093, %v3092
  %3110 = vmatprep.subr.bf16.mxu0 0
  %3111 = vmatpush1.bf16.msra.mxu0 %v3094
  %3112 = vmatprep.subr.bf16.mxu0 0
  %3113 = vmatpush1.bf16.msra.mxu0 %v3095
  %3114 = vmatprep.subr.bf16.mxu0 0
  %3115 = vmatpush1.bf16.msra.mxu0 %v3096
  %3116 = vmatprep.subr.bf16.mxu0 0
  %3117 = vmatpush1.bf16.msra.mxu0 %v3097
  %3118 = vmatprep.subr.bf16.mxu0 0
  %3119 = vmatpush1.bf16.msra.mxu0 %v3098
  %3120 = vmatprep.subr.bf16.mxu0 0
  %3121 = vmatpush1.bf16.msra.mxu0 %v3099
  %3122 = vmatprep.subr.bf16.mxu0 0
  %3123 = vmatpush1.bf16.msra.mxu0 %v3100
  %3124 = vmatprep.subr.bf16.mxu0 0
  %3125 = vmatpush1.bf16.msra.mxu0 %v3101
  %3126 = vmatprep.subr.bf16.mxu0 0
  %3127 = vmatpush1.bf16.msra.mxu0 0
  %3128 = vmatprep.subr.bf16.mxu0 0
  %3129 = vmatpush1.bf16.msra.mxu0 0
  %3130 = vmatprep.subr.bf16.mxu0 0
  %3131 = vmatpush1.bf16.msra.mxu0 0
  %3132 = vmatprep.subr.bf16.mxu0 0
  %3133 = vmatpush1.bf16.msra.mxu0 0
  %3134 = vmatprep.subr.bf16.mxu0 0
  %3135 = vmatpush1.bf16.msra.mxu0 0
  %3136 = vmatprep.subr.bf16.mxu0 0
  %3137 = vmatpush1.bf16.msra.mxu0 0
  %3138 = vmatprep.subr.bf16.mxu0 0
  %3139 = vmatpush1.bf16.msra.mxu0 0
  %3140 = vmatprep.subr.bf16.mxu0 0
  %3141 = vmatpush1.bf16.msra.mxu0 0
  %3142 = vmatprep.mubr.bf16.mxu0 0
  %3143 = vmatmul.mubr.bf16.gmra.mrb[0].mxu0 %v3040
  %v3144 = vpop.f32.mrb[0].mxu0
  %v3145 = vadd.f32 %v3061, %v3144
  %v3146 = vpop.f32.mrb[0].mxu0
  %v3147 = vpop.f32.mrb[0].mxu0
  %v3148 = vadd.f32 %v3061, %v3147
  %v3149 = vpop.f32.mrb[0].mxu0
  %3150 = vmatprep.mubr.bf16.mxu0 0
  %3151 = vmatmul.mubr.bf16.gmra.mrb[0].mxu0 %v3041
  %v3152 = vpop.f32.mrb[0].mxu0
  %v3153 = vadd.f32 %v3061, %v3152
  %v3154 = vpop.f32.mrb[0].mxu0
  %v3155 = vpop.f32.mrb[0].mxu0
  %v3156 = vadd.f32 %v3061, %v3155
  %v3157 = vpop.f32.mrb[0].mxu0
  %3158 = vdwg.mxu0
  %v3159 = vld [vmem:[%s12] sm:$0xf]
  %v3160 = vpack.c.bf16 %v2586, %v2585
  %v3161 = vpack.c.bf16 %v3148, %v3145
  %v3162 = vpack.c.bf16 %v2588, %v2587
  %v3163 = vpack.c.bf16 %v3156, %v3153
  %v3164 = vld [vmem:[%s7] sm:$0xff]
  %v3165 = vld [vmem:[%s7 + $0x8] sm:$0xff]
  %v3166 = vld [vmem:[%s7 + $0x10] sm:$0xff]
  %v3167 = vld [vmem:[%s7 + $0x18] sm:$0xff]
  %v3168 = vld [vmem:[%s7 + $0x20] sm:$0xff]
  %v3169 = vld [vmem:[%s7 + $0x28] sm:$0xff]
  %v3170 = vld [vmem:[%s7 + $0x30] sm:$0xff]
  %v3171 = vld [vmem:[%s7 + $0x38] sm:$0xff]
  %v3172 = vld [vmem:[%s7 + $0x40] sm:$0xff]
  %v3173 = vld [vmem:[%s7 + $0x48] sm:$0xff]
  %v3174 = vld [vmem:[%s7 + $0x50] sm:$0xff]
  %v3175 = vld [vmem:[%s7 + $0x58] sm:$0xff]
  %v3176 = vld [vmem:[%s7 + $0x60] sm:$0xff]
  %v3177 = vld [vmem:[%s7 + $0x68] sm:$0xff]
  %v3178 = vld [vmem:[%s7 + $0x70] sm:$0xff]
  %v3179 = vld [vmem:[%s7 + $0x78] sm:$0xff]
  %v3180 = vld [vmem:[%s7 + $0x80] sm:$0xff]
  %v3181 = vld [vmem:[%s7 + $0x88] sm:$0xff]
  %v3182 = vld [vmem:[%s7 + $0x90] sm:$0xff]
  %v3183 = vld [vmem:[%s7 + $0x98] sm:$0xff]
  %v3184 = vld [vmem:[%s7 + $0xa0] sm:$0xff]
  %v3185 = vld [vmem:[%s7 + $0xa8] sm:$0xff]
  %v3186 = vld [vmem:[%s7 + $0xb0] sm:$0xff]
  %v3187 = vld [vmem:[%s7 + $0xb8] sm:$0xff]
  %v3188 = vld [vmem:[%s7 + $0xc0] sm:$0xff]
  %v3189 = vld [vmem:[%s7 + $0xc8] sm:$0xff]
  %v3190 = vld [vmem:[%s7 + $0xd0] sm:$0xff]
  %v3191 = vld [vmem:[%s7 + $0xd8] sm:$0xff]
  %v3192 = vld [vmem:[%s7 + $0xe0] sm:$0xff]
  %v3193 = vld [vmem:[%s7 + $0xe8] sm:$0xff]
  %v3194 = vld [vmem:[%s7 + $0xf0] sm:$0xff]
  %v3195 = vld [vmem:[%s7 + $0xf8] sm:$0xff]
  %v3197 = vlaneseq
  %v3198 = vshrl.u32 %v3197, 7
  %v3199 = vsub.s32 0, %v3198
  %v3200 = vrot.slane %v3159, %v3199
  %v3201 = vlaneseq
  %v3202 = vshrl.u32 %v3201, 7
  %v3203 = vsub.s32 2, %v3202
  %v3204 = vrot.slane %v3159, %v3203
  %v3207 = vlaneseq
  %v3208 = vshrl.u32 %v3207, 7
  %v3209 = vsub.s32 0, %v3208
  %v3210 = vrot.slane %v3200, %v3209
  %v3211 = vlaneseq
  %v3212 = vshrl.u32 %v3211, 7
  %v3213 = vsub.s32 0, %v3212
  %v3214 = vrot.slane %v3204, %v3213
  %v3247 = vunpack.c.l.b16 %v3164
  %v3248 = vunpack.c.h.b16 %v3164
  %v3249 = vunpack.c.l.b16 %v3165
  %v3250 = vunpack.c.h.b16 %v3165
  %v3251 = vunpack.c.l.b16 %v3166
  %v3252 = vunpack.c.h.b16 %v3166
  %v3253 = vunpack.c.l.b16 %v3167
  %v3254 = vunpack.c.h.b16 %v3167
  %v3255 = vunpack.c.l.b16 %v3168
  %v3256 = vunpack.c.h.b16 %v3168
  %v3257 = vunpack.c.l.b16 %v3169
  %v3258 = vunpack.c.h.b16 %v3169
  %v3259 = vunpack.c.l.b16 %v3170
  %v3260 = vunpack.c.h.b16 %v3170
  %v3261 = vunpack.c.l.b16 %v3171
  %v3262 = vunpack.c.h.b16 %v3171
  %v3263 = vunpack.c.l.b16 %v3172
  %v3264 = vunpack.c.h.b16 %v3172
  %v3265 = vunpack.c.l.b16 %v3173
  %v3266 = vunpack.c.h.b16 %v3173
  %v3267 = vunpack.c.l.b16 %v3174
  %v3268 = vunpack.c.h.b16 %v3174
  %v3269 = vunpack.c.l.b16 %v3175
  %v3270 = vunpack.c.h.b16 %v3175
  %v3271 = vunpack.c.l.b16 %v3176
  %v3272 = vunpack.c.h.b16 %v3176
  %v3273 = vunpack.c.l.b16 %v3177
  %v3274 = vunpack.c.h.b16 %v3177
  %v3275 = vunpack.c.l.b16 %v3178
  %v3276 = vunpack.c.h.b16 %v3178
  %v3277 = vunpack.c.l.b16 %v3179
  %v3278 = vunpack.c.h.b16 %v3179
  %v3279 = vunpack.c.l.b16 %v3180
  %v3280 = vunpack.c.h.b16 %v3180
  %v3281 = vunpack.c.l.b16 %v3181
  %v3282 = vunpack.c.h.b16 %v3181
  %v3283 = vunpack.c.l.b16 %v3182
  %v3284 = vunpack.c.h.b16 %v3182
  %v3285 = vunpack.c.l.b16 %v3183
  %v3286 = vunpack.c.h.b16 %v3183
  %v3287 = vunpack.c.l.b16 %v3184
  %v3288 = vunpack.c.h.b16 %v3184
  %v3289 = vunpack.c.l.b16 %v3185
  %v3290 = vunpack.c.h.b16 %v3185
  %v3291 = vunpack.c.l.b16 %v3186
  %v3292 = vunpack.c.h.b16 %v3186
  %v3293 = vunpack.c.l.b16 %v3187
  %v3294 = vunpack.c.h.b16 %v3187
  %v3295 = vunpack.c.l.b16 %v3188
  %v3296 = vunpack.c.h.b16 %v3188
  %v3297 = vunpack.c.l.b16 %v3189
  %v3298 = vunpack.c.h.b16 %v3189
  %v3299 = vunpack.c.l.b16 %v3190
  %v3300 = vunpack.c.h.b16 %v3190
  %v3301 = vunpack.c.l.b16 %v3191
  %v3302 = vunpack.c.h.b16 %v3191
  %v3303 = vunpack.c.l.b16 %v3192
  %v3304 = vunpack.c.h.b16 %v3192
  %v3305 = vunpack.c.l.b16 %v3193
  %v3306 = vunpack.c.h.b16 %v3193
  %v3307 = vunpack.c.l.b16 %v3194
  %v3308 = vunpack.c.h.b16 %v3194
  %v3309 = vunpack.c.l.b16 %v3195
  %v3310 = vunpack.c.h.b16 %v3195
  %v3311 = vpack.c.b16 %v3249, %v3247
  %v3312 = vpack.c.b16 %v3250, %v3248
  %v3313 = vpack.c.b16 %v3253, %v3251
  %v3314 = vpack.c.b16 %v3254, %v3252
  %v3315 = vpack.c.b16 %v3257, %v3255
  %v3316 = vpack.c.b16 %v3258, %v3256
  %v3317 = vpack.c.b16 %v3261, %v3259
  %v3318 = vpack.c.b16 %v3262, %v3260
  %v3319 = vpack.c.b16 %v3265, %v3263
  %v3320 = vpack.c.b16 %v3266, %v3264
  %v3321 = vpack.c.b16 %v3269, %v3267
  %v3322 = vpack.c.b16 %v3270, %v3268
  %v3323 = vpack.c.b16 %v3273, %v3271
  %v3324 = vpack.c.b16 %v3274, %v3272
  %v3325 = vpack.c.b16 %v3277, %v3275
  %v3326 = vpack.c.b16 %v3278, %v3276
  %v3327 = vpack.c.b16 %v3281, %v3279
  %v3328 = vpack.c.b16 %v3282, %v3280
  %v3329 = vpack.c.b16 %v3285, %v3283
  %v3330 = vpack.c.b16 %v3286, %v3284
  %v3331 = vpack.c.b16 %v3289, %v3287
  %v3332 = vpack.c.b16 %v3290, %v3288
  %v3333 = vpack.c.b16 %v3293, %v3291
  %v3334 = vpack.c.b16 %v3294, %v3292
  %v3335 = vpack.c.b16 %v3297, %v3295
  %v3336 = vpack.c.b16 %v3298, %v3296
  %v3337 = vpack.c.b16 %v3301, %v3299
  %v3338 = vpack.c.b16 %v3302, %v3300
  %v3339 = vpack.c.b16 %v3305, %v3303
  %v3340 = vpack.c.b16 %v3306, %v3304
  %v3341 = vpack.c.b16 %v3309, %v3307
  %v3342 = vpack.c.b16 %v3310, %v3308
  %3375 = vmatprep.subr.bf16.mxu0 %v3312
  %3376 = vmatpush1.bf16.msra.mxu0 %v3311
  %3377 = vmatprep.subr.bf16.mxu0 %v3314
  %3378 = vmatpush1.bf16.msra.mxu0 %v3313
  %3379 = vmatprep.subr.bf16.mxu0 %v3316
  %3380 = vmatpush1.bf16.msra.mxu0 %v3315
  %3381 = vmatprep.subr.bf16.mxu0 %v3318
  %3382 = vmatpush1.bf16.msra.mxu0 %v3317
  %3383 = vmatprep.subr.bf16.mxu0 %v3320
  %3384 = vmatpush1.bf16.msra.mxu0 %v3319
  %3385 = vmatprep.subr.bf16.mxu0 %v3322
  %3386 = vmatpush1.bf16.msra.mxu0 %v3321
  %3387 = vmatprep.subr.bf16.mxu0 %v3324
  %3388 = vmatpush1.bf16.msra.mxu0 %v3323
  %3389 = vmatprep.subr.bf16.mxu0 %v3326
  %3390 = vmatpush1.bf16.msra.mxu0 %v3325
  %3391 = vmatprep.subr.bf16.mxu0 %v3328
  %3392 = vmatpush1.bf16.msra.mxu0 %v3327
  %3393 = vmatprep.subr.bf16.mxu0 %v3330
  %3394 = vmatpush1.bf16.msra.mxu0 %v3329
  %3395 = vmatprep.subr.bf16.mxu0 %v3332
  %3396 = vmatpush1.bf16.msra.mxu0 %v3331
  %3397 = vmatprep.subr.bf16.mxu0 %v3334
  %3398 = vmatpush1.bf16.msra.mxu0 %v3333
  %3399 = vmatprep.subr.bf16.mxu0 %v3336
  %3400 = vmatpush1.bf16.msra.mxu0 %v3335
  %3401 = vmatprep.subr.bf16.mxu0 %v3338
  %3402 = vmatpush1.bf16.msra.mxu0 %v3337
  %3403 = vmatprep.subr.bf16.mxu0 %v3340
  %3404 = vmatpush1.bf16.msra.mxu0 %v3339
  %3405 = vmatprep.subr.bf16.mxu0 %v3342
  %3406 = vmatpush1.bf16.msra.mxu0 %v3341
  %3407 = vmatprep.mubr.bf16.mxu0 %v3161
  %3408 = vmatmul.mubr.bf16.gmra.mrb[0].mxu0 %v3160
  %v3409 = vpop.f32.mrb[0].mxu0
  %v3410 = vadd.f32 %v3210, %v3409
  %v3411 = vpop.f32.mrb[0].mxu0
  %v3412 = vadd.f32 %v3214, %v3411
  %v3413 = vpop.f32.mrb[0].mxu0
  %v3414 = vadd.f32 %v3210, %v3413
  %v3415 = vpop.f32.mrb[0].mxu0
  %v3416 = vadd.f32 %v3214, %v3415
  %3417 = vmatprep.mubr.bf16.mxu0 %v3163
  %3418 = vmatmul.mubr.bf16.gmra.mrb[0].mxu0 %v3162
  %v3419 = vpop.f32.mrb[0].mxu0
  %v3420 = vadd.f32 %v3210, %v3419
  %v3421 = vpop.f32.mrb[0].mxu0
  %v3422 = vadd.f32 %v3214, %v3421
  %v3423 = vpop.f32.mrb[0].mxu0
  %v3424 = vadd.f32 %v3210, %v3423
  %v3425 = vpop.f32.mrb[0].mxu0
  %v3426 = vadd.f32 %v3214, %v3425
  %3427 = vdwg.mxu0
  %v3428 = vmax.f32 %v3410, 0.0
  %v3429 = vmax.f32 %v3412, 0.0
  %v3430 = vmax.f32 %v3414, 0.0
  %v3431 = vmax.f32 %v3416, 0.0
  %v3432 = vmax.f32 %v3420, 0.0
  %v3433 = vmax.f32 %v3422, 0.0
  %v3434 = vmax.f32 %v3424, 0.0
  %v3435 = vmax.f32 %v3426, 0.0
  %v3436 = vpack.c.bf16 %v3430, %v3428
  %v3437 = vpack.c.bf16 %v3431, %v3429
  %v3438 = vpack.c.bf16 %v3434, %v3432
  %v3439 = vpack.c.bf16 %v3435, %v3433
  %v3440 = vld [vmem:[%s8] sm:$0xff]
  %v3441 = vld [vmem:[%s8 + $0x8] sm:$0xff]
  %v3442 = vld [vmem:[%s8 + $0x10] sm:$0xff]
  %v3443 = vld [vmem:[%s8 + $0x18] sm:$0xff]
  %v3444 = vld [vmem:[%s8 + $0x20] sm:$0xff]
  %v3445 = vld [vmem:[%s8 + $0x28] sm:$0xff]
  %v3446 = vld [vmem:[%s8 + $0x30] sm:$0xff]
  %v3447 = vld [vmem:[%s8 + $0x38] sm:$0xff]
  %v3448 = vld [vmem:[%s8 + $0x40] sm:$0xff]
  %v3449 = vld [vmem:[%s8 + $0x48] sm:$0xff]
  %v3450 = vld [vmem:[%s8 + $0x50] sm:$0xff]
  %v3451 = vld [vmem:[%s8 + $0x58] sm:$0xff]
  %v3452 = vld [vmem:[%s8 + $0x60] sm:$0xff]
  %v3453 = vld [vmem:[%s8 + $0x68] sm:$0xff]
  %v3454 = vld [vmem:[%s8 + $0x70] sm:$0xff]
  %v3455 = vld [vmem:[%s8 + $0x78] sm:$0xff]
  %v3456 = vld [vmem:[%s8 + $0x80] sm:$0xff]
  %v3457 = vld [vmem:[%s8 + $0x88] sm:$0xff]
  %v3458 = vld [vmem:[%s8 + $0x90] sm:$0xff]
  %v3459 = vld [vmem:[%s8 + $0x98] sm:$0xff]
  %v3460 = vld [vmem:[%s8 + $0xa0] sm:$0xff]
  %v3461 = vld [vmem:[%s8 + $0xa8] sm:$0xff]
  %v3462 = vld [vmem:[%s8 + $0xb0] sm:$0xff]
  %v3463 = vld [vmem:[%s8 + $0xb8] sm:$0xff]
  %v3464 = vld [vmem:[%s8 + $0xc0] sm:$0xff]
  %v3465 = vld [vmem:[%s8 + $0xc8] sm:$0xff]
  %v3466 = vld [vmem:[%s8 + $0xd0] sm:$0xff]
  %v3467 = vld [vmem:[%s8 + $0xd8] sm:$0xff]
  %v3468 = vld [vmem:[%s8 + $0xe0] sm:$0xff]
  %v3469 = vld [vmem:[%s8 + $0xe8] sm:$0xff]
  %v3470 = vld [vmem:[%s8 + $0xf0] sm:$0xff]
  %v3471 = vld [vmem:[%s8 + $0xf8] sm:$0xff]
  %v3472 = vlaneseq
  %v3473 = vshrl.u32 %v3472, 7
  %v3474 = vsub.s32 1, %v3473
  %v3475 = vrot.slane %v3159, %v3474
  %v3476 = vlaneseq
  %v3477 = vshrl.u32 %v3476, 7
  %v3478 = vsub.s32 3, %v3477
  %v3479 = vrot.slane %v3159, %v3478
  %v3482 = vlaneseq
  %v3483 = vshrl.u32 %v3482, 7
  %v3484 = vsub.s32 1, %v3483
  %v3485 = vrot.slane %v3475, %v3484
  %v3486 = vlaneseq
  %v3487 = vshrl.u32 %v3486, 7
  %v3488 = vsub.s32 1, %v3487
  %v3489 = vrot.slane %v3479, %v3488
  %v3522 = vunpack.c.l.b16 %v3440
  %v3523 = vunpack.c.h.b16 %v3440
  %v3524 = vunpack.c.l.b16 %v3441
  %v3525 = vunpack.c.h.b16 %v3441
  %v3526 = vunpack.c.l.b16 %v3442
  %v3527 = vunpack.c.h.b16 %v3442
  %v3528 = vunpack.c.l.b16 %v3443
  %v3529 = vunpack.c.h.b16 %v3443
  %v3530 = vunpack.c.l.b16 %v3444
  %v3531 = vunpack.c.h.b16 %v3444
  %v3532 = vunpack.c.l.b16 %v3445
  %v3533 = vunpack.c.h.b16 %v3445
  %v3534 = vunpack.c.l.b16 %v3446
  %v3535 = vunpack.c.h.b16 %v3446
  %v3536 = vunpack.c.l.b16 %v3447
  %v3537 = vunpack.c.h.b16 %v3447
  %v3538 = vunpack.c.l.b16 %v3448
  %v3539 = vunpack.c.h.b16 %v3448
  %v3540 = vunpack.c.l.b16 %v3449
  %v3541 = vunpack.c.h.b16 %v3449
  %v3542 = vunpack.c.l.b16 %v3450
  %v3543 = vunpack.c.h.b16 %v3450
  %v3544 = vunpack.c.l.b16 %v3451
  %v3545 = vunpack.c.h.b16 %v3451
  %v3546 = vunpack.c.l.b16 %v3452
  %v3547 = vunpack.c.h.b16 %v3452
  %v3548 = vunpack.c.l.b16 %v3453
  %v3549 = vunpack.c.h.b16 %v3453
  %v3550 = vunpack.c.l.b16 %v3454
  %v3551 = vunpack.c.h.b16 %v3454
  %v3552 = vunpack.c.l.b16 %v3455
  %v3553 = vunpack.c.h.b16 %v3455
  %v3554 = vunpack.c.l.b16 %v3456
  %v3555 = vunpack.c.h.b16 %v3456
  %v3556 = vunpack.c.l.b16 %v3457
  %v3557 = vunpack.c.h.b16 %v3457
  %v3558 = vunpack.c.l.b16 %v3458
  %v3559 = vunpack.c.h.b16 %v3458
  %v3560 = vunpack.c.l.b16 %v3459
  %v3561 = vunpack.c.h.b16 %v3459
  %v3562 = vunpack.c.l.b16 %v3460
  %v3563 = vunpack.c.h.b16 %v3460
  %v3564 = vunpack.c.l.b16 %v3461
  %v3565 = vunpack.c.h.b16 %v3461
  %v3566 = vunpack.c.l.b16 %v3462
  %v3567 = vunpack.c.h.b16 %v3462
  %v3568 = vunpack.c.l.b16 %v3463
  %v3569 = vunpack.c.h.b16 %v3463
  %v3570 = vunpack.c.l.b16 %v3464
  %v3571 = vunpack.c.h.b16 %v3464
  %v3572 = vunpack.c.l.b16 %v3465
  %v3573 = vunpack.c.h.b16 %v3465
  %v3574 = vunpack.c.l.b16 %v3466
  %v3575 = vunpack.c.h.b16 %v3466
  %v3576 = vunpack.c.l.b16 %v3467
  %v3577 = vunpack.c.h.b16 %v3467
  %v3578 = vunpack.c.l.b16 %v3468
  %v3579 = vunpack.c.h.b16 %v3468
  %v3580 = vunpack.c.l.b16 %v3469
  %v3581 = vunpack.c.h.b16 %v3469
  %v3582 = vunpack.c.l.b16 %v3470
  %v3583 = vunpack.c.h.b16 %v3470
  %v3584 = vunpack.c.l.b16 %v3471
  %v3585 = vunpack.c.h.b16 %v3471
  %v3586 = vpack.c.b16 %v3524, %v3522
  %v3587 = vpack.c.b16 %v3525, %v3523
  %v3588 = vpack.c.b16 %v3528, %v3526
  %v3589 = vpack.c.b16 %v3529, %v3527
  %v3590 = vpack.c.b16 %v3532, %v3530
  %v3591 = vpack.c.b16 %v3533, %v3531
  %v3592 = vpack.c.b16 %v3536, %v3534
  %v3593 = vpack.c.b16 %v3537, %v3535
  %v3594 = vpack.c.b16 %v3540, %v3538
  %v3595 = vpack.c.b16 %v3541, %v3539
  %v3596 = vpack.c.b16 %v3544, %v3542
  %v3597 = vpack.c.b16 %v3545, %v3543
  %v3598 = vpack.c.b16 %v3548, %v3546
  %v3599 = vpack.c.b16 %v3549, %v3547
  %v3600 = vpack.c.b16 %v3552, %v3550
  %v3601 = vpack.c.b16 %v3553, %v3551
  %v3602 = vpack.c.b16 %v3556, %v3554
  %v3603 = vpack.c.b16 %v3557, %v3555
  %v3604 = vpack.c.b16 %v3560, %v3558
  %v3605 = vpack.c.b16 %v3561, %v3559
  %v3606 = vpack.c.b16 %v3564, %v3562
  %v3607 = vpack.c.b16 %v3565, %v3563
  %v3608 = vpack.c.b16 %v3568, %v3566
  %v3609 = vpack.c.b16 %v3569, %v3567
  %v3610 = vpack.c.b16 %v3572, %v3570
  %v3611 = vpack.c.b16 %v3573, %v3571
  %v3612 = vpack.c.b16 %v3576, %v3574
  %v3613 = vpack.c.b16 %v3577, %v3575
  %v3614 = vpack.c.b16 %v3580, %v3578
  %v3615 = vpack.c.b16 %v3581, %v3579
  %v3616 = vpack.c.b16 %v3584, %v3582
  %v3617 = vpack.c.b16 %v3585, %v3583
  %3650 = vmatprep.subr.bf16.mxu0 %v3587
  %3651 = vmatpush1.bf16.msra.mxu0 %v3586
  %3652 = vmatprep.subr.bf16.mxu0 %v3589
  %3653 = vmatpush1.bf16.msra.mxu0 %v3588
  %3654 = vmatprep.subr.bf16.mxu0 %v3591
  %3655 = vmatpush1.bf16.msra.mxu0 %v3590
  %3656 = vmatprep.subr.bf16.mxu0 %v3593
  %3657 = vmatpush1.bf16.msra.mxu0 %v3592
  %3658 = vmatprep.subr.bf16.mxu0 %v3595
  %3659 = vmatpush1.bf16.msra.mxu0 %v3594
  %3660 = vmatprep.subr.bf16.mxu0 %v3597
  %3661 = vmatpush1.bf16.msra.mxu0 %v3596
  %3662 = vmatprep.subr.bf16.mxu0 %v3599
  %3663 = vmatpush1.bf16.msra.mxu0 %v3598
  %3664 = vmatprep.subr.bf16.mxu0 %v3601
  %3665 = vmatpush1.bf16.msra.mxu0 %v3600
  %3666 = vmatprep.subr.bf16.mxu0 %v3603
  %3667 = vmatpush1.bf16.msra.mxu0 %v3602
  %3668 = vmatprep.subr.bf16.mxu0 %v3605
  %3669 = vmatpush1.bf16.msra.mxu0 %v3604
  %3670 = vmatprep.subr.bf16.mxu0 %v3607
  %3671 = vmatpush1.bf16.msra.mxu0 %v3606
  %3672 = vmatprep.subr.bf16.mxu0 %v3609
  %3673 = vmatpush1.bf16.msra.mxu0 %v3608
  %3674 = vmatprep.subr.bf16.mxu0 %v3611
  %3675 = vmatpush1.bf16.msra.mxu0 %v3610
  %3676 = vmatprep.subr.bf16.mxu0 %v3613
  %3677 = vmatpush1.bf16.msra.mxu0 %v3612
  %3678 = vmatprep.subr.bf16.mxu0 %v3615
  %3679 = vmatpush1.bf16.msra.mxu0 %v3614
  %3680 = vmatprep.subr.bf16.mxu0 %v3617
  %3681 = vmatpush1.bf16.msra.mxu0 %v3616
  %3682 = vmatprep.mubr.bf16.mxu0 %v3437
  %3683 = vmatmul.mubr.bf16.gmra.mrb[0].mxu0 %v3436
  %v3684 = vpop.f32.mrb[0].mxu0
  %v3685 = vadd.f32 %v3485, %v3684
  %v3686 = vpop.f32.mrb[0].mxu0
  %v3687 = vadd.f32 %v3489, %v3686
  %v3688 = vpop.f32.mrb[0].mxu0
  %v3689 = vadd.f32 %v3485, %v3688
  %v3690 = vpop.f32.mrb[0].mxu0
  %v3691 = vadd.f32 %v3489, %v3690
  %3692 = vmatprep.mubr.bf16.mxu0 %v3439
  %3693 = vmatmul.mubr.bf16.gmra.mrb[0].mxu0 %v3438
  %v3694 = vpop.f32.mrb[0].mxu0
  %v3695 = vadd.f32 %v3485, %v3694
  %v3696 = vpop.f32.mrb[0].mxu0
  %v3697 = vadd.f32 %v3489, %v3696
  %v3698 = vpop.f32.mrb[0].mxu0
  %v3699 = vadd.f32 %v3485, %v3698
  %v3700 = vpop.f32.mrb[0].mxu0
  %v3701 = vadd.f32 %v3489, %v3700
  %3702 = vdwg.mxu0
  %v3703 = vadd.f32 %v3685, %v2585
  %v3704 = vadd.f32 %v3687, %v3145
  %v3705 = vadd.f32 %v3689, %v2586
  %v3706 = vadd.f32 %v3691, %v3148
  %v3707 = vadd.f32 %v3695, %v2587
  %v3708 = vadd.f32 %v3697, %v3153
  %v3709 = vadd.f32 %v3699, %v2588
  %v3710 = vadd.f32 %v3701, %v3156
  %v3711 = vpack.c.bf16 %v3705, %v3703
  %v3712 = vpack.c.bf16 %v3706, %v3704
  %v3713 = vpack.c.bf16 %v3709, %v3707
  %v3714 = vpack.c.bf16 %v3710, %v3708
  %3715 = vmatprep.subr.bf16.mxu0 %v3312
  %3716 = vmatpush1.bf16.msra.mxu0 %v3311
  %3717 = vmatprep.subr.bf16.mxu0 %v3314
  %3718 = vmatpush1.bf16.msra.mxu0 %v3313
  %3719 = vmatprep.subr.bf16.mxu0 %v3316
  %3720 = vmatpush1.bf16.msra.mxu0 %v3315
  %3721 = vmatprep.subr.bf16.mxu0 %v3318
  %3722 = vmatpush1.bf16.msra.mxu0 %v3317
  %3723 = vmatprep.subr.bf16.mxu0 %v3320
  %3724 = vmatpush1.bf16.msra.mxu0 %v3319
  %3725 = vmatprep.subr.bf16.mxu0 %v3322
  %3726 = vmatpush1.bf16.msra.mxu0 %v3321
  %3727 = vmatprep.subr.bf16.mxu0 %v3324
  %3728 = vmatpush1.bf16.msra.mxu0 %v3323
  %3729 = vmatprep.subr.bf16.mxu0 %v3326
  %3730 = vmatpush1.bf16.msra.mxu0 %v3325
  %3731 = vmatprep.subr.bf16.mxu0 %v3328
  %3732 = vmatpush1.bf16.msra.mxu0 %v3327
  %3733 = vmatprep.subr.bf16.mxu0 %v3330
  %3734 = vmatpush1.bf16.msra.mxu0 %v3329
  %3735 = vmatprep.subr.bf16.mxu0 %v3332
  %3736 = vmatpush1.bf16.msra.mxu0 %v3331
  %3737 = vmatprep.subr.bf16.mxu0 %v3334
  %3738 = vmatpush1.bf16.msra.mxu0 %v3333
  %3739 = vmatprep.subr.bf16.mxu0 %v3336
  %3740 = vmatpush1.bf16.msra.mxu0 %v3335
  %3741 = vmatprep.subr.bf16.mxu0 %v3338
  %3742 = vmatpush1.bf16.msra.mxu0 %v3337
  %3743 = vmatprep.subr.bf16.mxu0 %v3340
  %3744 = vmatpush1.bf16.msra.mxu0 %v3339
  %3745 = vmatprep.subr.bf16.mxu0 %v3342
  %3746 = vmatpush1.bf16.msra.mxu0 %v3341
  %3747 = vmatprep.mubr.bf16.mxu0 %v3712
  %3748 = vmatmul.mubr.bf16.gmra.mrb[0].mxu0 %v3711
  %v3749 = vpop.f32.mrb[0].mxu0
  %v3750 = vadd.f32 %v3210, %v3749
  %v3751 = vpop.f32.mrb[0].mxu0
  %v3752 = vadd.f32 %v3214, %v3751
  %v3753 = vpop.f32.mrb[0].mxu0
  %v3754 = vadd.f32 %v3210, %v3753
  %v3755 = vpop.f32.mrb[0].mxu0
  %v3756 = vadd.f32 %v3214, %v3755
  %3757 = vmatprep.mubr.bf16.mxu0 %v3714
  %3758 = vmatmul.mubr.bf16.gmra.mrb[0].mxu0 %v3713
  %v3759 = vpop.f32.mrb[0].mxu0
  %v3760 = vadd.f32 %v3210, %v3759
  %v3761 = vpop.f32.mrb[0].mxu0
  %v3762 = vadd.f32 %v3214, %v3761
  %v3763 = vpop.f32.mrb[0].mxu0
  %v3764 = vadd.f32 %v3210, %v3763
  %v3765 = vpop.f32.mrb[0].mxu0
  %v3766 = vadd.f32 %v3214, %v3765
  %3767 = vdwg.mxu0
  %v3768 = vmax.f32 %v3750, 0.0
  %v3769 = vmax.f32 %v3752, 0.0
  %v3770 = vmax.f32 %v3754, 0.0
  %v3771 = vmax.f32 %v3756, 0.0
  %v3772 = vmax.f32 %v3760, 0.0
  %v3773 = vmax.f32 %v3762, 0.0
  %v3774 = vmax.f32 %v3764, 0.0
  %v3775 = vmax.f32 %v3766, 0.0
  %v3776 = vpack.c.bf16 %v3770, %v3768
  %v3777 = vpack.c.bf16 %v3771, %v3769
  %v3778 = vpack.c.bf16 %v3774, %v3772
  %v3779 = vpack.c.bf16 %v3775, %v3773
  %3780 = vmatprep.subr.bf16.mxu0 %v3587
  %3781 = vmatpush1.bf16.msra.mxu0 %v3586
  %3782 = vmatprep.subr.bf16.mxu0 %v3589
  %3783 = vmatpush1.bf16.msra.mxu0 %v3588
  %3784 = vmatprep.subr.bf16.mxu0 %v3591
  %3785 = vmatpush1.bf16.msra.mxu0 %v3590
  %3786 = vmatprep.subr.bf16.mxu0 %v3593
  %3787 = vmatpush1.bf16.msra.mxu0 %v3592
  %3788 = vmatprep.subr.bf16.mxu0 %v3595
  %3789 = vmatpush1.bf16.msra.mxu0 %v3594
  %3790 = vmatprep.subr.bf16.mxu0 %v3597
  %3791 = vmatpush1.bf16.msra.mxu0 %v3596
  %3792 = vmatprep.subr.bf16.mxu0 %v3599
  %3793 = vmatpush1.bf16.msra.mxu0 %v3598
  %3794 = vmatprep.subr.bf16.mxu0 %v3601
  %3795 = vmatpush1.bf16.msra.mxu0 %v3600
  %3796 = vmatprep.subr.bf16.mxu0 %v3603
  %3797 = vmatpush1.bf16.msra.mxu0 %v3602
  %3798 = vmatprep.subr.bf16.mxu0 %v3605
  %3799 = vmatpush1.bf16.msra.mxu0 %v3604
  %3800 = vmatprep.subr.bf16.mxu0 %v3607
  %3801 = vmatpush1.bf16.msra.mxu0 %v3606
  %3802 = vmatprep.subr.bf16.mxu0 %v3609
  %3803 = vmatpush1.bf16.msra.mxu0 %v3608
  %3804 = vmatprep.subr.bf16.mxu0 %v3611
  %3805 = vmatpush1.bf16.msra.mxu0 %v3610
  %3806 = vmatprep.subr.bf16.mxu0 %v3613
  %3807 = vmatpush1.bf16.msra.mxu0 %v3612
  %3808 = vmatprep.subr.bf16.mxu0 %v3615
  %3809 = vmatpush1.bf16.msra.mxu0 %v3614
  %3810 = vmatprep.subr.bf16.mxu0 %v3617
  %3811 = vmatpush1.bf16.msra.mxu0 %v3616
  %3812 = vmatprep.mubr.bf16.mxu0 %v3777
  %3813 = vmatmul.mubr.bf16.gmra.mrb[0].mxu0 %v3776
  %v3814 = vpop.f32.mrb[0].mxu0
  %v3815 = vadd.f32 %v3485, %v3814
  %v3816 = vpop.f32.mrb[0].mxu0
  %v3817 = vadd.f32 %v3489, %v3816
  %v3818 = vpop.f32.mrb[0].mxu0
  %v3819 = vadd.f32 %v3485, %v3818
  %v3820 = vpop.f32.mrb[0].mxu0
  %v3821 = vadd.f32 %v3489, %v3820
  %3822 = vmatprep.mubr.bf16.mxu0 %v3779
  %3823 = vmatmul.mubr.bf16.gmra.mrb[0].mxu0 %v3778
  %v3824 = vpop.f32.mrb[0].mxu0
  %v3825 = vadd.f32 %v3485, %v3824
  %v3826 = vpop.f32.mrb[0].mxu0
  %v3827 = vadd.f32 %v3489, %v3826
  %v3828 = vpop.f32.mrb[0].mxu0
  %v3829 = vadd.f32 %v3485, %v3828
  %v3830 = vpop.f32.mrb[0].mxu0
  %v3831 = vadd.f32 %v3489, %v3830
  %3832 = vdwg.mxu0
  %v3833 = vadd.f32 %v3815, %v3703
  %v3834 = vadd.f32 %v3817, %v3704
  %v3835 = vadd.f32 %v3819, %v3705
  %v3836 = vadd.f32 %v3821, %v3706
  %v3837 = vadd.f32 %v3825, %v3707
  %v3838 = vadd.f32 %v3827, %v3708
  %v3839 = vadd.f32 %v3829, %v3709
  %v3840 = vadd.f32 %v3831, %v3710
  %v3841 = vadd.f32 %v3833, %v2585
  %v3842 = vadd.f32 %v3834, %v3145
  %v3843 = vadd.f32 %v3835, %v2586
  %v3844 = vadd.f32 %v3836, %v3148
  %v3845 = vadd.f32 %v3837, %v2587
  %v3846 = vadd.f32 %v3838, %v3153
  %v3847 = vadd.f32 %v3839, %v2588
  %v3848 = vadd.f32 %v3840, %v3156
  %3849 = vst [vmem:[%s13] sm:$0xff] %v3841
  %3850 = vst [vmem:[%s13 + $0x8] sm:$0xff] %v3843
  %3851 = vst [vmem:[%s13 + $0x10] sm:$0xff] %v3845
  %3852 = vst [vmem:[%s13 + $0x18] sm:$0xff] %v3847
  %3853 = vst [vmem:[%s14] sm:$0xff] %v3842
  %3854 = vst [vmem:[%s14 + $0x8] sm:$0xff] %v3844
  %3855 = vst [vmem:[%s14 + $0x10] sm:$0xff] %v3846
  %3856 = vst [vmem:[%s14 + $0x18] sm:$0xff] %v3848
  // Predicated region
  $region54: #{ctf_forward.1} parent=0 // pred_check
    _
  $region55: #{ctf_forward.1} parent=0 // pred_check_branch
    %3858 = sbr.rel (0) target = $region57
  $region56: #{ctf_forward.1} parent=0 // pred_region
    _
  $region57: #{ctf_forward.1} parent=0 // pred_fallthru
    _
  // Predicated region
  $region58: #{ctf_forward.1} parent=0 // pred_check
    _
  $region59: #{ctf_forward.1} parent=0 // pred_check_branch
    %3860 = sbr.rel (0) target = $region61
  $region60: #{ctf_forward.1} parent=0 // pred_region
    _
  $region61: #{ctf_forward.1} parent=0 // pred_fallthru
    _
  // Predicated region
  $region62: #{ctf_forward.1} parent=0 // pred_check
    _
  $region63: #{ctf_forward.1} parent=0 // pred_check_branch
    %3862 = sbr.rel (0) target = $region65
  $region64: #{ctf_forward.1} parent=0 // pred_region
    _
  $region65: #{ctf_forward.1} parent=0 // pred_fallthru
    _
  // Predicated region
  $region66: #{ctf_forward.1} parent=0 // pred_check
    _
  $region67: #{ctf_forward.1} parent=0 // pred_check_branch
    %3864 = sbr.rel (0) target = $region69
  $region68: #{ctf_forward.1} parent=0 // pred_region
    _
  $region69: #{ctf_forward.1} parent=0 // pred_fallthru
    _

</llo_original>
